<compile_context>
chip_gen: v7x
topology: tpu7x:2x2x1
jax: 0.10.0
libtpu: 0.0.40
codegen_flags: <defaults>
</compile_context>

<pallas_src>
import functools

import jax
import jax.numpy as jnp
from jax import lax
from jax.experimental import pallas as pl
from jax.experimental.pallas import tpu as pltpu

LANE = 128
SUBLANE = 8
TIME_CHUNK = 8                 # sweep 8..32 per chip; 8 keeps v7x blocks small
MXU_DTYPE = jnp.bfloat16       # MXU operand dtype; accumulation stays f32


# ----------------------------------------------------------------------------
# helpers
# ----------------------------------------------------------------------------
def _round_up(x, m):
    return ((x + m - 1) // m) * m


def _vmem_limit_bytes():
    """Raise the scoped-VMEM limit above the 16/32 MiB defaults, but stay
    inside physical VMEM (64 MiB per TC on v7x, 128 MiB on v5e/v6e)."""
    try:
        cap = int(pltpu.get_tpu_info().vmem_capacity_bytes)
        return (cap * 3) // 4
    except Exception:
        return 48 * 1024 * 1024


def _pick_row_tile(m, cap=256):
    """Bounded, (8,128)-friendly row tile.  m is a multiple of 64 by
    construction (T padded to the time chunk, B padded to 8), so this never
    falls back to a whole-array tile at realistic sizes."""
    for t in (cap, cap // 2, cap // 4, 64, 32, 16, 8):
        if t <= m and m % t == 0:
            return t
    return m


# ----------------------------------------------------------------------------
# Kernel 1: fused bidirectional LSTM layer
#   grid = (2 directions [parallel], T/tc time chunks [arbitrary])
#   per grid step: chunk input projection (MXU) + tc recurrence steps
# ----------------------------------------------------------------------------
def _bilstm_fused_kernel(x_ref, wih_ref, b_ref, whh_ref, len_ref, y_ref,
                         gx_sc, h_sc, c_sc, *, seq_len, hidden, batch, tc):
    d = pl.program_id(0)          # 0 = forward, 1 = backward
    chunk = pl.program_id(1)      # time-chunk index in per-direction order
    kin = x_ref.shape[0]

    @pl.when(chunk == 0)
    def _():
        h_sc[...] = jnp.zeros_like(h_sc)
        c_sc[...] = jnp.zeros_like(c_sc)

    # ---- fused input projection for the whole chunk: (tc*B, Din) @ (Din, 4Hp)
    acc = jnp.dot(x_ref[0], wih_ref[0], preferred_element_type=jnp.float32)
    for k in range(1, kin):
        acc = acc + jnp.dot(x_ref[k], wih_ref[k],
                            preferred_element_type=jnp.float32)
    gx_sc[...] = acc + b_ref[...]                      # f32, VMEM only

    whh = whh_ref[...]                                 # (Hp, 4Hp) bf16 resident
    lens = len_ref[...]                                # (B, 1) int32
    base = chunk * tc

    def cell(row, t_glob, h_prev, c_prev):
        r0 = row * batch                               # static row offset
        gates = gx_sc[r0:r0 + batch, :] + jnp.dot(
            h_prev.astype(whh.dtype), whh, preferred_element_type=jnp.float32)
        i_g = jax.nn.sigmoid(gates[:, 0 * hidden:1 * hidden])
        f_g = jax.nn.sigmoid(gates[:, 1 * hidden:2 * hidden])
        g_g = jnp.tanh(gates[:, 2 * hidden:3 * hidden])
        o_g = jax.nn.sigmoid(gates[:, 3 * hidden:4 * hidden])
        c_new = f_g * c_prev + i_g * g_g
        h_new = o_g * jnp.tanh(c_new)
        valid = lens > t_glob                          # packed-sequence mask
        y_ref[r0:r0 + batch, :] = jnp.where(valid, h_new, 0.0).astype(y_ref.dtype)
        return (jnp.where(valid, h_new, h_prev),
                jnp.where(valid, c_new, c_prev))

    # Direction split -> fully static within-chunk addressing.
    @pl.when(d == 0)
    def _fwd():
        h, c = h_sc[...], c_sc[...]
        for i in range(tc):                            # static unroll (tc small)
            h, c = cell(i, base + i, h, c)
        h_sc[...] = h
        c_sc[...] = c

    @pl.when(d == 1)
    def _bwd():
        h, c = h_sc[...], c_sc[...]
        for i in range(tc):
            h, c = cell(tc - 1 - i, seq_len - 1 - base - i, h, c)
        h_sc[...] = h
        c_sc[...] = c


def bilstm_layer(x, wih, b, whh, lengths2d, *, seq_len, batch, tc):
    """x: (Kin, Tp*Bp, Din) bf16 -> y: (2, Tp*Bp, Hp) bf16 (time-major rows)."""
    kin, m_rows, din = x.shape
    g = wih.shape[-1]
    hp = g // 4
    nc = seq_len // tc
    rows = tc * batch

    def tb(d, c):                                      # fwd: c ; bwd: nc-1-c
        return (1 - d) * c + d * (nc - 1 - c)

    grid_spec = pltpu.PrefetchScalarGridSpec(
        num_scalar_prefetch=0,
        grid=(2, nc),
        in_specs=[
            pl.BlockSpec((kin, rows, din), lambda d, c: (0, tb(d, c), 0)),
            # grid-invariant (resident) operands below
            pl.BlockSpec((None, kin, din, g), lambda d, c: (d, 0, 0, 0)),
            pl.BlockSpec((None, 1, g), lambda d, c: (d, 0, 0)),
            pl.BlockSpec((None, hp, g), lambda d, c: (d, 0, 0)),
            pl.BlockSpec((batch, 1), lambda d, c: (0, 0)),
        ],
        out_specs=pl.BlockSpec((None, rows, hp), lambda d, c: (d, tb(d, c), 0)),
        scratch_shapes=[
            pltpu.VMEM((rows, g), jnp.float32),        # per-chunk gates_x
            pltpu.VMEM((batch, hp), jnp.float32),      # h carry
            pltpu.VMEM((batch, hp), jnp.float32),      # c carry
        ],
    )
    return pl.pallas_call(
        functools.partial(_bilstm_fused_kernel, seq_len=seq_len, hidden=hp,
                          batch=batch, tc=tc),
        out_shape=jax.ShapeDtypeStruct((2, m_rows, hp), MXU_DTYPE),
        grid_spec=grid_spec,
        compiler_params=pltpu.CompilerParams(
            dimension_semantics=("parallel", "arbitrary"),
            vmem_limit_bytes=_vmem_limit_bytes()),
    )(x, wih, b, whh, lengths2d)


# ----------------------------------------------------------------------------
# Kernel 2: hidden2labels projection (tiled, lane-dense padded output)
# ----------------------------------------------------------------------------
def _out_proj_kernel(x_ref, w_ref, b_ref, o_ref):
    acc = jnp.dot(x_ref[0], w_ref[0], preferred_element_type=jnp.float32)
    acc = acc + jnp.dot(x_ref[1], w_ref[1], preferred_element_type=jnp.float32)
    o_ref[...] = (acc + b_ref[...]).astype(o_ref.dtype)


def output_projection(x, w, b):
    """x: (2, M, Hp) bf16, w: (2, Hp, Lp) bf16, b: (1, Lp) f32 -> (M, Lp) f32."""
    _, m_rows, hp = x.shape
    lp = w.shape[-1]
    tm = _pick_row_tile(m_rows)
    grid_spec = pltpu.PrefetchScalarGridSpec(
        num_scalar_prefetch=0,
        grid=(m_rows // tm,),
        in_specs=[
            pl.BlockSpec((2, tm, hp), lambda m: (0, m, 0)),
            pl.BlockSpec((2, hp, lp), lambda m: (0, 0, 0)),
            pl.BlockSpec((1, lp), lambda m: (0, 0)),
        ],
        out_specs=pl.BlockSpec((tm, lp), lambda m: (m, 0)),
    )
    return pl.pallas_call(
        _out_proj_kernel,
        out_shape=jax.ShapeDtypeStruct((m_rows, lp), jnp.float32),
        grid_spec=grid_spec,
        compiler_params=pltpu.CompilerParams(
            dimension_semantics=("parallel",),
            vmem_limit_bytes=_vmem_limit_bytes()),
    )(x, w, b)


# ----------------------------------------------------------------------------
# Full forward pass (wrapper glue is only cheap metadata reshapes / padding)
# ----------------------------------------------------------------------------
def bio_classifier_forward(prep, token_ids, lengths, num_labels, tc=TIME_CHUNK):
    B, T = token_ids.shape
    Bp = _round_up(max(B, SUBLANE), SUBLANE)
    Tp = _round_up(T, tc)
    M = Tp * Bp

    ids = jnp.zeros((Bp, Tp), token_ids.dtype).at[:B, :T].set(token_ids)
    lens = jnp.zeros((Bp,), jnp.int32).at[:B].set(lengths.astype(jnp.int32))
    lens2d = lens.reshape(Bp, 1)

    # TODO(synk): fuse this gather into the layer-0 kernel (scalar-prefetched
    #             ids + pl.Element row gather) to drop the emb HBM round trip.
    emb = jnp.take(prep["embedding"], ids.T, axis=0)        # (Tp, Bp, Ep) bf16
    x = emb.reshape(1, M, emb.shape[-1])                    # (Kin=1, M, Ep)

    for lp in prep["lstm"]:
        x = bilstm_layer(x, lp["w_ih"], lp["b"], lp["w_hh"], lens2d,
                         seq_len=Tp, batch=Bp, tc=tc)       # (2, M, Hp) bf16

    logits_p = output_projection(x, prep["w_out"], prep["b_out"])   # (M, Lp) f32
    logits = logits_p.reshape(Tp, Bp, -1)[:T, :B, :num_labels]
    return jnp.transpose(logits, (1, 0, 2))                 # (B, T, L)


# ----------------------------------------------------------------------------
# Parameter construction (PyTorch-like layout) and Pallas-friendly preparation
# ----------------------------------------------------------------------------
def make_params(key, vocab_size, embedding_dim, hidden_dim, labelset_size,
                layers_num):
    keys = jax.random.split(key, 3 + 4 * 2 * layers_num)
    ki = iter(keys)
    scale = 0.1

    emb = scale * jax.random.normal(next(ki), (vocab_size, embedding_dim),
                                    jnp.float32)
    emb = emb.at[0].set(0.0)                       # padding_idx = 0

    lstm_layers = []
    for layer in range(layers_num):
        in_dim = embedding_dim if layer == 0 else 2 * hidden_dim
        layer_p = {}
        for direction in ("fwd", "bwd"):
            w_ih = scale * jax.random.normal(next(ki), (in_dim, 4 * hidden_dim),
                                             jnp.float32)
            w_hh = scale * jax.random.normal(
                next(ki), (hidden_dim, 4 * hidden_dim), jnp.float32)
            b_ih = scale * jax.random.normal(next(ki), (4 * hidden_dim,),
                                             jnp.float32)
            b_hh = scale * jax.random.normal(next(ki), (4 * hidden_dim,),
                                             jnp.float32)
            layer_p[direction] = {
                "w_ih": w_ih,
                "w_hh": w_hh,
                "b": (b_ih + b_hh).reshape(1, 4 * hidden_dim),
            }
        lstm_layers.append(layer_p)

    w_out = scale * jax.random.normal(
        next(ki), (2 * hidden_dim, labelset_size), jnp.float32)
    b_out = scale * jax.random.normal(next(ki), (labelset_size,), jnp.float32)

    return {"embedding": emb, "lstm": lstm_layers,
            "w_out": w_out, "b_out": b_out}


def _pad_gate_cols(w, H, Hp):
    """Zero-pad each of the 4 gate blocks in the last dim from H to Hp."""
    lead = w.shape[:-1]
    w4 = w.reshape(lead + (4, H))
    pad = [(0, 0)] * len(lead) + [(0, 0), (0, Hp - H)]
    return jnp.pad(w4, pad).reshape(lead + (4 * Hp,))


def prepare_params(params, embedding_dim, hidden_dim):
    """Pad E/H/L to 128 lanes, stack directions, split W_ih per input
    direction, and cast all MXU operands to bf16 (biases stay f32)."""
    H = hidden_dim
    Hp = _round_up(H, LANE)
    Ep = _round_up(embedding_dim, LANE)

    emb = jnp.pad(params["embedding"], ((0, 0), (0, Ep - embedding_dim)))

    prep_layers = []
    for li, lp in enumerate(params["lstm"]):
        wih_dirs, whh_dirs, b_dirs = [], [], []
        for dname in ("fwd", "bwd"):
            p = lp[dname]
            w_ih, w_hh, b = p["w_ih"], p["w_hh"], p["b"]
            if li == 0:
                w_ih_k = jnp.pad(w_ih, ((0, Ep - embedding_dim), (0, 0)))[None]
            else:
                # rows ordered [fwd H, bwd H] -> split per input direction
                w_ih_k = w_ih.reshape(2, H, 4 * H)
                w_ih_k = jnp.pad(w_ih_k, ((0, 0), (0, Hp - H), (0, 0)))
            w_ih_k = _pad_gate_cols(w_ih_k, H, Hp)          # (Kin, Din_p, 4Hp)
            w_hh_p = _pad_gate_cols(jnp.pad(w_hh, ((0, Hp - H), (0, 0))), H, Hp)
            b_p = _pad_gate_cols(b, H, Hp)                  # (1, 4Hp)
            wih_dirs.append(w_ih_k)
            whh_dirs.append(w_hh_p)
            b_dirs.append(b_p)
        prep_layers.append({
            "w_ih": jnp.stack(wih_dirs).astype(MXU_DTYPE),  # (2, Kin, Din_p, 4Hp)
            "w_hh": jnp.stack(whh_dirs).astype(MXU_DTYPE),  # (2, Hp, 4Hp)
            "b": jnp.stack(b_dirs).astype(jnp.float32),     # (2, 1, 4Hp)
        })

    L = params["b_out"].shape[0]
    Lp = _round_up(L, LANE)
    w_out = params["w_out"].reshape(2, H, L)
    w_out = jnp.pad(w_out, ((0, 0), (0, Hp - H), (0, Lp - L)))   # (2, Hp, Lp)
    b_out = jnp.pad(params["b_out"], (0, Lp - L)).reshape(1, Lp)

    return {"embedding": emb.astype(MXU_DTYPE), "lstm": prep_layers,
            "w_out": w_out.astype(MXU_DTYPE),
            "b_out": b_out.astype(jnp.float32)}


# ----------------------------------------------------------------------------
# Pure-JAX f32 reference (independent formulation), used only for self-check.
# ----------------------------------------------------------------------------
def reference_forward(params, token_ids, lengths):
    HI = lax.Precision.HIGHEST
    emb = jnp.take(params["embedding"], token_ids, axis=0)     # (B, T, E)
    B, T, _ = emb.shape
    t_idx = jnp.arange(T)[None, :]
    len_col = lengths[:, None]
    rev_idx = jnp.where(t_idx < len_col, len_col - 1 - t_idx, t_idx)   # (B, T)
    valid_bt = (t_idx < len_col)[:, :, None]                           # (B, T, 1)

    def run_dir(x_btd, w_ih, w_hh, b):
        H = w_hh.shape[0]

        def cell(carry, inp):
            h, c = carry
            x_t, v_t = inp
            g = (jnp.dot(x_t, w_ih, precision=HI)
                 + jnp.dot(h, w_hh, precision=HI) + b)
            i = jax.nn.sigmoid(g[:, :H])
            f = jax.nn.sigmoid(g[:, H:2 * H])
            gg = jnp.tanh(g[:, 2 * H:3 * H])
            o = jax.nn.sigmoid(g[:, 3 * H:])
            c_new = f * c + i * gg
            h_new = o * jnp.tanh(c_new)
            h2 = jnp.where(v_t, h_new, h)
            c2 = jnp.where(v_t, c_new, c)
            return (h2, c2), jnp.where(v_t, h_new, 0.0)

        xs = jnp.transpose(x_btd, (1, 0, 2))
        vs = jnp.transpose(valid_bt, (1, 0, 2))
        h0 = jnp.zeros((B, H), jnp.float32)
        (_, _), ys = lax.scan(cell, (h0, h0), (xs, vs))
        return jnp.transpose(ys, (1, 0, 2))

    x = emb
    for lp in params["lstm"]:
        y_f = run_dir(x, lp["fwd"]["w_ih"], lp["fwd"]["w_hh"], lp["fwd"]["b"])
        x_rev = jnp.take_along_axis(x, rev_idx[:, :, None], axis=1)
        y_r = run_dir(x_rev, lp["bwd"]["w_ih"], lp["bwd"]["w_hh"],
                      lp["bwd"]["b"])
        y_b = jnp.take_along_axis(y_r, rev_idx[:, :, None], axis=1)
        x = jnp.concatenate([y_f, y_b], axis=-1)
    return jnp.dot(x, params["w_out"], precision=HI) + params["b_out"]


# ----------------------------------------------------------------------------
if __name__ == "__main__":
    # Small shapes consistent with the module's forward:
    B, T = 2, 16
    vocab_size, embedding_dim, hidden_dim = 50, 32, 32
    labelset_size, layers_num = 9, 2

    key = jax.random.PRNGKey(0)
    k_tok, k_par = jax.random.split(key)

    params = make_params(k_par, vocab_size, embedding_dim, hidden_dim,
                         labelset_size, layers_num)

    lengths = jnp.array([16, 11], dtype=jnp.int32)       # max length == T
    token_ids = jax.random.randint(k_tok, (B, T), 1, vocab_size, jnp.int32)
    # zero-pad past each sequence's length (padding token id == 0)
    token_ids = jnp.where(jnp.arange(T)[None, :] < lengths[:, None],
                          token_ids, 0)

    prep = prepare_params(params, embedding_dim, hidden_dim)
    logits = bio_classifier_forward(prep, token_ids, lengths, labelset_size)
    logits = jax.block_until_ready(logits)

    assert logits.shape == (B, T, labelset_size)
    assert logits.dtype == jnp.float32

    ref = jax.block_until_ready(reference_forward(params, token_ids, lengths))
    max_err = float(jnp.max(jnp.abs(logits - ref)))
    # bf16 MXU operands with f32 accumulation vs f32 reference
    assert max_err < 5e-2, f"Pallas vs reference mismatch: {max_err}"

    print("KERNEL_OK")
</pallas_src>

<mosaic_0001>
module attributes {stable_mosaic.version = 11 : i64} {
  func.func @_bilstm_fused_kernel(%arg0: i32, %arg1: i32, %arg2: memref<1x64x128xbf16, #tpu.memory_space<vmem>>, %arg3: memref<1x1x128x512xbf16, #tpu.memory_space<vmem>>, %arg4: memref<1x1x512xf32, #tpu.memory_space<vmem>>, %arg5: memref<1x128x512xbf16, #tpu.memory_space<vmem>>, %arg6: memref<8x1xi32, #tpu.memory_space<vmem>>, %arg7: memref<1x64x128xbf16, #tpu.memory_space<vmem>>, %arg8: memref<64x512xf32, #tpu.memory_space<vmem>>, %arg9: memref<8x128xf32, #tpu.memory_space<vmem>>, %arg10: memref<8x128xf32, #tpu.memory_space<vmem>>) attributes {dimension_semantics = [#tpu.dimension_semantics<parallel>, #tpu.dimension_semantics<arbitrary>], iteration_bounds = array<i64: 2, 2>, scalar_prefetch = 0 : i64, scratch_operands = 3 : i64, tpu.core_type = #tpu.core_type<tc>, window_params = [{transform_indices = @transform_0, window_bounds = array<i64: 1, 64, 128>}, {transform_indices = @transform_1, window_bounds = array<i64: 1, 1, 128, 512>}, {transform_indices = @transform_2, window_bounds = array<i64: 1, 1, 512>}, {transform_indices = @transform_3, window_bounds = array<i64: 1, 128, 512>}, {pipeline_mode = #tpu.pipeline_mode<synchronous>, transform_indices = @transform_4, window_bounds = array<i64: 8, 1>}, {transform_indices = @transform_5, window_bounds = array<i64: 1, 64, 128>}]} {
    %c0_i32 = arith.constant 0 : i32
    %0 = arith.cmpi eq, %arg1, %c0_i32 : i32
    %1 = arith.extui %0 : i1 to i32
    %c0_i32_0 = arith.constant 0 : i32
    %2 = arith.cmpi ne, %1, %c0_i32_0 : i32
    scf.if %2 {
      %cst_20 = arith.constant 0.000000e+00 : f32
      %23 = vector.broadcast %cst_20 : f32 to vector<8x128xf32>
      %c0_21 = arith.constant 0 : index
      %c0_22 = arith.constant 0 : index
      %24 = vector.load %arg9[%c0_21, %c0_22] : memref<8x128xf32, #tpu.memory_space<vmem>>, vector<8x128xf32>
      tpu.vector_store %arg9[%c0_21, %c0_22], %23 {strides = array<i32>} : memref<8x128xf32, #tpu.memory_space<vmem>>, vector<8x128xf32>,
      %cst_23 = arith.constant 0.000000e+00 : f32
      %25 = vector.broadcast %cst_23 : f32 to vector<8x128xf32>
      %c0_24 = arith.constant 0 : index
      %c0_25 = arith.constant 0 : index
      %26 = vector.load %arg10[%c0_24, %c0_25] : memref<8x128xf32, #tpu.memory_space<vmem>>, vector<8x128xf32>
      tpu.vector_store %arg10[%c0_24, %c0_25], %25 {strides = array<i32>} : memref<8x128xf32, #tpu.memory_space<vmem>>, vector<8x128xf32>,
    } else {
    }
    %c0 = arith.constant 0 : index
    %c0_1 = arith.constant 0 : index
    %c0_2 = arith.constant 0 : index
    %3 = vector.load %arg2[%c0, %c0_1, %c0_2] : memref<1x64x128xbf16, #tpu.memory_space<vmem>>, vector<1x64x128xbf16>
    %4 = vector.shape_cast %3 : vector<1x64x128xbf16> to vector<64x128xbf16>
    %c0_3 = arith.constant 0 : index
    %c0_4 = arith.constant 0 : index
    %c0_5 = arith.constant 0 : index
    %c0_6 = arith.constant 0 : index
    %5 = vector.load %arg3[%c0_3, %c0_4, %c0_5, %c0_6] : memref<1x1x128x512xbf16, #tpu.memory_space<vmem>>, vector<1x1x128x512xbf16>
    %6 = vector.shape_cast %5 : vector<1x1x128x512xbf16> to vector<128x512xbf16>
    %cst = arith.constant dense<0.000000e+00> : vector<64x512xf32>
    %7 = tpu.matmul %4, %6, %cst {dimension_numbers = #tpu.dot_dimension_numbers<[1], [0], [0], [1], [0, 0, 1, 1], [], []>} : vector<64x128xbf16>, vector<128x512xbf16>, vector<64x512xf32> -> vector<64x512xf32>
    %c0_7 = arith.constant 0 : index
    %c0_8 = arith.constant 0 : index
    %c0_9 = arith.constant 0 : index
    %8 = vector.load %arg4[%c0_7, %c0_8, %c0_9] : memref<1x1x512xf32, #tpu.memory_space<vmem>>, vector<1x1x512xf32>
    %9 = vector.shape_cast %8 : vector<1x1x512xf32> to vector<1x512xf32>
    %10 = vector.broadcast %9 : vector<1x512xf32> to vector<64x512xf32>
    %11 = arith.addf %7, %10 : vector<64x512xf32>
    %c0_10 = arith.constant 0 : index
    %c0_11 = arith.constant 0 : index
    %12 = vector.load %arg8[%c0_10, %c0_11] : memref<64x512xf32, #tpu.memory_space<vmem>>, vector<64x512xf32>
    tpu.vector_store %arg8[%c0_10, %c0_11], %11 {strides = array<i32>} : memref<64x512xf32, #tpu.memory_space<vmem>>, vector<64x512xf32>,
    %c0_12 = arith.constant 0 : index
    %c0_13 = arith.constant 0 : index
    %c0_14 = arith.constant 0 : index
    %13 = vector.load %arg5[%c0_12, %c0_13, %c0_14] : memref<1x128x512xbf16, #tpu.memory_space<vmem>>, vector<1x128x512xbf16>
    %14 = vector.shape_cast %13 : vector<1x128x512xbf16> to vector<128x512xbf16>
    %c0_15 = arith.constant 0 : index
    %c0_16 = arith.constant 0 : index
    %15 = vector.load %arg6[%c0_15, %c0_16] : memref<8x1xi32, #tpu.memory_space<vmem>>, vector<8x1xi32>
    %c8_i32 = arith.constant 8 : i32
    %16 = arith.muli %arg1, %c8_i32 : i32
    %c0_i32_17 = arith.constant 0 : i32
    %17 = arith.cmpi eq, %arg0, %c0_i32_17 : i32
    %18 = arith.extui %17 : i1 to i32
    %c0_i32_18 = arith.constant 0 : i32
    %19 = arith.cmpi ne, %18, %c0_i32_18 : i32
    scf.if %19 {
      %c0_20 = arith.constant 0 : index
      %c0_21 = arith.constant 0 : index
      %23 = vector.load %arg9[%c0_20, %c0_21] : memref<8x128xf32, #tpu.memory_space<vmem>>, vector<8x128xf32>
      %c0_22 = arith.constant 0 : index
      %c0_23 = arith.constant 0 : index
      %24 = vector.load %arg10[%c0_22, %c0_23] : memref<8x128xf32, #tpu.memory_space<vmem>>, vector<8x128xf32>
      %c0_i32_24 = arith.constant 0 : i32
      %25 = arith.addi %16, %c0_i32_24 : i32
      %c0_25 = arith.constant 0 : index
      %c0_26 = arith.constant 0 : index
      %26 = vector.load %arg8[%c0_25, %c0_26] : memref<64x512xf32, #tpu.memory_space<vmem>>, vector<8x512xf32>
      %27 = arith.truncf %23 : vector<8x128xf32> to vector<8x128xbf16>
      %cst_27 = arith.constant dense<0.000000e+00> : vector<8x512xf32>
      %28 = tpu.matmul %27, %14, %cst_27 {dimension_numbers = #tpu.dot_dimension_numbers<[1], [0], [0], [1], [0, 0, 1, 1], [], []>} : vector<8x128xbf16>, vector<128x512xbf16>, vector<8x512xf32> -> vector<8x512xf32>
      %29 = arith.addf %26, %28 : vector<8x512xf32>
      %30 = vector.extract_strided_slice %29 {offsets = [0, 0], sizes = [8, 128], strides = [1, 1]} : vector<8x512xf32> to vector<8x128xf32>
      %31 = arith.negf %30 : vector<8x128xf32>
      %32 = math.exp %31 : vector<8x128xf32>
      %cst_28 = arith.constant 1.000000e+00 : f32
      %33 = vector.broadcast %cst_28 : f32 to vector<8x128xf32>
      %34 = arith.addf %33, %32 : vector<8x128xf32>
      %35 = arith.divf %33, %34 : vector<8x128xf32>
      %36 = vector.extract_strided_slice %29 {offsets = [0, 128], sizes = [8, 128], strides = [1, 1]} : vector<8x512xf32> to vector<8x128xf32>
      %37 = arith.negf %36 : vector<8x128xf32>
      %38 = math.exp %37 : vector<8x128xf32>
      %cst_29 = arith.constant 1.000000e+00 : f32
      %39 = vector.broadcast %cst_29 : f32 to vector<8x128xf32>
      %40 = arith.addf %39, %38 : vector<8x128xf32>
      %41 = arith.divf %39, %40 : vector<8x128xf32>
      %42 = vector.extract_strided_slice %29 {offsets = [0, 256], sizes = [8, 128], strides = [1, 1]} : vector<8x512xf32> to vector<8x128xf32>
      %43 = math.tanh %42 : vector<8x128xf32>
      %44 = vector.extract_strided_slice %29 {offsets = [0, 384], sizes = [8, 128], strides = [1, 1]} : vector<8x512xf32> to vector<8x128xf32>
      %45 = arith.negf %44 : vector<8x128xf32>
      %46 = math.exp %45 : vector<8x128xf32>
      %cst_30 = arith.constant 1.000000e+00 : f32
      %47 = vector.broadcast %cst_30 : f32 to vector<8x128xf32>
      %48 = arith.addf %47, %46 : vector<8x128xf32>
      %49 = arith.divf %47, %48 : vector<8x128xf32>
      %50 = arith.mulf %41, %24 : vector<8x128xf32>
      %51 = arith.mulf %35, %43 : vector<8x128xf32>
      %52 = arith.addf %50, %51 : vector<8x128xf32>
      %53 = math.tanh %52 : vector<8x128xf32>
      %54 = arith.mulf %49, %53 : vector<8x128xf32>
      %55 = vector.broadcast %25 : i32 to vector<8x1xi32>
      %56 = arith.cmpi sgt, %15, %55 : vector<8x1xi32>
      %cst_31 = arith.constant 0.000000e+00 : f32
      %57 = vector.shape_cast %56 : vector<8x1xi1> to vector<8x1xi1>
      %58 = vector.broadcast %57 : vector<8x1xi1> to vector<8x128xi1>
      %59 = vector.broadcast %cst_31 : f32 to vector<8x128xf32>
      %60 = arith.select %58, %54, %59 : vector<8x128xi1>, vector<8x128xf32>
      %61 = arith.truncf %60 : vector<8x128xf32> to vector<8x128xbf16>
      %c0_32 = arith.constant 0 : index
      %c0_33 = arith.constant 0 : index
      %c0_34 = arith.constant 0 : index
      %62 = vector.load %arg7[%c0_32, %c0_33, %c0_34] : memref<1x64x128xbf16, #tpu.memory_space<vmem>>, vector<1x8x128xbf16>
      %63 = vector.shape_cast %62 : vector<1x8x128xbf16> to vector<8x128xbf16>
      %64 = vector.shape_cast %61 : vector<8x128xbf16> to vector<1x8x128xbf16>
      tpu.vector_store %arg7[%c0_32, %c0_33, %c0_34], %64 {strides = array<i32>} : memref<1x64x128xbf16, #tpu.memory_space<vmem>>, vector<1x8x128xbf16>,
      %65 = vector.shape_cast %56 : vector<8x1xi1> to vector<8x1xi1>
      %66 = vector.broadcast %65 : vector<8x1xi1> to vector<8x128xi1>
      %67 = arith.select %66, %54, %23 : vector<8x128xi1>, vector<8x128xf32>
      %68 = vector.shape_cast %56 : vector<8x1xi1> to vector<8x1xi1>
      %69 = vector.broadcast %68 : vector<8x1xi1> to vector<8x128xi1>
      %70 = arith.select %69, %52, %24 : vector<8x128xi1>, vector<8x128xf32>
      %c1_i32_35 = arith.constant 1 : i32
      %71 = arith.addi %16, %c1_i32_35 : i32
      %c8 = arith.constant 8 : index
      %c0_36 = arith.constant 0 : index
      %72 = vector.load %arg8[%c8, %c0_36] : memref<64x512xf32, #tpu.memory_space<vmem>>, vector<8x512xf32>
      %73 = arith.truncf %67 : vector<8x128xf32> to vector<8x128xbf16>
      %cst_37 = arith.constant dense<0.000000e+00> : vector<8x512xf32>
      %74 = tpu.matmul %73, %14, %cst_37 {dimension_numbers = #tpu.dot_dimension_numbers<[1], [0], [0], [1], [0, 0, 1, 1], [], []>} : vector<8x128xbf16>, vector<128x512xbf16>, vector<8x512xf32> -> vector<8x512xf32>
      %75 = arith.addf %72, %74 : vector<8x512xf32>
      %76 = vector.extract_strided_slice %75 {offsets = [0, 0], sizes = [8, 128], strides = [1, 1]} : vector<8x512xf32> to vector<8x128xf32>
      %77 = arith.negf %76 : vector<8x128xf32>
      %78 = math.exp %77 : vector<8x128xf32>
      %cst_38 = arith.constant 1.000000e+00 : f32
      %79 = vector.broadcast %cst_38 : f32 to vector<8x128xf32>
      %80 = arith.addf %79, %78 : vector<8x128xf32>
      %81 = arith.divf %79, %80 : vector<8x128xf32>
      %82 = vector.extract_strided_slice %75 {offsets = [0, 128], sizes = [8, 128], strides = [1, 1]} : vector<8x512xf32> to vector<8x128xf32>
      %83 = arith.negf %82 : vector<8x128xf32>
      %84 = math.exp %83 : vector<8x128xf32>
      %cst_39 = arith.constant 1.000000e+00 : f32
      %85 = vector.broadcast %cst_39 : f32 to vector<8x128xf32>
      %86 = arith.addf %85, %84 : vector<8x128xf32>
      %87 = arith.divf %85, %86 : vector<8x128xf32>
      %88 = vector.extract_strided_slice %75 {offsets = [0, 256], sizes = [8, 128], strides = [1, 1]} : vector<8x512xf32> to vector<8x128xf32>
      %89 = math.tanh %88 : vector<8x128xf32>
      %90 = vector.extract_strided_slice %75 {offsets = [0, 384], sizes = [8, 128], strides = [1, 1]} : vector<8x512xf32> to vector<8x128xf32>
      %91 = arith.negf %90 : vector<8x128xf32>
      %92 = math.exp %91 : vector<8x128xf32>
      %cst_40 = arith.constant 1.000000e+00 : f32
      %93 = vector.broadcast %cst_40 : f32 to vector<8x128xf32>
      %94 = arith.addf %93, %92 : vector<8x128xf32>
      %95 = arith.divf %93, %94 : vector<8x128xf32>
      %96 = arith.mulf %87, %70 : vector<8x128xf32>
      %97 = arith.mulf %81, %89 : vector<8x128xf32>
      %98 = arith.addf %96, %97 : vector<8x128xf32>
      %99 = math.tanh %98 : vector<8x128xf32>
      %100 = arith.mulf %95, %99 : vector<8x128xf32>
      %101 = vector.broadcast %71 : i32 to vector<8x1xi32>
      %102 = arith.cmpi sgt, %15, %101 : vector<8x1xi32>
      %cst_41 = arith.constant 0.000000e+00 : f32
      %103 = vector.shape_cast %102 : vector<8x1xi1> to vector<8x1xi1>
      %104 = vector.broadcast %103 : vector<8x1xi1> to vector<8x128xi1>
      %105 = vector.broadcast %cst_41 : f32 to vector<8x128xf32>
      %106 = arith.select %104, %100, %105 : vector<8x128xi1>, vector<8x128xf32>
      %107 = arith.truncf %106 : vector<8x128xf32> to vector<8x128xbf16>
      %c0_42 = arith.constant 0 : index
      %c8_43 = arith.constant 8 : index
      %c0_44 = arith.constant 0 : index
      %108 = vector.load %arg7[%c0_42, %c8_43, %c0_44] : memref<1x64x128xbf16, #tpu.memory_space<vmem>>, vector<1x8x128xbf16>
      %109 = vector.shape_cast %108 : vector<1x8x128xbf16> to vector<8x128xbf16>
      %110 = vector.shape_cast %107 : vector<8x128xbf16> to vector<1x8x128xbf16>
      tpu.vector_store %arg7[%c0_42, %c8_43, %c0_44], %110 {strides = array<i32>} : memref<1x64x128xbf16, #tpu.memory_space<vmem>>, vector<1x8x128xbf16>,
      %111 = vector.shape_cast %102 : vector<8x1xi1> to vector<8x1xi1>
      %112 = vector.broadcast %111 : vector<8x1xi1> to vector<8x128xi1>
      %113 = arith.select %112, %100, %67 : vector<8x128xi1>, vector<8x128xf32>
      %114 = vector.shape_cast %102 : vector<8x1xi1> to vector<8x1xi1>
      %115 = vector.broadcast %114 : vector<8x1xi1> to vector<8x128xi1>
      %116 = arith.select %115, %98, %70 : vector<8x128xi1>, vector<8x128xf32>
      %c2_i32 = arith.constant 2 : i32
      %117 = arith.addi %16, %c2_i32 : i32
      %c16 = arith.constant 16 : index
      %c0_45 = arith.constant 0 : index
      %118 = vector.load %arg8[%c16, %c0_45] : memref<64x512xf32, #tpu.memory_space<vmem>>, vector<8x512xf32>
      %119 = arith.truncf %113 : vector<8x128xf32> to vector<8x128xbf16>
      %cst_46 = arith.constant dense<0.000000e+00> : vector<8x512xf32>
      %120 = tpu.matmul %119, %14, %cst_46 {dimension_numbers = #tpu.dot_dimension_numbers<[1], [0], [0], [1], [0, 0, 1, 1], [], []>} : vector<8x128xbf16>, vector<128x512xbf16>, vector<8x512xf32> -> vector<8x512xf32>
      %121 = arith.addf %118, %120 : vector<8x512xf32>
      %122 = vector.extract_strided_slice %121 {offsets = [0, 0], sizes = [8, 128], strides = [1, 1]} : vector<8x512xf32> to vector<8x128xf32>
      %123 = arith.negf %122 : vector<8x128xf32>
      %124 = math.exp %123 : vector<8x128xf32>
      %cst_47 = arith.constant 1.000000e+00 : f32
      %125 = vector.broadcast %cst_47 : f32 to vector<8x128xf32>
      %126 = arith.addf %125, %124 : vector<8x128xf32>
      %127 = arith.divf %125, %126 : vector<8x128xf32>
      %128 = vector.extract_strided_slice %121 {offsets = [0, 128], sizes = [8, 128], strides = [1, 1]} : vector<8x512xf32> to vector<8x128xf32>
      %129 = arith.negf %128 : vector<8x128xf32>
      %130 = math.exp %129 : vector<8x128xf32>
      %cst_48 = arith.constant 1.000000e+00 : f32
      %131 = vector.broadcast %cst_48 : f32 to vector<8x128xf32>
      %132 = arith.addf %131, %130 : vector<8x128xf32>
      %133 = arith.divf %131, %132 : vector<8x128xf32>
      %134 = vector.extract_strided_slice %121 {offsets = [0, 256], sizes = [8, 128], strides = [1, 1]} : vector<8x512xf32> to vector<8x128xf32>
      %135 = math.tanh %134 : vector<8x128xf32>
      %136 = vector.extract_strided_slice %121 {offsets = [0, 384], sizes = [8, 128], strides = [1, 1]} : vector<8x512xf32> to vector<8x128xf32>
      %137 = arith.negf %136 : vector<8x128xf32>
      %138 = math.exp %137 : vector<8x128xf32>
      %cst_49 = arith.constant 1.000000e+00 : f32
      %139 = vector.broadcast %cst_49 : f32 to vector<8x128xf32>
      %140 = arith.addf %139, %138 : vector<8x128xf32>
      %141 = arith.divf %139, %140 : vector<8x128xf32>
      %142 = arith.mulf %133, %116 : vector<8x128xf32>
      %143 = arith.mulf %127, %135 : vector<8x128xf32>
      %144 = arith.addf %142, %143 : vector<8x128xf32>
      %145 = math.tanh %144 : vector<8x128xf32>
      %146 = arith.mulf %141, %145 : vector<8x128xf32>
      %147 = vector.broadcast %117 : i32 to vector<8x1xi32>
      %148 = arith.cmpi sgt, %15, %147 : vector<8x1xi32>
      %cst_50 = arith.constant 0.000000e+00 : f32
      %149 = vector.shape_cast %148 : vector<8x1xi1> to vector<8x1xi1>
      %150 = vector.broadcast %149 : vector<8x1xi1> to vector<8x128xi1>
      %151 = vector.broadcast %cst_50 : f32 to vector<8x128xf32>
      %152 = arith.select %150, %146, %151 : vector<8x128xi1>, vector<8x128xf32>
      %153 = arith.truncf %152 : vector<8x128xf32> to vector<8x128xbf16>
      %c0_51 = arith.constant 0 : index
      %c16_52 = arith.constant 16 : index
      %c0_53 = arith.constant 0 : index
      %154 = vector.load %arg7[%c0_51, %c16_52, %c0_53] : memref<1x64x128xbf16, #tpu.memory_space<vmem>>, vector<1x8x128xbf16>
      %155 = vector.shape_cast %154 : vector<1x8x128xbf16> to vector<8x128xbf16>
      %156 = vector.shape_cast %153 : vector<8x128xbf16> to vector<1x8x128xbf16>
      tpu.vector_store %arg7[%c0_51, %c16_52, %c0_53], %156 {strides = array<i32>} : memref<1x64x128xbf16, #tpu.memory_space<vmem>>, vector<1x8x128xbf16>,
      %157 = vector.shape_cast %148 : vector<8x1xi1> to vector<8x1xi1>
      %158 = vector.broadcast %157 : vector<8x1xi1> to vector<8x128xi1>
      %159 = arith.select %158, %146, %113 : vector<8x128xi1>, vector<8x128xf32>
      %160 = vector.shape_cast %148 : vector<8x1xi1> to vector<8x1xi1>
      %161 = vector.broadcast %160 : vector<8x1xi1> to vector<8x128xi1>
      %162 = arith.select %161, %144, %116 : vector<8x128xi1>, vector<8x128xf32>
      %c3_i32 = arith.constant 3 : i32
      %163 = arith.addi %16, %c3_i32 : i32
      %c24 = arith.constant 24 : index
      %c0_54 = arith.constant 0 : index
      %164 = vector.load %arg8[%c24, %c0_54] : memref<64x512xf32, #tpu.memory_space<vmem>>, vector<8x512xf32>
      %165 = arith.truncf %159 : vector<8x128xf32> to vector<8x128xbf16>
      %cst_55 = arith.constant dense<0.000000e+00> : vector<8x512xf32>
      %166 = tpu.matmul %165, %14, %cst_55 {dimension_numbers = #tpu.dot_dimension_numbers<[1], [0], [0], [1], [0, 0, 1, 1], [], []>} : vector<8x128xbf16>, vector<128x512xbf16>, vector<8x512xf32> -> vector<8x512xf32>
      %167 = arith.addf %164, %166 : vector<8x512xf32>
      %168 = vector.extract_strided_slice %167 {offsets = [0, 0], sizes = [8, 128], strides = [1, 1]} : vector<8x512xf32> to vector<8x128xf32>
      %169 = arith.negf %168 : vector<8x128xf32>
      %170 = math.exp %169 : vector<8x128xf32>
      %cst_56 = arith.constant 1.000000e+00 : f32
      %171 = vector.broadcast %cst_56 : f32 to vector<8x128xf32>
      %172 = arith.addf %171, %170 : vector<8x128xf32>
      %173 = arith.divf %171, %172 : vector<8x128xf32>
      %174 = vector.extract_strided_slice %167 {offsets = [0, 128], sizes = [8, 128], strides = [1, 1]} : vector<8x512xf32> to vector<8x128xf32>
      %175 = arith.negf %174 : vector<8x128xf32>
      %176 = math.exp %175 : vector<8x128xf32>
      %cst_57 = arith.constant 1.000000e+00 : f32
      %177 = vector.broadcast %cst_57 : f32 to vector<8x128xf32>
      %178 = arith.addf %177, %176 : vector<8x128xf32>
      %179 = arith.divf %177, %178 : vector<8x128xf32>
      %180 = vector.extract_strided_slice %167 {offsets = [0, 256], sizes = [8, 128], strides = [1, 1]} : vector<8x512xf32> to vector<8x128xf32>
      %181 = math.tanh %180 : vector<8x128xf32>
      %182 = vector.extract_strided_slice %167 {offsets = [0, 384], sizes = [8, 128], strides = [1, 1]} : vector<8x512xf32> to vector<8x128xf32>
      %183 = arith.negf %182 : vector<8x128xf32>
      %184 = math.exp %183 : vector<8x128xf32>
      %cst_58 = arith.constant 1.000000e+00 : f32
      %185 = vector.broadcast %cst_58 : f32 to vector<8x128xf32>
      %186 = arith.addf %185, %184 : vector<8x128xf32>
      %187 = arith.divf %185, %186 : vector<8x128xf32>
      %188 = arith.mulf %179, %162 : vector<8x128xf32>
      %189 = arith.mulf %173, %181 : vector<8x128xf32>
      %190 = arith.addf %188, %189 : vector<8x128xf32>
      %191 = math.tanh %190 : vector<8x128xf32>
      %192 = arith.mulf %187, %191 : vector<8x128xf32>
      %193 = vector.broadcast %163 : i32 to vector<8x1xi32>
      %194 = arith.cmpi sgt, %15, %193 : vector<8x1xi32>
      %cst_59 = arith.constant 0.000000e+00 : f32
      %195 = vector.shape_cast %194 : vector<8x1xi1> to vector<8x1xi1>
      %196 = vector.broadcast %195 : vector<8x1xi1> to vector<8x128xi1>
      %197 = vector.broadcast %cst_59 : f32 to vector<8x128xf32>
      %198 = arith.select %196, %192, %197 : vector<8x128xi1>, vector<8x128xf32>
      %199 = arith.truncf %198 : vector<8x128xf32> to vector<8x128xbf16>
      %c0_60 = arith.constant 0 : index
      %c24_61 = arith.constant 24 : index
      %c0_62 = arith.constant 0 : index
      %200 = vector.load %arg7[%c0_60, %c24_61, %c0_62] : memref<1x64x128xbf16, #tpu.memory_space<vmem>>, vector<1x8x128xbf16>
      %201 = vector.shape_cast %200 : vector<1x8x128xbf16> to vector<8x128xbf16>
      %202 = vector.shape_cast %199 : vector<8x128xbf16> to vector<1x8x128xbf16>
      tpu.vector_store %arg7[%c0_60, %c24_61, %c0_62], %202 {strides = array<i32>} : memref<1x64x128xbf16, #tpu.memory_space<vmem>>, vector<1x8x128xbf16>,
      %203 = vector.shape_cast %194 : vector<8x1xi1> to vector<8x1xi1>
      %204 = vector.broadcast %203 : vector<8x1xi1> to vector<8x128xi1>
      %205 = arith.select %204, %192, %159 : vector<8x128xi1>, vector<8x128xf32>
      %206 = vector.shape_cast %194 : vector<8x1xi1> to vector<8x1xi1>
      %207 = vector.broadcast %206 : vector<8x1xi1> to vector<8x128xi1>
      %208 = arith.select %207, %190, %162 : vector<8x128xi1>, vector<8x128xf32>
      %c4_i32 = arith.constant 4 : i32
      %209 = arith.addi %16, %c4_i32 : i32
      %c32 = arith.constant 32 : index
      %c0_63 = arith.constant 0 : index
      %210 = vector.load %arg8[%c32, %c0_63] : memref<64x512xf32, #tpu.memory_space<vmem>>, vector<8x512xf32>
      %211 = arith.truncf %205 : vector<8x128xf32> to vector<8x128xbf16>
      %cst_64 = arith.constant dense<0.000000e+00> : vector<8x512xf32>
      %212 = tpu.matmul %211, %14, %cst_64 {dimension_numbers = #tpu.dot_dimension_numbers<[1], [0], [0], [1], [0, 0, 1, 1], [], []>} : vector<8x128xbf16>, vector<128x512xbf16>, vector<8x512xf32> -> vector<8x512xf32>
      %213 = arith.addf %210, %212 : vector<8x512xf32>
      %214 = vector.extract_strided_slice %213 {offsets = [0, 0], sizes = [8, 128], strides = [1, 1]} : vector<8x512xf32> to vector<8x128xf32>
      %215 = arith.negf %214 : vector<8x128xf32>
      %216 = math.exp %215 : vector<8x128xf32>
      %cst_65 = arith.constant 1.000000e+00 : f32
      %217 = vector.broadcast %cst_65 : f32 to vector<8x128xf32>
      %218 = arith.addf %217, %216 : vector<8x128xf32>
      %219 = arith.divf %217, %218 : vector<8x128xf32>
      %220 = vector.extract_strided_slice %213 {offsets = [0, 128], sizes = [8, 128], strides = [1, 1]} : vector<8x512xf32> to vector<8x128xf32>
      %221 = arith.negf %220 : vector<8x128xf32>
      %222 = math.exp %221 : vector<8x128xf32>
      %cst_66 = arith.constant 1.000000e+00 : f32
      %223 = vector.broadcast %cst_66 : f32 to vector<8x128xf32>
      %224 = arith.addf %223, %222 : vector<8x128xf32>
      %225 = arith.divf %223, %224 : vector<8x128xf32>
      %226 = vector.extract_strided_slice %213 {offsets = [0, 256], sizes = [8, 128], strides = [1, 1]} : vector<8x512xf32> to vector<8x128xf32>
      %227 = math.tanh %226 : vector<8x128xf32>
      %228 = vector.extract_strided_slice %213 {offsets = [0, 384], sizes = [8, 128], strides = [1, 1]} : vector<8x512xf32> to vector<8x128xf32>
      %229 = arith.negf %228 : vector<8x128xf32>
      %230 = math.exp %229 : vector<8x128xf32>
      %cst_67 = arith.constant 1.000000e+00 : f32
      %231 = vector.broadcast %cst_67 : f32 to vector<8x128xf32>
      %232 = arith.addf %231, %230 : vector<8x128xf32>
      %233 = arith.divf %231, %232 : vector<8x128xf32>
      %234 = arith.mulf %225, %208 : vector<8x128xf32>
      %235 = arith.mulf %219, %227 : vector<8x128xf32>
      %236 = arith.addf %234, %235 : vector<8x128xf32>
      %237 = math.tanh %236 : vector<8x128xf32>
      %238 = arith.mulf %233, %237 : vector<8x128xf32>
      %239 = vector.broadcast %209 : i32 to vector<8x1xi32>
      %240 = arith.cmpi sgt, %15, %239 : vector<8x1xi32>
      %cst_68 = arith.constant 0.000000e+00 : f32
      %241 = vector.shape_cast %240 : vector<8x1xi1> to vector<8x1xi1>
      %242 = vector.broadcast %241 : vector<8x1xi1> to vector<8x128xi1>
      %243 = vector.broadcast %cst_68 : f32 to vector<8x128xf32>
      %244 = arith.select %242, %238, %243 : vector<8x128xi1>, vector<8x128xf32>
      %245 = arith.truncf %244 : vector<8x128xf32> to vector<8x128xbf16>
      %c0_69 = arith.constant 0 : index
      %c32_70 = arith.constant 32 : index
      %c0_71 = arith.constant 0 : index
      %246 = vector.load %arg7[%c0_69, %c32_70, %c0_71] : memref<1x64x128xbf16, #tpu.memory_space<vmem>>, vector<1x8x128xbf16>
      %247 = vector.shape_cast %246 : vector<1x8x128xbf16> to vector<8x128xbf16>
      %248 = vector.shape_cast %245 : vector<8x128xbf16> to vector<1x8x128xbf16>
      tpu.vector_store %arg7[%c0_69, %c32_70, %c0_71], %248 {strides = array<i32>} : memref<1x64x128xbf16, #tpu.memory_space<vmem>>, vector<1x8x128xbf16>,
      %249 = vector.shape_cast %240 : vector<8x1xi1> to vector<8x1xi1>
      %250 = vector.broadcast %249 : vector<8x1xi1> to vector<8x128xi1>
      %251 = arith.select %250, %238, %205 : vector<8x128xi1>, vector<8x128xf32>
      %252 = vector.shape_cast %240 : vector<8x1xi1> to vector<8x1xi1>
      %253 = vector.broadcast %252 : vector<8x1xi1> to vector<8x128xi1>
      %254 = arith.select %253, %236, %208 : vector<8x128xi1>, vector<8x128xf32>
      %c5_i32 = arith.constant 5 : i32
      %255 = arith.addi %16, %c5_i32 : i32
      %c40 = arith.constant 40 : index
      %c0_72 = arith.constant 0 : index
      %256 = vector.load %arg8[%c40, %c0_72] : memref<64x512xf32, #tpu.memory_space<vmem>>, vector<8x512xf32>
      %257 = arith.truncf %251 : vector<8x128xf32> to vector<8x128xbf16>
      %cst_73 = arith.constant dense<0.000000e+00> : vector<8x512xf32>
      %258 = tpu.matmul %257, %14, %cst_73 {dimension_numbers = #tpu.dot_dimension_numbers<[1], [0], [0], [1], [0, 0, 1, 1], [], []>} : vector<8x128xbf16>, vector<128x512xbf16>, vector<8x512xf32> -> vector<8x512xf32>
      %259 = arith.addf %256, %258 : vector<8x512xf32>
      %260 = vector.extract_strided_slice %259 {offsets = [0, 0], sizes = [8, 128], strides = [1, 1]} : vector<8x512xf32> to vector<8x128xf32>
      %261 = arith.negf %260 : vector<8x128xf32>
      %262 = math.exp %261 : vector<8x128xf32>
      %cst_74 = arith.constant 1.000000e+00 : f32
      %263 = vector.broadcast %cst_74 : f32 to vector<8x128xf32>
      %264 = arith.addf %263, %262 : vector<8x128xf32>
      %265 = arith.divf %263, %264 : vector<8x128xf32>
      %266 = vector.extract_strided_slice %259 {offsets = [0, 128], sizes = [8, 128], strides = [1, 1]} : vector<8x512xf32> to vector<8x128xf32>
      %267 = arith.negf %266 : vector<8x128xf32>
      %268 = math.exp %267 : vector<8x128xf32>
      %cst_75 = arith.constant 1.000000e+00 : f32
      %269 = vector.broadcast %cst_75 : f32 to vector<8x128xf32>
      %270 = arith.addf %269, %268 : vector<8x128xf32>
      %271 = arith.divf %269, %270 : vector<8x128xf32>
      %272 = vector.extract_strided_slice %259 {offsets = [0, 256], sizes = [8, 128], strides = [1, 1]} : vector<8x512xf32> to vector<8x128xf32>
      %273 = math.tanh %272 : vector<8x128xf32>
      %274 = vector.extract_strided_slice %259 {offsets = [0, 384], sizes = [8, 128], strides = [1, 1]} : vector<8x512xf32> to vector<8x128xf32>
      %275 = arith.negf %274 : vector<8x128xf32>
      %276 = math.exp %275 : vector<8x128xf32>
      %cst_76 = arith.constant 1.000000e+00 : f32
      %277 = vector.broadcast %cst_76 : f32 to vector<8x128xf32>
      %278 = arith.addf %277, %276 : vector<8x128xf32>
      %279 = arith.divf %277, %278 : vector<8x128xf32>
      %280 = arith.mulf %271, %254 : vector<8x128xf32>
      %281 = arith.mulf %265, %273 : vector<8x128xf32>
      %282 = arith.addf %280, %281 : vector<8x128xf32>
      %283 = math.tanh %282 : vector<8x128xf32>
      %284 = arith.mulf %279, %283 : vector<8x128xf32>
      %285 = vector.broadcast %255 : i32 to vector<8x1xi32>
      %286 = arith.cmpi sgt, %15, %285 : vector<8x1xi32>
      %cst_77 = arith.constant 0.000000e+00 : f32
      %287 = vector.shape_cast %286 : vector<8x1xi1> to vector<8x1xi1>
      %288 = vector.broadcast %287 : vector<8x1xi1> to vector<8x128xi1>
      %289 = vector.broadcast %cst_77 : f32 to vector<8x128xf32>
      %290 = arith.select %288, %284, %289 : vector<8x128xi1>, vector<8x128xf32>
      %291 = arith.truncf %290 : vector<8x128xf32> to vector<8x128xbf16>
      %c0_78 = arith.constant 0 : index
      %c40_79 = arith.constant 40 : index
      %c0_80 = arith.constant 0 : index
      %292 = vector.load %arg7[%c0_78, %c40_79, %c0_80] : memref<1x64x128xbf16, #tpu.memory_space<vmem>>, vector<1x8x128xbf16>
      %293 = vector.shape_cast %292 : vector<1x8x128xbf16> to vector<8x128xbf16>
      %294 = vector.shape_cast %291 : vector<8x128xbf16> to vector<1x8x128xbf16>
      tpu.vector_store %arg7[%c0_78, %c40_79, %c0_80], %294 {strides = array<i32>} : memref<1x64x128xbf16, #tpu.memory_space<vmem>>, vector<1x8x128xbf16>,
      %295 = vector.shape_cast %286 : vector<8x1xi1> to vector<8x1xi1>
      %296 = vector.broadcast %295 : vector<8x1xi1> to vector<8x128xi1>
      %297 = arith.select %296, %284, %251 : vector<8x128xi1>, vector<8x128xf32>
      %298 = vector.shape_cast %286 : vector<8x1xi1> to vector<8x1xi1>
      %299 = vector.broadcast %298 : vector<8x1xi1> to vector<8x128xi1>
      %300 = arith.select %299, %282, %254 : vector<8x128xi1>, vector<8x128xf32>
      %c6_i32 = arith.constant 6 : i32
      %301 = arith.addi %16, %c6_i32 : i32
      %c48 = arith.constant 48 : index
      %c0_81 = arith.constant 0 : index
      %302 = vector.load %arg8[%c48, %c0_81] : memref<64x512xf32, #tpu.memory_space<vmem>>, vector<8x512xf32>
      %303 = arith.truncf %297 : vector<8x128xf32> to vector<8x128xbf16>
      %cst_82 = arith.constant dense<0.000000e+00> : vector<8x512xf32>
      %304 = tpu.matmul %303, %14, %cst_82 {dimension_numbers = #tpu.dot_dimension_numbers<[1], [0], [0], [1], [0, 0, 1, 1], [], []>} : vector<8x128xbf16>, vector<128x512xbf16>, vector<8x512xf32> -> vector<8x512xf32>
      %305 = arith.addf %302, %304 : vector<8x512xf32>
      %306 = vector.extract_strided_slice %305 {offsets = [0, 0], sizes = [8, 128], strides = [1, 1]} : vector<8x512xf32> to vector<8x128xf32>
      %307 = arith.negf %306 : vector<8x128xf32>
      %308 = math.exp %307 : vector<8x128xf32>
      %cst_83 = arith.constant 1.000000e+00 : f32
      %309 = vector.broadcast %cst_83 : f32 to vector<8x128xf32>
      %310 = arith.addf %309, %308 : vector<8x128xf32>
      %311 = arith.divf %309, %310 : vector<8x128xf32>
      %312 = vector.extract_strided_slice %305 {offsets = [0, 128], sizes = [8, 128], strides = [1, 1]} : vector<8x512xf32> to vector<8x128xf32>
      %313 = arith.negf %312 : vector<8x128xf32>
      %314 = math.exp %313 : vector<8x128xf32>
      %cst_84 = arith.constant 1.000000e+00 : f32
      %315 = vector.broadcast %cst_84 : f32 to vector<8x128xf32>
      %316 = arith.addf %315, %314 : vector<8x128xf32>
      %317 = arith.divf %315, %316 : vector<8x128xf32>
      %318 = vector.extract_strided_slice %305 {offsets = [0, 256], sizes = [8, 128], strides = [1, 1]} : vector<8x512xf32> to vector<8x128xf32>
      %319 = math.tanh %318 : vector<8x128xf32>
      %320 = vector.extract_strided_slice %305 {offsets = [0, 384], sizes = [8, 128], strides = [1, 1]} : vector<8x512xf32> to vector<8x128xf32>
      %321 = arith.negf %320 : vector<8x128xf32>
      %322 = math.exp %321 : vector<8x128xf32>
      %cst_85 = arith.constant 1.000000e+00 : f32
      %323 = vector.broadcast %cst_85 : f32 to vector<8x128xf32>
      %324 = arith.addf %323, %322 : vector<8x128xf32>
      %325 = arith.divf %323, %324 : vector<8x128xf32>
      %326 = arith.mulf %317, %300 : vector<8x128xf32>
      %327 = arith.mulf %311, %319 : vector<8x128xf32>
      %328 = arith.addf %326, %327 : vector<8x128xf32>
      %329 = math.tanh %328 : vector<8x128xf32>
      %330 = arith.mulf %325, %329 : vector<8x128xf32>
      %331 = vector.broadcast %301 : i32 to vector<8x1xi32>
      %332 = arith.cmpi sgt, %15, %331 : vector<8x1xi32>
      %cst_86 = arith.constant 0.000000e+00 : f32
      %333 = vector.shape_cast %332 : vector<8x1xi1> to vector<8x1xi1>
      %334 = vector.broadcast %333 : vector<8x1xi1> to vector<8x128xi1>
      %335 = vector.broadcast %cst_86 : f32 to vector<8x128xf32>
      %336 = arith.select %334, %330, %335 : vector<8x128xi1>, vector<8x128xf32>
      %337 = arith.truncf %336 : vector<8x128xf32> to vector<8x128xbf16>
      %c0_87 = arith.constant 0 : index
      %c48_88 = arith.constant 48 : index
      %c0_89 = arith.constant 0 : index
      %338 = vector.load %arg7[%c0_87, %c48_88, %c0_89] : memref<1x64x128xbf16, #tpu.memory_space<vmem>>, vector<1x8x128xbf16>
      %339 = vector.shape_cast %338 : vector<1x8x128xbf16> to vector<8x128xbf16>
      %340 = vector.shape_cast %337 : vector<8x128xbf16> to vector<1x8x128xbf16>
      tpu.vector_store %arg7[%c0_87, %c48_88, %c0_89], %340 {strides = array<i32>} : memref<1x64x128xbf16, #tpu.memory_space<vmem>>, vector<1x8x128xbf16>,
      %341 = vector.shape_cast %332 : vector<8x1xi1> to vector<8x1xi1>
      %342 = vector.broadcast %341 : vector<8x1xi1> to vector<8x128xi1>
      %343 = arith.select %342, %330, %297 : vector<8x128xi1>, vector<8x128xf32>
      %344 = vector.shape_cast %332 : vector<8x1xi1> to vector<8x1xi1>
      %345 = vector.broadcast %344 : vector<8x1xi1> to vector<8x128xi1>
      %346 = arith.select %345, %328, %300 : vector<8x128xi1>, vector<8x128xf32>
      %c7_i32 = arith.constant 7 : i32
      %347 = arith.addi %16, %c7_i32 : i32
      %c56 = arith.constant 56 : index
      %c0_90 = arith.constant 0 : index
      %348 = vector.load %arg8[%c56, %c0_90] : memref<64x512xf32, #tpu.memory_space<vmem>>, vector<8x512xf32>
      %349 = arith.truncf %343 : vector<8x128xf32> to vector<8x128xbf16>
      %cst_91 = arith.constant dense<0.000000e+00> : vector<8x512xf32>
      %350 = tpu.matmul %349, %14, %cst_91 {dimension_numbers = #tpu.dot_dimension_numbers<[1], [0], [0], [1], [0, 0, 1, 1], [], []>} : vector<8x128xbf16>, vector<128x512xbf16>, vector<8x512xf32> -> vector<8x512xf32>
      %351 = arith.addf %348, %350 : vector<8x512xf32>
      %352 = vector.extract_strided_slice %351 {offsets = [0, 0], sizes = [8, 128], strides = [1, 1]} : vector<8x512xf32> to vector<8x128xf32>
      %353 = arith.negf %352 : vector<8x128xf32>
      %354 = math.exp %353 : vector<8x128xf32>
      %cst_92 = arith.constant 1.000000e+00 : f32
      %355 = vector.broadcast %cst_92 : f32 to vector<8x128xf32>
      %356 = arith.addf %355, %354 : vector<8x128xf32>
      %357 = arith.divf %355, %356 : vector<8x128xf32>
      %358 = vector.extract_strided_slice %351 {offsets = [0, 128], sizes = [8, 128], strides = [1, 1]} : vector<8x512xf32> to vector<8x128xf32>
      %359 = arith.negf %358 : vector<8x128xf32>
      %360 = math.exp %359 : vector<8x128xf32>
      %cst_93 = arith.constant 1.000000e+00 : f32
      %361 = vector.broadcast %cst_93 : f32 to vector<8x128xf32>
      %362 = arith.addf %361, %360 : vector<8x128xf32>
      %363 = arith.divf %361, %362 : vector<8x128xf32>
      %364 = vector.extract_strided_slice %351 {offsets = [0, 256], sizes = [8, 128], strides = [1, 1]} : vector<8x512xf32> to vector<8x128xf32>
      %365 = math.tanh %364 : vector<8x128xf32>
      %366 = vector.extract_strided_slice %351 {offsets = [0, 384], sizes = [8, 128], strides = [1, 1]} : vector<8x512xf32> to vector<8x128xf32>
      %367 = arith.negf %366 : vector<8x128xf32>
      %368 = math.exp %367 : vector<8x128xf32>
      %cst_94 = arith.constant 1.000000e+00 : f32
      %369 = vector.broadcast %cst_94 : f32 to vector<8x128xf32>
      %370 = arith.addf %369, %368 : vector<8x128xf32>
      %371 = arith.divf %369, %370 : vector<8x128xf32>
      %372 = arith.mulf %363, %346 : vector<8x128xf32>
      %373 = arith.mulf %357, %365 : vector<8x128xf32>
      %374 = arith.addf %372, %373 : vector<8x128xf32>
      %375 = math.tanh %374 : vector<8x128xf32>
      %376 = arith.mulf %371, %375 : vector<8x128xf32>
      %377 = vector.broadcast %347 : i32 to vector<8x1xi32>
      %378 = arith.cmpi sgt, %15, %377 : vector<8x1xi32>
      %cst_95 = arith.constant 0.000000e+00 : f32
      %379 = vector.shape_cast %378 : vector<8x1xi1> to vector<8x1xi1>
      %380 = vector.broadcast %379 : vector<8x1xi1> to vector<8x128xi1>
      %381 = vector.broadcast %cst_95 : f32 to vector<8x128xf32>
      %382 = arith.select %380, %376, %381 : vector<8x128xi1>, vector<8x128xf32>
      %383 = arith.truncf %382 : vector<8x128xf32> to vector<8x128xbf16>
      %c0_96 = arith.constant 0 : index
      %c56_97 = arith.constant 56 : index
      %c0_98 = arith.constant 0 : index
      %384 = vector.load %arg7[%c0_96, %c56_97, %c0_98] : memref<1x64x128xbf16, #tpu.memory_space<vmem>>, vector<1x8x128xbf16>
      %385 = vector.shape_cast %384 : vector<1x8x128xbf16> to vector<8x128xbf16>
      %386 = vector.shape_cast %383 : vector<8x128xbf16> to vector<1x8x128xbf16>
      tpu.vector_store %arg7[%c0_96, %c56_97, %c0_98], %386 {strides = array<i32>} : memref<1x64x128xbf16, #tpu.memory_space<vmem>>, vector<1x8x128xbf16>,
      %387 = vector.shape_cast %378 : vector<8x1xi1> to vector<8x1xi1>
      %388 = vector.broadcast %387 : vector<8x1xi1> to vector<8x128xi1>
      %389 = arith.select %388, %376, %343 : vector<8x128xi1>, vector<8x128xf32>
      %390 = vector.shape_cast %378 : vector<8x1xi1> to vector<8x1xi1>
      %391 = vector.broadcast %390 : vector<8x1xi1> to vector<8x128xi1>
      %392 = arith.select %391, %374, %346 : vector<8x128xi1>, vector<8x128xf32>
      %c0_99 = arith.constant 0 : index
      %c0_100 = arith.constant 0 : index
      %393 = vector.load %arg9[%c0_99, %c0_100] : memref<8x128xf32, #tpu.memory_space<vmem>>, vector<8x128xf32>
      tpu.vector_store %arg9[%c0_99, %c0_100], %389 {strides = array<i32>} : memref<8x128xf32, #tpu.memory_space<vmem>>, vector<8x128xf32>,
      %c0_101 = arith.constant 0 : index
      %c0_102 = arith.constant 0 : index
      %394 = vector.load %arg10[%c0_101, %c0_102] : memref<8x128xf32, #tpu.memory_space<vmem>>, vector<8x128xf32>
      tpu.vector_store %arg10[%c0_101, %c0_102], %392 {strides = array<i32>} : memref<8x128xf32, #tpu.memory_space<vmem>>, vector<8x128xf32>,
    } else {
    }
    %c1_i32 = arith.constant 1 : i32
    %20 = arith.cmpi eq, %arg0, %c1_i32 : i32
    %21 = arith.extui %20 : i1 to i32
    %c0_i32_19 = arith.constant 0 : i32
    %22 = arith.cmpi ne, %21, %c0_i32_19 : i32
    scf.if %22 {
      %c0_20 = arith.constant 0 : index
      %c0_21 = arith.constant 0 : index
      %23 = vector.load %arg9[%c0_20, %c0_21] : memref<8x128xf32, #tpu.memory_space<vmem>>, vector<8x128xf32>
      %c0_22 = arith.constant 0 : index
      %c0_23 = arith.constant 0 : index
      %24 = vector.load %arg10[%c0_22, %c0_23] : memref<8x128xf32, #tpu.memory_space<vmem>>, vector<8x128xf32>
      %c15_i32 = arith.constant 15 : i32
      %25 = arith.subi %c15_i32, %16 : i32
      %c0_i32_24 = arith.constant 0 : i32
      %26 = arith.subi %25, %c0_i32_24 : i32
      %c56 = arith.constant 56 : index
      %c0_25 = arith.constant 0 : index
      %27 = vector.load %arg8[%c56, %c0_25] : memref<64x512xf32, #tpu.memory_space<vmem>>, vector<8x512xf32>
      %28 = arith.truncf %23 : vector<8x128xf32> to vector<8x128xbf16>
      %cst_26 = arith.constant dense<0.000000e+00> : vector<8x512xf32>
      %29 = tpu.matmul %28, %14, %cst_26 {dimension_numbers = #tpu.dot_dimension_numbers<[1], [0], [0], [1], [0, 0, 1, 1], [], []>} : vector<8x128xbf16>, vector<128x512xbf16>, vector<8x512xf32> -> vector<8x512xf32>
      %30 = arith.addf %27, %29 : vector<8x512xf32>
      %31 = vector.extract_strided_slice %30 {offsets = [0, 0], sizes = [8, 128], strides = [1, 1]} : vector<8x512xf32> to vector<8x128xf32>
      %32 = arith.negf %31 : vector<8x128xf32>
      %33 = math.exp %32 : vector<8x128xf32>
      %cst_27 = arith.constant 1.000000e+00 : f32
      %34 = vector.broadcast %cst_27 : f32 to vector<8x128xf32>
      %35 = arith.addf %34, %33 : vector<8x128xf32>
      %36 = arith.divf %34, %35 : vector<8x128xf32>
      %37 = vector.extract_strided_slice %30 {offsets = [0, 128], sizes = [8, 128], strides = [1, 1]} : vector<8x512xf32> to vector<8x128xf32>
      %38 = arith.negf %37 : vector<8x128xf32>
      %39 = math.exp %38 : vector<8x128xf32>
      %cst_28 = arith.constant 1.000000e+00 : f32
      %40 = vector.broadcast %cst_28 : f32 to vector<8x128xf32>
      %41 = arith.addf %40, %39 : vector<8x128xf32>
      %42 = arith.divf %40, %41 : vector<8x128xf32>
      %43 = vector.extract_strided_slice %30 {offsets = [0, 256], sizes = [8, 128], strides = [1, 1]} : vector<8x512xf32> to vector<8x128xf32>
      %44 = math.tanh %43 : vector<8x128xf32>
      %45 = vector.extract_strided_slice %30 {offsets = [0, 384], sizes = [8, 128], strides = [1, 1]} : vector<8x512xf32> to vector<8x128xf32>
      %46 = arith.negf %45 : vector<8x128xf32>
      %47 = math.exp %46 : vector<8x128xf32>
      %cst_29 = arith.constant 1.000000e+00 : f32
      %48 = vector.broadcast %cst_29 : f32 to vector<8x128xf32>
      %49 = arith.addf %48, %47 : vector<8x128xf32>
      %50 = arith.divf %48, %49 : vector<8x128xf32>
      %51 = arith.mulf %42, %24 : vector<8x128xf32>
      %52 = arith.mulf %36, %44 : vector<8x128xf32>
      %53 = arith.addf %51, %52 : vector<8x128xf32>
      %54 = math.tanh %53 : vector<8x128xf32>
      %55 = arith.mulf %50, %54 : vector<8x128xf32>
      %56 = vector.broadcast %26 : i32 to vector<8x1xi32>
      %57 = arith.cmpi sgt, %15, %56 : vector<8x1xi32>
      %cst_30 = arith.constant 0.000000e+00 : f32
      %58 = vector.shape_cast %57 : vector<8x1xi1> to vector<8x1xi1>
      %59 = vector.broadcast %58 : vector<8x1xi1> to vector<8x128xi1>
      %60 = vector.broadcast %cst_30 : f32 to vector<8x128xf32>
      %61 = arith.select %59, %55, %60 : vector<8x128xi1>, vector<8x128xf32>
      %62 = arith.truncf %61 : vector<8x128xf32> to vector<8x128xbf16>
      %c0_31 = arith.constant 0 : index
      %c56_32 = arith.constant 56 : index
      %c0_33 = arith.constant 0 : index
      %63 = vector.load %arg7[%c0_31, %c56_32, %c0_33] : memref<1x64x128xbf16, #tpu.memory_space<vmem>>, vector<1x8x128xbf16>
      %64 = vector.shape_cast %63 : vector<1x8x128xbf16> to vector<8x128xbf16>
      %65 = vector.shape_cast %62 : vector<8x128xbf16> to vector<1x8x128xbf16>
      tpu.vector_store %arg7[%c0_31, %c56_32, %c0_33], %65 {strides = array<i32>} : memref<1x64x128xbf16, #tpu.memory_space<vmem>>, vector<1x8x128xbf16>,
      %66 = vector.shape_cast %57 : vector<8x1xi1> to vector<8x1xi1>
      %67 = vector.broadcast %66 : vector<8x1xi1> to vector<8x128xi1>
      %68 = arith.select %67, %55, %23 : vector<8x128xi1>, vector<8x128xf32>
      %69 = vector.shape_cast %57 : vector<8x1xi1> to vector<8x1xi1>
      %70 = vector.broadcast %69 : vector<8x1xi1> to vector<8x128xi1>
      %71 = arith.select %70, %53, %24 : vector<8x128xi1>, vector<8x128xf32>
      %c15_i32_34 = arith.constant 15 : i32
      %72 = arith.subi %c15_i32_34, %16 : i32
      %c1_i32_35 = arith.constant 1 : i32
      %73 = arith.subi %72, %c1_i32_35 : i32
      %c48 = arith.constant 48 : index
      %c0_36 = arith.constant 0 : index
      %74 = vector.load %arg8[%c48, %c0_36] : memref<64x512xf32, #tpu.memory_space<vmem>>, vector<8x512xf32>
      %75 = arith.truncf %68 : vector<8x128xf32> to vector<8x128xbf16>
      %cst_37 = arith.constant dense<0.000000e+00> : vector<8x512xf32>
      %76 = tpu.matmul %75, %14, %cst_37 {dimension_numbers = #tpu.dot_dimension_numbers<[1], [0], [0], [1], [0, 0, 1, 1], [], []>} : vector<8x128xbf16>, vector<128x512xbf16>, vector<8x512xf32> -> vector<8x512xf32>
      %77 = arith.addf %74, %76 : vector<8x512xf32>
      %78 = vector.extract_strided_slice %77 {offsets = [0, 0], sizes = [8, 128], strides = [1, 1]} : vector<8x512xf32> to vector<8x128xf32>
      %79 = arith.negf %78 : vector<8x128xf32>
      %80 = math.exp %79 : vector<8x128xf32>
      %cst_38 = arith.constant 1.000000e+00 : f32
      %81 = vector.broadcast %cst_38 : f32 to vector<8x128xf32>
      %82 = arith.addf %81, %80 : vector<8x128xf32>
      %83 = arith.divf %81, %82 : vector<8x128xf32>
      %84 = vector.extract_strided_slice %77 {offsets = [0, 128], sizes = [8, 128], strides = [1, 1]} : vector<8x512xf32> to vector<8x128xf32>
      %85 = arith.negf %84 : vector<8x128xf32>
      %86 = math.exp %85 : vector<8x128xf32>
      %cst_39 = arith.constant 1.000000e+00 : f32
      %87 = vector.broadcast %cst_39 : f32 to vector<8x128xf32>
      %88 = arith.addf %87, %86 : vector<8x128xf32>
      %89 = arith.divf %87, %88 : vector<8x128xf32>
      %90 = vector.extract_strided_slice %77 {offsets = [0, 256], sizes = [8, 128], strides = [1, 1]} : vector<8x512xf32> to vector<8x128xf32>
      %91 = math.tanh %90 : vector<8x128xf32>
      %92 = vector.extract_strided_slice %77 {offsets = [0, 384], sizes = [8, 128], strides = [1, 1]} : vector<8x512xf32> to vector<8x128xf32>
      %93 = arith.negf %92 : vector<8x128xf32>
      %94 = math.exp %93 : vector<8x128xf32>
      %cst_40 = arith.constant 1.000000e+00 : f32
      %95 = vector.broadcast %cst_40 : f32 to vector<8x128xf32>
      %96 = arith.addf %95, %94 : vector<8x128xf32>
      %97 = arith.divf %95, %96 : vector<8x128xf32>
      %98 = arith.mulf %89, %71 : vector<8x128xf32>
      %99 = arith.mulf %83, %91 : vector<8x128xf32>
      %100 = arith.addf %98, %99 : vector<8x128xf32>
      %101 = math.tanh %100 : vector<8x128xf32>
      %102 = arith.mulf %97, %101 : vector<8x128xf32>
      %103 = vector.broadcast %73 : i32 to vector<8x1xi32>
      %104 = arith.cmpi sgt, %15, %103 : vector<8x1xi32>
      %cst_41 = arith.constant 0.000000e+00 : f32
      %105 = vector.shape_cast %104 : vector<8x1xi1> to vector<8x1xi1>
      %106 = vector.broadcast %105 : vector<8x1xi1> to vector<8x128xi1>
      %107 = vector.broadcast %cst_41 : f32 to vector<8x128xf32>
      %108 = arith.select %106, %102, %107 : vector<8x128xi1>, vector<8x128xf32>
      %109 = arith.truncf %108 : vector<8x128xf32> to vector<8x128xbf16>
      %c0_42 = arith.constant 0 : index
      %c48_43 = arith.constant 48 : index
      %c0_44 = arith.constant 0 : index
      %110 = vector.load %arg7[%c0_42, %c48_43, %c0_44] : memref<1x64x128xbf16, #tpu.memory_space<vmem>>, vector<1x8x128xbf16>
      %111 = vector.shape_cast %110 : vector<1x8x128xbf16> to vector<8x128xbf16>
      %112 = vector.shape_cast %109 : vector<8x128xbf16> to vector<1x8x128xbf16>
      tpu.vector_store %arg7[%c0_42, %c48_43, %c0_44], %112 {strides = array<i32>} : memref<1x64x128xbf16, #tpu.memory_space<vmem>>, vector<1x8x128xbf16>,
      %113 = vector.shape_cast %104 : vector<8x1xi1> to vector<8x1xi1>
      %114 = vector.broadcast %113 : vector<8x1xi1> to vector<8x128xi1>
      %115 = arith.select %114, %102, %68 : vector<8x128xi1>, vector<8x128xf32>
      %116 = vector.shape_cast %104 : vector<8x1xi1> to vector<8x1xi1>
      %117 = vector.broadcast %116 : vector<8x1xi1> to vector<8x128xi1>
      %118 = arith.select %117, %100, %71 : vector<8x128xi1>, vector<8x128xf32>
      %c15_i32_45 = arith.constant 15 : i32
      %119 = arith.subi %c15_i32_45, %16 : i32
      %c2_i32 = arith.constant 2 : i32
      %120 = arith.subi %119, %c2_i32 : i32
      %c40 = arith.constant 40 : index
      %c0_46 = arith.constant 0 : index
      %121 = vector.load %arg8[%c40, %c0_46] : memref<64x512xf32, #tpu.memory_space<vmem>>, vector<8x512xf32>
      %122 = arith.truncf %115 : vector<8x128xf32> to vector<8x128xbf16>
      %cst_47 = arith.constant dense<0.000000e+00> : vector<8x512xf32>
      %123 = tpu.matmul %122, %14, %cst_47 {dimension_numbers = #tpu.dot_dimension_numbers<[1], [0], [0], [1], [0, 0, 1, 1], [], []>} : vector<8x128xbf16>, vector<128x512xbf16>, vector<8x512xf32> -> vector<8x512xf32>
      %124 = arith.addf %121, %123 : vector<8x512xf32>
      %125 = vector.extract_strided_slice %124 {offsets = [0, 0], sizes = [8, 128], strides = [1, 1]} : vector<8x512xf32> to vector<8x128xf32>
      %126 = arith.negf %125 : vector<8x128xf32>
      %127 = math.exp %126 : vector<8x128xf32>
      %cst_48 = arith.constant 1.000000e+00 : f32
      %128 = vector.broadcast %cst_48 : f32 to vector<8x128xf32>
      %129 = arith.addf %128, %127 : vector<8x128xf32>
      %130 = arith.divf %128, %129 : vector<8x128xf32>
      %131 = vector.extract_strided_slice %124 {offsets = [0, 128], sizes = [8, 128], strides = [1, 1]} : vector<8x512xf32> to vector<8x128xf32>
      %132 = arith.negf %131 : vector<8x128xf32>
      %133 = math.exp %132 : vector<8x128xf32>
      %cst_49 = arith.constant 1.000000e+00 : f32
      %134 = vector.broadcast %cst_49 : f32 to vector<8x128xf32>
      %135 = arith.addf %134, %133 : vector<8x128xf32>
      %136 = arith.divf %134, %135 : vector<8x128xf32>
      %137 = vector.extract_strided_slice %124 {offsets = [0, 256], sizes = [8, 128], strides = [1, 1]} : vector<8x512xf32> to vector<8x128xf32>
      %138 = math.tanh %137 : vector<8x128xf32>
      %139 = vector.extract_strided_slice %124 {offsets = [0, 384], sizes = [8, 128], strides = [1, 1]} : vector<8x512xf32> to vector<8x128xf32>
      %140 = arith.negf %139 : vector<8x128xf32>
      %141 = math.exp %140 : vector<8x128xf32>
      %cst_50 = arith.constant 1.000000e+00 : f32
      %142 = vector.broadcast %cst_50 : f32 to vector<8x128xf32>
      %143 = arith.addf %142, %141 : vector<8x128xf32>
      %144 = arith.divf %142, %143 : vector<8x128xf32>
      %145 = arith.mulf %136, %118 : vector<8x128xf32>
      %146 = arith.mulf %130, %138 : vector<8x128xf32>
      %147 = arith.addf %145, %146 : vector<8x128xf32>
      %148 = math.tanh %147 : vector<8x128xf32>
      %149 = arith.mulf %144, %148 : vector<8x128xf32>
      %150 = vector.broadcast %120 : i32 to vector<8x1xi32>
      %151 = arith.cmpi sgt, %15, %150 : vector<8x1xi32>
      %cst_51 = arith.constant 0.000000e+00 : f32
      %152 = vector.shape_cast %151 : vector<8x1xi1> to vector<8x1xi1>
      %153 = vector.broadcast %152 : vector<8x1xi1> to vector<8x128xi1>
      %154 = vector.broadcast %cst_51 : f32 to vector<8x128xf32>
      %155 = arith.select %153, %149, %154 : vector<8x128xi1>, vector<8x128xf32>
      %156 = arith.truncf %155 : vector<8x128xf32> to vector<8x128xbf16>
      %c0_52 = arith.constant 0 : index
      %c40_53 = arith.constant 40 : index
      %c0_54 = arith.constant 0 : index
      %157 = vector.load %arg7[%c0_52, %c40_53, %c0_54] : memref<1x64x128xbf16, #tpu.memory_space<vmem>>, vector<1x8x128xbf16>
      %158 = vector.shape_cast %157 : vector<1x8x128xbf16> to vector<8x128xbf16>
      %159 = vector.shape_cast %156 : vector<8x128xbf16> to vector<1x8x128xbf16>
      tpu.vector_store %arg7[%c0_52, %c40_53, %c0_54], %159 {strides = array<i32>} : memref<1x64x128xbf16, #tpu.memory_space<vmem>>, vector<1x8x128xbf16>,
      %160 = vector.shape_cast %151 : vector<8x1xi1> to vector<8x1xi1>
      %161 = vector.broadcast %160 : vector<8x1xi1> to vector<8x128xi1>
      %162 = arith.select %161, %149, %115 : vector<8x128xi1>, vector<8x128xf32>
      %163 = vector.shape_cast %151 : vector<8x1xi1> to vector<8x1xi1>
      %164 = vector.broadcast %163 : vector<8x1xi1> to vector<8x128xi1>
      %165 = arith.select %164, %147, %118 : vector<8x128xi1>, vector<8x128xf32>
      %c15_i32_55 = arith.constant 15 : i32
      %166 = arith.subi %c15_i32_55, %16 : i32
      %c3_i32 = arith.constant 3 : i32
      %167 = arith.subi %166, %c3_i32 : i32
      %c32 = arith.constant 32 : index
      %c0_56 = arith.constant 0 : index
      %168 = vector.load %arg8[%c32, %c0_56] : memref<64x512xf32, #tpu.memory_space<vmem>>, vector<8x512xf32>
      %169 = arith.truncf %162 : vector<8x128xf32> to vector<8x128xbf16>
      %cst_57 = arith.constant dense<0.000000e+00> : vector<8x512xf32>
      %170 = tpu.matmul %169, %14, %cst_57 {dimension_numbers = #tpu.dot_dimension_numbers<[1], [0], [0], [1], [0, 0, 1, 1], [], []>} : vector<8x128xbf16>, vector<128x512xbf16>, vector<8x512xf32> -> vector<8x512xf32>
      %171 = arith.addf %168, %170 : vector<8x512xf32>
      %172 = vector.extract_strided_slice %171 {offsets = [0, 0], sizes = [8, 128], strides = [1, 1]} : vector<8x512xf32> to vector<8x128xf32>
      %173 = arith.negf %172 : vector<8x128xf32>
      %174 = math.exp %173 : vector<8x128xf32>
      %cst_58 = arith.constant 1.000000e+00 : f32
      %175 = vector.broadcast %cst_58 : f32 to vector<8x128xf32>
      %176 = arith.addf %175, %174 : vector<8x128xf32>
      %177 = arith.divf %175, %176 : vector<8x128xf32>
      %178 = vector.extract_strided_slice %171 {offsets = [0, 128], sizes = [8, 128], strides = [1, 1]} : vector<8x512xf32> to vector<8x128xf32>
      %179 = arith.negf %178 : vector<8x128xf32>
      %180 = math.exp %179 : vector<8x128xf32>
      %cst_59 = arith.constant 1.000000e+00 : f32
      %181 = vector.broadcast %cst_59 : f32 to vector<8x128xf32>
      %182 = arith.addf %181, %180 : vector<8x128xf32>
      %183 = arith.divf %181, %182 : vector<8x128xf32>
      %184 = vector.extract_strided_slice %171 {offsets = [0, 256], sizes = [8, 128], strides = [1, 1]} : vector<8x512xf32> to vector<8x128xf32>
      %185 = math.tanh %184 : vector<8x128xf32>
      %186 = vector.extract_strided_slice %171 {offsets = [0, 384], sizes = [8, 128], strides = [1, 1]} : vector<8x512xf32> to vector<8x128xf32>
      %187 = arith.negf %186 : vector<8x128xf32>
      %188 = math.exp %187 : vector<8x128xf32>
      %cst_60 = arith.constant 1.000000e+00 : f32
      %189 = vector.broadcast %cst_60 : f32 to vector<8x128xf32>
      %190 = arith.addf %189, %188 : vector<8x128xf32>
      %191 = arith.divf %189, %190 : vector<8x128xf32>
      %192 = arith.mulf %183, %165 : vector<8x128xf32>
      %193 = arith.mulf %177, %185 : vector<8x128xf32>
      %194 = arith.addf %192, %193 : vector<8x128xf32>
      %195 = math.tanh %194 : vector<8x128xf32>
      %196 = arith.mulf %191, %195 : vector<8x128xf32>
      %197 = vector.broadcast %167 : i32 to vector<8x1xi32>
      %198 = arith.cmpi sgt, %15, %197 : vector<8x1xi32>
      %cst_61 = arith.constant 0.000000e+00 : f32
      %199 = vector.shape_cast %198 : vector<8x1xi1> to vector<8x1xi1>
      %200 = vector.broadcast %199 : vector<8x1xi1> to vector<8x128xi1>
      %201 = vector.broadcast %cst_61 : f32 to vector<8x128xf32>
      %202 = arith.select %200, %196, %201 : vector<8x128xi1>, vector<8x128xf32>
      %203 = arith.truncf %202 : vector<8x128xf32> to vector<8x128xbf16>
      %c0_62 = arith.constant 0 : index
      %c32_63 = arith.constant 32 : index
      %c0_64 = arith.constant 0 : index
      %204 = vector.load %arg7[%c0_62, %c32_63, %c0_64] : memref<1x64x128xbf16, #tpu.memory_space<vmem>>, vector<1x8x128xbf16>
      %205 = vector.shape_cast %204 : vector<1x8x128xbf16> to vector<8x128xbf16>
      %206 = vector.shape_cast %203 : vector<8x128xbf16> to vector<1x8x128xbf16>
      tpu.vector_store %arg7[%c0_62, %c32_63, %c0_64], %206 {strides = array<i32>} : memref<1x64x128xbf16, #tpu.memory_space<vmem>>, vector<1x8x128xbf16>,
      %207 = vector.shape_cast %198 : vector<8x1xi1> to vector<8x1xi1>
      %208 = vector.broadcast %207 : vector<8x1xi1> to vector<8x128xi1>
      %209 = arith.select %208, %196, %162 : vector<8x128xi1>, vector<8x128xf32>
      %210 = vector.shape_cast %198 : vector<8x1xi1> to vector<8x1xi1>
      %211 = vector.broadcast %210 : vector<8x1xi1> to vector<8x128xi1>
      %212 = arith.select %211, %194, %165 : vector<8x128xi1>, vector<8x128xf32>
      %c15_i32_65 = arith.constant 15 : i32
      %213 = arith.subi %c15_i32_65, %16 : i32
      %c4_i32 = arith.constant 4 : i32
      %214 = arith.subi %213, %c4_i32 : i32
      %c24 = arith.constant 24 : index
      %c0_66 = arith.constant 0 : index
      %215 = vector.load %arg8[%c24, %c0_66] : memref<64x512xf32, #tpu.memory_space<vmem>>, vector<8x512xf32>
      %216 = arith.truncf %209 : vector<8x128xf32> to vector<8x128xbf16>
      %cst_67 = arith.constant dense<0.000000e+00> : vector<8x512xf32>
      %217 = tpu.matmul %216, %14, %cst_67 {dimension_numbers = #tpu.dot_dimension_numbers<[1], [0], [0], [1], [0, 0, 1, 1], [], []>} : vector<8x128xbf16>, vector<128x512xbf16>, vector<8x512xf32> -> vector<8x512xf32>
      %218 = arith.addf %215, %217 : vector<8x512xf32>
      %219 = vector.extract_strided_slice %218 {offsets = [0, 0], sizes = [8, 128], strides = [1, 1]} : vector<8x512xf32> to vector<8x128xf32>
      %220 = arith.negf %219 : vector<8x128xf32>
      %221 = math.exp %220 : vector<8x128xf32>
      %cst_68 = arith.constant 1.000000e+00 : f32
      %222 = vector.broadcast %cst_68 : f32 to vector<8x128xf32>
      %223 = arith.addf %222, %221 : vector<8x128xf32>
      %224 = arith.divf %222, %223 : vector<8x128xf32>
      %225 = vector.extract_strided_slice %218 {offsets = [0, 128], sizes = [8, 128], strides = [1, 1]} : vector<8x512xf32> to vector<8x128xf32>
      %226 = arith.negf %225 : vector<8x128xf32>
      %227 = math.exp %226 : vector<8x128xf32>
      %cst_69 = arith.constant 1.000000e+00 : f32
      %228 = vector.broadcast %cst_69 : f32 to vector<8x128xf32>
      %229 = arith.addf %228, %227 : vector<8x128xf32>
      %230 = arith.divf %228, %229 : vector<8x128xf32>
      %231 = vector.extract_strided_slice %218 {offsets = [0, 256], sizes = [8, 128], strides = [1, 1]} : vector<8x512xf32> to vector<8x128xf32>
      %232 = math.tanh %231 : vector<8x128xf32>
      %233 = vector.extract_strided_slice %218 {offsets = [0, 384], sizes = [8, 128], strides = [1, 1]} : vector<8x512xf32> to vector<8x128xf32>
      %234 = arith.negf %233 : vector<8x128xf32>
      %235 = math.exp %234 : vector<8x128xf32>
      %cst_70 = arith.constant 1.000000e+00 : f32
      %236 = vector.broadcast %cst_70 : f32 to vector<8x128xf32>
      %237 = arith.addf %236, %235 : vector<8x128xf32>
      %238 = arith.divf %236, %237 : vector<8x128xf32>
      %239 = arith.mulf %230, %212 : vector<8x128xf32>
      %240 = arith.mulf %224, %232 : vector<8x128xf32>
      %241 = arith.addf %239, %240 : vector<8x128xf32>
      %242 = math.tanh %241 : vector<8x128xf32>
      %243 = arith.mulf %238, %242 : vector<8x128xf32>
      %244 = vector.broadcast %214 : i32 to vector<8x1xi32>
      %245 = arith.cmpi sgt, %15, %244 : vector<8x1xi32>
      %cst_71 = arith.constant 0.000000e+00 : f32
      %246 = vector.shape_cast %245 : vector<8x1xi1> to vector<8x1xi1>
      %247 = vector.broadcast %246 : vector<8x1xi1> to vector<8x128xi1>
      %248 = vector.broadcast %cst_71 : f32 to vector<8x128xf32>
      %249 = arith.select %247, %243, %248 : vector<8x128xi1>, vector<8x128xf32>
      %250 = arith.truncf %249 : vector<8x128xf32> to vector<8x128xbf16>
      %c0_72 = arith.constant 0 : index
      %c24_73 = arith.constant 24 : index
      %c0_74 = arith.constant 0 : index
      %251 = vector.load %arg7[%c0_72, %c24_73, %c0_74] : memref<1x64x128xbf16, #tpu.memory_space<vmem>>, vector<1x8x128xbf16>
      %252 = vector.shape_cast %251 : vector<1x8x128xbf16> to vector<8x128xbf16>
      %253 = vector.shape_cast %250 : vector<8x128xbf16> to vector<1x8x128xbf16>
      tpu.vector_store %arg7[%c0_72, %c24_73, %c0_74], %253 {strides = array<i32>} : memref<1x64x128xbf16, #tpu.memory_space<vmem>>, vector<1x8x128xbf16>,
      %254 = vector.shape_cast %245 : vector<8x1xi1> to vector<8x1xi1>
      %255 = vector.broadcast %254 : vector<8x1xi1> to vector<8x128xi1>
      %256 = arith.select %255, %243, %209 : vector<8x128xi1>, vector<8x128xf32>
      %257 = vector.shape_cast %245 : vector<8x1xi1> to vector<8x1xi1>
      %258 = vector.broadcast %257 : vector<8x1xi1> to vector<8x128xi1>
      %259 = arith.select %258, %241, %212 : vector<8x128xi1>, vector<8x128xf32>
      %c15_i32_75 = arith.constant 15 : i32
      %260 = arith.subi %c15_i32_75, %16 : i32
      %c5_i32 = arith.constant 5 : i32
      %261 = arith.subi %260, %c5_i32 : i32
      %c16 = arith.constant 16 : index
      %c0_76 = arith.constant 0 : index
      %262 = vector.load %arg8[%c16, %c0_76] : memref<64x512xf32, #tpu.memory_space<vmem>>, vector<8x512xf32>
      %263 = arith.truncf %256 : vector<8x128xf32> to vector<8x128xbf16>
      %cst_77 = arith.constant dense<0.000000e+00> : vector<8x512xf32>
      %264 = tpu.matmul %263, %14, %cst_77 {dimension_numbers = #tpu.dot_dimension_numbers<[1], [0], [0], [1], [0, 0, 1, 1], [], []>} : vector<8x128xbf16>, vector<128x512xbf16>, vector<8x512xf32> -> vector<8x512xf32>
      %265 = arith.addf %262, %264 : vector<8x512xf32>
      %266 = vector.extract_strided_slice %265 {offsets = [0, 0], sizes = [8, 128], strides = [1, 1]} : vector<8x512xf32> to vector<8x128xf32>
      %267 = arith.negf %266 : vector<8x128xf32>
      %268 = math.exp %267 : vector<8x128xf32>
      %cst_78 = arith.constant 1.000000e+00 : f32
      %269 = vector.broadcast %cst_78 : f32 to vector<8x128xf32>
      %270 = arith.addf %269, %268 : vector<8x128xf32>
      %271 = arith.divf %269, %270 : vector<8x128xf32>
      %272 = vector.extract_strided_slice %265 {offsets = [0, 128], sizes = [8, 128], strides = [1, 1]} : vector<8x512xf32> to vector<8x128xf32>
      %273 = arith.negf %272 : vector<8x128xf32>
      %274 = math.exp %273 : vector<8x128xf32>
      %cst_79 = arith.constant 1.000000e+00 : f32
      %275 = vector.broadcast %cst_79 : f32 to vector<8x128xf32>
      %276 = arith.addf %275, %274 : vector<8x128xf32>
      %277 = arith.divf %275, %276 : vector<8x128xf32>
      %278 = vector.extract_strided_slice %265 {offsets = [0, 256], sizes = [8, 128], strides = [1, 1]} : vector<8x512xf32> to vector<8x128xf32>
      %279 = math.tanh %278 : vector<8x128xf32>
      %280 = vector.extract_strided_slice %265 {offsets = [0, 384], sizes = [8, 128], strides = [1, 1]} : vector<8x512xf32> to vector<8x128xf32>
      %281 = arith.negf %280 : vector<8x128xf32>
      %282 = math.exp %281 : vector<8x128xf32>
      %cst_80 = arith.constant 1.000000e+00 : f32
      %283 = vector.broadcast %cst_80 : f32 to vector<8x128xf32>
      %284 = arith.addf %283, %282 : vector<8x128xf32>
      %285 = arith.divf %283, %284 : vector<8x128xf32>
      %286 = arith.mulf %277, %259 : vector<8x128xf32>
      %287 = arith.mulf %271, %279 : vector<8x128xf32>
      %288 = arith.addf %286, %287 : vector<8x128xf32>
      %289 = math.tanh %288 : vector<8x128xf32>
      %290 = arith.mulf %285, %289 : vector<8x128xf32>
      %291 = vector.broadcast %261 : i32 to vector<8x1xi32>
      %292 = arith.cmpi sgt, %15, %291 : vector<8x1xi32>
      %cst_81 = arith.constant 0.000000e+00 : f32
      %293 = vector.shape_cast %292 : vector<8x1xi1> to vector<8x1xi1>
      %294 = vector.broadcast %293 : vector<8x1xi1> to vector<8x128xi1>
      %295 = vector.broadcast %cst_81 : f32 to vector<8x128xf32>
      %296 = arith.select %294, %290, %295 : vector<8x128xi1>, vector<8x128xf32>
      %297 = arith.truncf %296 : vector<8x128xf32> to vector<8x128xbf16>
      %c0_82 = arith.constant 0 : index
      %c16_83 = arith.constant 16 : index
      %c0_84 = arith.constant 0 : index
      %298 = vector.load %arg7[%c0_82, %c16_83, %c0_84] : memref<1x64x128xbf16, #tpu.memory_space<vmem>>, vector<1x8x128xbf16>
      %299 = vector.shape_cast %298 : vector<1x8x128xbf16> to vector<8x128xbf16>
      %300 = vector.shape_cast %297 : vector<8x128xbf16> to vector<1x8x128xbf16>
      tpu.vector_store %arg7[%c0_82, %c16_83, %c0_84], %300 {strides = array<i32>} : memref<1x64x128xbf16, #tpu.memory_space<vmem>>, vector<1x8x128xbf16>,
      %301 = vector.shape_cast %292 : vector<8x1xi1> to vector<8x1xi1>
      %302 = vector.broadcast %301 : vector<8x1xi1> to vector<8x128xi1>
      %303 = arith.select %302, %290, %256 : vector<8x128xi1>, vector<8x128xf32>
      %304 = vector.shape_cast %292 : vector<8x1xi1> to vector<8x1xi1>
      %305 = vector.broadcast %304 : vector<8x1xi1> to vector<8x128xi1>
      %306 = arith.select %305, %288, %259 : vector<8x128xi1>, vector<8x128xf32>
      %c15_i32_85 = arith.constant 15 : i32
      %307 = arith.subi %c15_i32_85, %16 : i32
      %c6_i32 = arith.constant 6 : i32
      %308 = arith.subi %307, %c6_i32 : i32
      %c8 = arith.constant 8 : index
      %c0_86 = arith.constant 0 : index
      %309 = vector.load %arg8[%c8, %c0_86] : memref<64x512xf32, #tpu.memory_space<vmem>>, vector<8x512xf32>
      %310 = arith.truncf %303 : vector<8x128xf32> to vector<8x128xbf16>
      %cst_87 = arith.constant dense<0.000000e+00> : vector<8x512xf32>
      %311 = tpu.matmul %310, %14, %cst_87 {dimension_numbers = #tpu.dot_dimension_numbers<[1], [0], [0], [1], [0, 0, 1, 1], [], []>} : vector<8x128xbf16>, vector<128x512xbf16>, vector<8x512xf32> -> vector<8x512xf32>
      %312 = arith.addf %309, %311 : vector<8x512xf32>
      %313 = vector.extract_strided_slice %312 {offsets = [0, 0], sizes = [8, 128], strides = [1, 1]} : vector<8x512xf32> to vector<8x128xf32>
      %314 = arith.negf %313 : vector<8x128xf32>
      %315 = math.exp %314 : vector<8x128xf32>
      %cst_88 = arith.constant 1.000000e+00 : f32
      %316 = vector.broadcast %cst_88 : f32 to vector<8x128xf32>
      %317 = arith.addf %316, %315 : vector<8x128xf32>
      %318 = arith.divf %316, %317 : vector<8x128xf32>
      %319 = vector.extract_strided_slice %312 {offsets = [0, 128], sizes = [8, 128], strides = [1, 1]} : vector<8x512xf32> to vector<8x128xf32>
      %320 = arith.negf %319 : vector<8x128xf32>
      %321 = math.exp %320 : vector<8x128xf32>
      %cst_89 = arith.constant 1.000000e+00 : f32
      %322 = vector.broadcast %cst_89 : f32 to vector<8x128xf32>
      %323 = arith.addf %322, %321 : vector<8x128xf32>
      %324 = arith.divf %322, %323 : vector<8x128xf32>
      %325 = vector.extract_strided_slice %312 {offsets = [0, 256], sizes = [8, 128], strides = [1, 1]} : vector<8x512xf32> to vector<8x128xf32>
      %326 = math.tanh %325 : vector<8x128xf32>
      %327 = vector.extract_strided_slice %312 {offsets = [0, 384], sizes = [8, 128], strides = [1, 1]} : vector<8x512xf32> to vector<8x128xf32>
      %328 = arith.negf %327 : vector<8x128xf32>
      %329 = math.exp %328 : vector<8x128xf32>
      %cst_90 = arith.constant 1.000000e+00 : f32
      %330 = vector.broadcast %cst_90 : f32 to vector<8x128xf32>
      %331 = arith.addf %330, %329 : vector<8x128xf32>
      %332 = arith.divf %330, %331 : vector<8x128xf32>
      %333 = arith.mulf %324, %306 : vector<8x128xf32>
      %334 = arith.mulf %318, %326 : vector<8x128xf32>
      %335 = arith.addf %333, %334 : vector<8x128xf32>
      %336 = math.tanh %335 : vector<8x128xf32>
      %337 = arith.mulf %332, %336 : vector<8x128xf32>
      %338 = vector.broadcast %308 : i32 to vector<8x1xi32>
      %339 = arith.cmpi sgt, %15, %338 : vector<8x1xi32>
      %cst_91 = arith.constant 0.000000e+00 : f32
      %340 = vector.shape_cast %339 : vector<8x1xi1> to vector<8x1xi1>
      %341 = vector.broadcast %340 : vector<8x1xi1> to vector<8x128xi1>
      %342 = vector.broadcast %cst_91 : f32 to vector<8x128xf32>
      %343 = arith.select %341, %337, %342 : vector<8x128xi1>, vector<8x128xf32>
      %344 = arith.truncf %343 : vector<8x128xf32> to vector<8x128xbf16>
      %c0_92 = arith.constant 0 : index
      %c8_93 = arith.constant 8 : index
      %c0_94 = arith.constant 0 : index
      %345 = vector.load %arg7[%c0_92, %c8_93, %c0_94] : memref<1x64x128xbf16, #tpu.memory_space<vmem>>, vector<1x8x128xbf16>
      %346 = vector.shape_cast %345 : vector<1x8x128xbf16> to vector<8x128xbf16>
      %347 = vector.shape_cast %344 : vector<8x128xbf16> to vector<1x8x128xbf16>
      tpu.vector_store %arg7[%c0_92, %c8_93, %c0_94], %347 {strides = array<i32>} : memref<1x64x128xbf16, #tpu.memory_space<vmem>>, vector<1x8x128xbf16>,
      %348 = vector.shape_cast %339 : vector<8x1xi1> to vector<8x1xi1>
      %349 = vector.broadcast %348 : vector<8x1xi1> to vector<8x128xi1>
      %350 = arith.select %349, %337, %303 : vector<8x128xi1>, vector<8x128xf32>
      %351 = vector.shape_cast %339 : vector<8x1xi1> to vector<8x1xi1>
      %352 = vector.broadcast %351 : vector<8x1xi1> to vector<8x128xi1>
      %353 = arith.select %352, %335, %306 : vector<8x128xi1>, vector<8x128xf32>
      %c15_i32_95 = arith.constant 15 : i32
      %354 = arith.subi %c15_i32_95, %16 : i32
      %c7_i32 = arith.constant 7 : i32
      %355 = arith.subi %354, %c7_i32 : i32
      %c0_96 = arith.constant 0 : index
      %c0_97 = arith.constant 0 : index
      %356 = vector.load %arg8[%c0_96, %c0_97] : memref<64x512xf32, #tpu.memory_space<vmem>>, vector<8x512xf32>
      %357 = arith.truncf %350 : vector<8x128xf32> to vector<8x128xbf16>
      %cst_98 = arith.constant dense<0.000000e+00> : vector<8x512xf32>
      %358 = tpu.matmul %357, %14, %cst_98 {dimension_numbers = #tpu.dot_dimension_numbers<[1], [0], [0], [1], [0, 0, 1, 1], [], []>} : vector<8x128xbf16>, vector<128x512xbf16>, vector<8x512xf32> -> vector<8x512xf32>
      %359 = arith.addf %356, %358 : vector<8x512xf32>
      %360 = vector.extract_strided_slice %359 {offsets = [0, 0], sizes = [8, 128], strides = [1, 1]} : vector<8x512xf32> to vector<8x128xf32>
      %361 = arith.negf %360 : vector<8x128xf32>
      %362 = math.exp %361 : vector<8x128xf32>
      %cst_99 = arith.constant 1.000000e+00 : f32
      %363 = vector.broadcast %cst_99 : f32 to vector<8x128xf32>
      %364 = arith.addf %363, %362 : vector<8x128xf32>
      %365 = arith.divf %363, %364 : vector<8x128xf32>
      %366 = vector.extract_strided_slice %359 {offsets = [0, 128], sizes = [8, 128], strides = [1, 1]} : vector<8x512xf32> to vector<8x128xf32>
      %367 = arith.negf %366 : vector<8x128xf32>
      %368 = math.exp %367 : vector<8x128xf32>
      %cst_100 = arith.constant 1.000000e+00 : f32
      %369 = vector.broadcast %cst_100 : f32 to vector<8x128xf32>
      %370 = arith.addf %369, %368 : vector<8x128xf32>
      %371 = arith.divf %369, %370 : vector<8x128xf32>
      %372 = vector.extract_strided_slice %359 {offsets = [0, 256], sizes = [8, 128], strides = [1, 1]} : vector<8x512xf32> to vector<8x128xf32>
      %373 = math.tanh %372 : vector<8x128xf32>
      %374 = vector.extract_strided_slice %359 {offsets = [0, 384], sizes = [8, 128], strides = [1, 1]} : vector<8x512xf32> to vector<8x128xf32>
      %375 = arith.negf %374 : vector<8x128xf32>
      %376 = math.exp %375 : vector<8x128xf32>
      %cst_101 = arith.constant 1.000000e+00 : f32
      %377 = vector.broadcast %cst_101 : f32 to vector<8x128xf32>
      %378 = arith.addf %377, %376 : vector<8x128xf32>
      %379 = arith.divf %377, %378 : vector<8x128xf32>
      %380 = arith.mulf %371, %353 : vector<8x128xf32>
      %381 = arith.mulf %365, %373 : vector<8x128xf32>
      %382 = arith.addf %380, %381 : vector<8x128xf32>
      %383 = math.tanh %382 : vector<8x128xf32>
      %384 = arith.mulf %379, %383 : vector<8x128xf32>
      %385 = vector.broadcast %355 : i32 to vector<8x1xi32>
      %386 = arith.cmpi sgt, %15, %385 : vector<8x1xi32>
      %cst_102 = arith.constant 0.000000e+00 : f32
      %387 = vector.shape_cast %386 : vector<8x1xi1> to vector<8x1xi1>
      %388 = vector.broadcast %387 : vector<8x1xi1> to vector<8x128xi1>
      %389 = vector.broadcast %cst_102 : f32 to vector<8x128xf32>
      %390 = arith.select %388, %384, %389 : vector<8x128xi1>, vector<8x128xf32>
      %391 = arith.truncf %390 : vector<8x128xf32> to vector<8x128xbf16>
      %c0_103 = arith.constant 0 : index
      %c0_104 = arith.constant 0 : index
      %c0_105 = arith.constant 0 : index
      %392 = vector.load %arg7[%c0_103, %c0_104, %c0_105] : memref<1x64x128xbf16, #tpu.memory_space<vmem>>, vector<1x8x128xbf16>
      %393 = vector.shape_cast %392 : vector<1x8x128xbf16> to vector<8x128xbf16>
      %394 = vector.shape_cast %391 : vector<8x128xbf16> to vector<1x8x128xbf16>
      tpu.vector_store %arg7[%c0_103, %c0_104, %c0_105], %394 {strides = array<i32>} : memref<1x64x128xbf16, #tpu.memory_space<vmem>>, vector<1x8x128xbf16>,
      %395 = vector.shape_cast %386 : vector<8x1xi1> to vector<8x1xi1>
      %396 = vector.broadcast %395 : vector<8x1xi1> to vector<8x128xi1>
      %397 = arith.select %396, %384, %350 : vector<8x128xi1>, vector<8x128xf32>
      %398 = vector.shape_cast %386 : vector<8x1xi1> to vector<8x1xi1>
      %399 = vector.broadcast %398 : vector<8x1xi1> to vector<8x128xi1>
      %400 = arith.select %399, %382, %353 : vector<8x128xi1>, vector<8x128xf32>
      %c0_106 = arith.constant 0 : index
      %c0_107 = arith.constant 0 : index
      %401 = vector.load %arg9[%c0_106, %c0_107] : memref<8x128xf32, #tpu.memory_space<vmem>>, vector<8x128xf32>
      tpu.vector_store %arg9[%c0_106, %c0_107], %397 {strides = array<i32>} : memref<8x128xf32, #tpu.memory_space<vmem>>, vector<8x128xf32>,
      %c0_108 = arith.constant 0 : index
      %c0_109 = arith.constant 0 : index
      %402 = vector.load %arg10[%c0_108, %c0_109] : memref<8x128xf32, #tpu.memory_space<vmem>>, vector<8x128xf32>
      tpu.vector_store %arg10[%c0_108, %c0_109], %400 {strides = array<i32>} : memref<8x128xf32, #tpu.memory_space<vmem>>, vector<8x128xf32>,
    } else {
    }
    return
  }
  func.func @transform_0(%arg0: i32, %arg1: i32) -> (i32, i32, i32) {
    %c1_i32 = arith.constant 1 : i32
    %0 = arith.subi %c1_i32, %arg0 : i32
    %1 = arith.muli %0, %arg1 : i32
    %c1_i32_0 = arith.constant 1 : i32
    %2 = arith.subi %c1_i32_0, %arg1 : i32
    %3 = arith.muli %arg0, %2 : i32
    %4 = arith.addi %1, %3 : i32
    %c0_i32 = arith.constant 0 : i32
    %c0_i32_1 = arith.constant 0 : i32
    %c0_i32_2 = arith.constant 0 : i32
    return %c0_i32, %4, %c0_i32_1 : i32, i32, i32
  }
  func.func @transform_1(%arg0: i32, %arg1: i32) -> (i32, i32, i32, i32) {
    %c0_i32 = arith.constant 0 : i32
    %c0_i32_0 = arith.constant 0 : i32
    %c0_i32_1 = arith.constant 0 : i32
    %c0_i32_2 = arith.constant 0 : i32
    return %arg0, %c0_i32, %c0_i32_0, %c0_i32_1 : i32, i32, i32, i32
  }
  func.func @transform_2(%arg0: i32, %arg1: i32) -> (i32, i32, i32) {
    %c0_i32 = arith.constant 0 : i32
    %c0_i32_0 = arith.constant 0 : i32
    %c0_i32_1 = arith.constant 0 : i32
    return %arg0, %c0_i32, %c0_i32_0 : i32, i32, i32
  }
  func.func @transform_3(%arg0: i32, %arg1: i32) -> (i32, i32, i32) {
    %c0_i32 = arith.constant 0 : i32
    %c0_i32_0 = arith.constant 0 : i32
    %c0_i32_1 = arith.constant 0 : i32
    return %arg0, %c0_i32, %c0_i32_0 : i32, i32, i32
  }
  func.func @transform_4(%arg0: i32, %arg1: i32) -> (i32, i32) {
    %c0_i32 = arith.constant 0 : i32
    %c0_i32_0 = arith.constant 0 : i32
    %c0_i32_1 = arith.constant 0 : i32
    return %c0_i32, %c0_i32_0 : i32, i32
  }
  func.func @transform_5(%arg0: i32, %arg1: i32) -> (i32, i32, i32) {
    %c1_i32 = arith.constant 1 : i32
    %0 = arith.subi %c1_i32, %arg0 : i32
    %1 = arith.muli %0, %arg1 : i32
    %c1_i32_0 = arith.constant 1 : i32
    %2 = arith.subi %c1_i32_0, %arg1 : i32
    %3 = arith.muli %arg0, %2 : i32
    %4 = arith.addi %1, %3 : i32
    %c0_i32 = arith.constant 0 : i32
    %c0_i32_1 = arith.constant 0 : i32
    return %arg0, %4, %c0_i32 : i32, i32, i32
  }
}

</mosaic_0001>

<llo_original>
// kernel: tpu_custom_call.1
$region0: #{tpu_custom_call.1}
  #allocation0 [shape = 'u32[]', space=smem, size = 0x4, offset = 0x4, fixed_abs, tag = 'smem constant byte address 0x4 - core index']
  #allocation1 [shape = 'u32[144,128]{1,0:T(1,128)}', space=vmem, size = 0x12000, scoped, tag = 'internal scratch']
  #allocation2 [shape = 'f32[64,512]{1,0:T(8,128)}', space=vmem, size = 0x20000, scoped, tag = 'scratch operand']
  #allocation3 [shape = 'f32[8,128]{1,0:T(8,128)}', space=vmem, size = 0x1000, scoped, tag = 'scratch operand']
  #allocation4 [shape = 'f32[8,128]{1,0:T(8,128)}', space=vmem, size = 0x1000, scoped, tag = 'scratch operand']
  %s0 = inlined_call_operand.hbm [shape: bf16[1,128,128], index: 0, kind: input, shape index: {}]
  %s1 = inlined_call_operand.hbm [shape: bf16[2,1,128,512], index: 1, kind: input, shape index: {}]
  %s2 = inlined_call_operand.vmem [shape: f32[2,1,512], index: 2, kind: input, shape index: {}]
  %s3 = inlined_call_operand.hbm [shape: bf16[2,128,512], index: 3, kind: input, shape index: {}]
  %s4 = inlined_call_operand.vmem [shape: s32[8,1], index: 4, kind: input, shape index: {}]
  %s5 = inlined_call_operand.hbm [shape: bf16[2,128,128], index: 5, kind: output, shape index: {}]
  %s6 = sld [smem:[#allocation0]]
  $region77: #{tpu_custom_call.1} parent=0
    _
  %s8 = ssub.s32 1, %s6
  %s9 = scalar_select 0, %s8, %s6
  $region1: #{tpu_custom_call.1} parent=0
    #allocation5 [shape = 'u8[32768]{0}', space=vmem, size = 0x8000, scoped, tag = 'input window, operand 0']
    #allocation6 [shape = 's32[2]{0}', space=sflag, size = 0x8, scoped, tag = 'scoped memory for tpu_custom_call.1']
    #allocation7 [shape = 's32[2]{0}', space=sflag, size = 0x8, scoped, tag = 'scoped memory for tpu_custom_call.1']
    #allocation8 [shape = 'u8[262144]{0}', space=vmem, size = 0x40000, scoped, tag = 'input window, operand 1']
    #allocation9 [shape = 's32[2]{0}', space=sflag, size = 0x8, scoped, tag = 'scoped memory for tpu_custom_call.1']
    #allocation10 [shape = 'u8[262144]{0}', space=vmem, size = 0x40000, scoped, tag = 'input window, operand 3']
    #allocation11 [shape = 'u8[32768]{0}', space=vmem, size = 0x8000, scoped, tag = 'output window, operand 0']
    %10 = vsyncpa [#allocation6], 0
    %s11 = scalar_lea.sflag [#allocation6], 1
    %12 = vsyncpa %s11, 0
    %13 = vsyncpa [#allocation9], 0
    %s14 = scalar_lea.sflag [#allocation9], 1
    %15 = vsyncpa %s14, 0
    %16 = vsyncpa [#allocation7], 0
    %s17 = scalar_lea.sflag [#allocation7], 1
    %18 = vsyncpa %s17, 0
    loop: start=0, step=1, limit=6
    $region2: #{tpu_custom_call.1} parent=1 // loop_pre_header
      _
    $region3: #{tpu_custom_call.1} parent=1 // loop_header
      %s20 = sphi 0, %s24
      %p21 = scmp.ge.s32.totalorder %s20, 6
      %s27 = sphi 0, %s39
      %s28 = sphi 0, %s35
      %s29 = sphi 0, %s27
      %s30 = sphi 0, %s28
      %s31 = sphi 0, %s29
      %s32 = sphi 0, %s30
      %s52 = sphi 0, %s54
      %s55 = sphi 0, %s52
      %s56 = sphi 0, %s55
      %s72 = sphi 0, %s56
      %s78 = sphi 0, %s80
      %s81 = sphi 0, %s78
      %s82 = sphi 0, %s81
      %s98 = sphi 0, %s82
      %s104 = sphi 0, %s106
      %s107 = sphi 0, %s104
      %s108 = sphi 0, %s107
      %s124 = sphi 0, %s108
      %s130 = sphi 0, %s132
      %s133 = sphi 0, %s130
      %s134 = sphi 0, %s133
      %s150 = sphi 0, %s134
      %s154 = sphi 0, %s154
      %s156 = sphi 0, %s154
      %s157 = sphi 0, %s156
      %s171 = sphi 0, %s157
      %s189 = sphi 0, %s191
      %s192 = sphi 0, %s189
      %s193 = sphi 0, %s192
      %s209 = sphi 0, %s193
    $region4: #{tpu_custom_call.1} parent=1 // loop_header_branch
      %23 = sbr.rel (%p21) target = $region8
    $region5: #{tpu_custom_call.1} parent=1 // loop_body
      %s25 = ssub.s32 %s20, 1
      %s26 = ssub.s32 %s20, 2
      %s33 = sadd.s32 1, %s28
      %p34 = scmp.ge.s32.totalorder %s33, 2
      %s35 = scalar_select %p34, 0, %s33
      %s36 = sadd.s32 1, %s27
      %s37 = scalar_select %p34, %s36, %s27
      %p38 = scmp.ge.s32.totalorder %s37, 2
      %s39 = scalar_select %p38, 0, %s37
      %s40 = ssub.s32 1, %s27
      %s41 = smul.u32 %s40, %s28
      %s42 = ssub.s32 1, %s28
      %s43 = smul.u32 %s27, %s42
      %s44 = sadd.s32 %s41, %s43
      %s45 = ssub.s32 1, %s39
      %s46 = smul.u32 %s45, %s35
      %s47 = ssub.s32 1, %s35
      %s48 = smul.u32 %s39, %s47
      %s49 = sadd.s32 %s46, %s48
      %s50 = ssub.s32 %s44, %s49
      %p51 = scmp.eq.s32.totalorder %s50, 0
      %s53 = sadd.s32 %s52, 1
      %s54 = scalar_select %p51, %s52, %s53
      %p57 = pneg %p51
      %p58 = scmp.eq.s32.totalorder %s20, 3
      %p59 = por %p57, %p58
      %p60 = scmp.ne.s32.totalorder %s52, %s55
      %p61 = scmp.eq.s32.totalorder %s20, 0
      %p62 = por %p60, %p61
      %p63 = scmp.ne.s32.totalorder %s52, %s55
      %p64 = scmp.eq.s32.totalorder %s25, 3
      %p65 = por %p63, %p64
      %p66 = scmp.ne.s32.totalorder %s55, %s56
      %p67 = scmp.eq.s32.totalorder %s25, 0
      %p68 = por %p66, %p67
      %p69 = scmp.ne.s32.totalorder %s55, %s56
      %p70 = scmp.eq.s32.totalorder %s26, 3
      %p71 = por %p69, %p70
      %p73 = scmp.ne.s32.totalorder %s56, %s72
      %p74 = scmp.eq.s32.totalorder %s26, 0
      %p75 = por %p73, %p74
      %s76 = ssub.s32 %s27, %s39
      %p77 = scmp.eq.s32.totalorder %s76, 0
      %s79 = sadd.s32 %s78, 1
      %s80 = scalar_select %p77, %s78, %s79
      %p83 = pneg %p77
      %p84 = scmp.eq.s32.totalorder %s20, 3
      %p85 = por %p83, %p84
      %p86 = scmp.ne.s32.totalorder %s78, %s81
      %p87 = scmp.eq.s32.totalorder %s20, 0
      %p88 = por %p86, %p87
      %p89 = scmp.ne.s32.totalorder %s78, %s81
      %p90 = scmp.eq.s32.totalorder %s25, 3
      %p91 = por %p89, %p90
      %p92 = scmp.ne.s32.totalorder %s81, %s82
      %p93 = scmp.eq.s32.totalorder %s25, 0
      %p94 = por %p92, %p93
      %p95 = scmp.ne.s32.totalorder %s81, %s82
      %p96 = scmp.eq.s32.totalorder %s26, 3
      %p97 = por %p95, %p96
      %p99 = scmp.ne.s32.totalorder %s82, %s98
      %p100 = scmp.eq.s32.totalorder %s26, 0
      %p101 = por %p99, %p100
      %s102 = ssub.s32 %s27, %s39
      %p103 = scmp.eq.s32.totalorder %s102, 0
      %s105 = sadd.s32 %s104, 1
      %s106 = scalar_select %p103, %s104, %s105
      %p109 = pneg %p103
      %p110 = scmp.eq.s32.totalorder %s20, 3
      %p111 = por %p109, %p110
      %p112 = scmp.ne.s32.totalorder %s104, %s107
      %p113 = scmp.eq.s32.totalorder %s20, 0
      %p114 = por %p112, %p113
      %p115 = scmp.ne.s32.totalorder %s104, %s107
      %p116 = scmp.eq.s32.totalorder %s25, 3
      %p117 = por %p115, %p116
      %p118 = scmp.ne.s32.totalorder %s107, %s108
      %p119 = scmp.eq.s32.totalorder %s25, 0
      %p120 = por %p118, %p119
      %p121 = scmp.ne.s32.totalorder %s107, %s108
      %p122 = scmp.eq.s32.totalorder %s26, 3
      %p123 = por %p121, %p122
      %p125 = scmp.ne.s32.totalorder %s108, %s124
      %p126 = scmp.eq.s32.totalorder %s26, 0
      %p127 = por %p125, %p126
      %s128 = ssub.s32 %s27, %s39
      %p129 = scmp.eq.s32.totalorder %s128, 0
      %s131 = sadd.s32 %s130, 1
      %s132 = scalar_select %p129, %s130, %s131
      %p135 = pneg %p129
      %p136 = scmp.eq.s32.totalorder %s20, 3
      %p137 = por %p135, %p136
      %p138 = scmp.ne.s32.totalorder %s130, %s133
      %p139 = scmp.eq.s32.totalorder %s20, 0
      %p140 = por %p138, %p139
      %p141 = scmp.ne.s32.totalorder %s130, %s133
      %p142 = scmp.eq.s32.totalorder %s25, 3
      %p143 = por %p141, %p142
      %p144 = scmp.ne.s32.totalorder %s133, %s134
      %p145 = scmp.eq.s32.totalorder %s25, 0
      %p146 = por %p144, %p145
      %p147 = scmp.ne.s32.totalorder %s133, %s134
      %p148 = scmp.eq.s32.totalorder %s26, 3
      %p149 = por %p147, %p148
      %p151 = scmp.ne.s32.totalorder %s134, %s150
      %p152 = scmp.eq.s32.totalorder %s26, 0
      %p153 = por %p151, %p152
      %s155 = sadd.s32 %s154, 1
      %p158 = scmp.eq.s32.totalorder %s20, 3
      %p159 = scmp.ne.s32.totalorder %s154, %s156
      %p160 = scmp.eq.s32.totalorder %s20, 0
      %p161 = por %p159, %p160
      %p162 = scmp.ne.s32.totalorder %s154, %s156
      %p163 = scmp.eq.s32.totalorder %s25, 3
      %p164 = por %p162, %p163
      %p165 = scmp.ne.s32.totalorder %s156, %s157
      %p166 = scmp.eq.s32.totalorder %s25, 0
      %p167 = por %p165, %p166
      %p168 = scmp.ne.s32.totalorder %s156, %s157
      %p169 = scmp.eq.s32.totalorder %s26, 3
      %p170 = por %p168, %p169
      %p172 = scmp.ne.s32.totalorder %s157, %s171
      %p173 = scmp.eq.s32.totalorder %s26, 0
      %p174 = por %p172, %p173
      %s175 = ssub.s32 1, %s27
      %s176 = smul.u32 %s175, %s28
      %s177 = ssub.s32 1, %s28
      %s178 = smul.u32 %s27, %s177
      %s179 = sadd.s32 %s176, %s178
      %s180 = ssub.s32 1, %s39
      %s181 = smul.u32 %s180, %s35
      %s182 = ssub.s32 1, %s35
      %s183 = smul.u32 %s39, %s182
      %s184 = sadd.s32 %s181, %s183
      %s185 = ssub.s32 %s27, %s39
      %s186 = ssub.s32 %s179, %s184
      %s187 = sor.u32 %s185, %s186
      %p188 = scmp.eq.s32.totalorder %s187, 0
      %s190 = sadd.s32 %s189, 1
      %s191 = scalar_select %p188, %s189, %s190
      %p194 = pneg %p188
      %p195 = scmp.eq.s32.totalorder %s20, 3
      %p196 = por %p194, %p195
      %p197 = scmp.ne.s32.totalorder %s189, %s192
      %p198 = scmp.eq.s32.totalorder %s20, 0
      %p199 = por %p197, %p198
      %p200 = scmp.ne.s32.totalorder %s189, %s192
      %p201 = scmp.eq.s32.totalorder %s25, 3
      %p202 = por %p200, %p201
      %p203 = scmp.ne.s32.totalorder %s192, %s193
      %p204 = scmp.eq.s32.totalorder %s25, 0
      %p205 = por %p203, %p204
      %p206 = scmp.ne.s32.totalorder %s192, %s193
      %p207 = scmp.eq.s32.totalorder %s26, 3
      %p208 = por %p206, %p207
      %p210 = scmp.ne.s32.totalorder %s193, %s209
      %p211 = scmp.eq.s32.totalorder %s26, 0
      %p212 = por %p210, %p211
      %p213 = scmp.le.s32.totalorder 1, %s20
      %p214 = scmp.lt.s32.totalorder %s20, 5
      %p215 = pnand %p213, %p214
      %p216 = pneg %p215
      // Predicated region
      $region9: #{tpu_custom_call.1} parent=5 // pred_check
        _
      $region10: #{tpu_custom_call.1} parent=5 // pred_check_branch
        %218 = sbr.rel (%p215) target = $region12
      $region11: #{tpu_custom_call.1} parent=5 // pred_region
        %s219 = ssub.s32 %s20, 1
        // Predicated region
        $region13: #{tpu_custom_call.1} parent=11 // pred_check
          %p220 = pneg %p167
        $region14: #{tpu_custom_call.1} parent=11 // pred_check_branch
          %222 = sbr.rel (%p220) target = $region16
        $region15: #{tpu_custom_call.1} parent=11 // pred_region
          _
        $region16: #{tpu_custom_call.1} parent=11 // pred_fallthru
          _
      $region12: #{tpu_custom_call.1} parent=5 // pred_fallthru
        _
      %p223 = scmp.lt.s32.totalorder %s20, 4
      // Predicated region
      $region17: #{tpu_custom_call.1} parent=5 // pred_check
        %p224 = pneg %p223
      $region18: #{tpu_custom_call.1} parent=5 // pred_check_branch
        %226 = sbr.rel (%p224) target = $region20
      $region19: #{tpu_custom_call.1} parent=5 // pred_region
        // Predicated region
        $region21: #{tpu_custom_call.1} parent=19 // pred_check
          %p227 = pneg %p62
        $region22: #{tpu_custom_call.1} parent=19 // pred_check_branch
          %229 = sbr.rel (%p227) target = $region24
        $region23: #{tpu_custom_call.1} parent=19 // pred_region
          %s230 = sand.u32 %s52, 1
          %s231 = scalar_lea.sflag [#allocation6], %s230
          %s232 = sand.u32 %s52, 1
          %s233 = smul.addr %s232, 32
          %s234 = scalar_lea.vmem [#allocation5], %s233
          %s235 = ssub.s32 1, %s27
          %s236 = smul.u32 %s235, %s28
          %s237 = ssub.s32 1, %s28
          %s238 = smul.u32 %s27, %s237
          %s239 = sadd.s32 %s236, %s238
          %s240 = smul.u32 8, %s239
          %s242 = ssub.s32 512, 512
          %243 = vsyncadd %s231, %s242
          %s244 = smul.addr %s240, 64
          %s245 = scalar_lea.hbm %s0, %s244
          %s246 = sshll.u32 %s234, 4
          %s247 = int_to_ptr.vmem [resolvable:$true] %s246
          %252 = dma.hbm_to_vmem [thread:$0]  %s245, 512, %s247, %s231, 64, 64, 4
        $region24: #{tpu_custom_call.1} parent=19 // pred_fallthru
          _
        // Predicated region
        $region25: #{tpu_custom_call.1} parent=19 // pred_check
          %p253 = pneg %p88
        $region26: #{tpu_custom_call.1} parent=19 // pred_check_branch
          %255 = sbr.rel (%p253) target = $region28
        $region27: #{tpu_custom_call.1} parent=19 // pred_region
          %s256 = sand.u32 %s20, 1
          %s257 = scalar_lea.sflag [#allocation9], %s256
          %s258 = sand.u32 %s78, 1
          %s259 = smul.addr %s258, 256
          %s260 = scalar_lea.vmem [#allocation8], %s259
          %s262 = ssub.s32 4096, 4096
          %263 = vsyncadd %s257, %s262
          %s264 = smul.addr %s27, 64
          %s265 = smul.addr %s264, 64
          %s266 = scalar_lea.hbm %s1, %s265
          %s267 = sshll.u32 %s260, 4
          %s268 = int_to_ptr.vmem [resolvable:$true] %s267
          %273 = dma.hbm_to_vmem [thread:$0]  %s266, 4096, %s268, %s257, 256, 256, 16
        $region28: #{tpu_custom_call.1} parent=19 // pred_fallthru
          _
        // Predicated region
        $region29: #{tpu_custom_call.1} parent=19 // pred_check
          %p274 = pneg %p114
        $region30: #{tpu_custom_call.1} parent=19 // pred_check_branch
          %276 = sbr.rel (%p274) target = $region32
        $region31: #{tpu_custom_call.1} parent=19 // pred_region
          %p277 = scmp.lt.s32.totalorder %s27, 1
          %s278 = scalar_select %p277, %s27, 1
          %s279 = smul.addr %s278, 4
          %s280 = scalar_lea.vmem %s2, %s279
        $region32: #{tpu_custom_call.1} parent=19 // pred_fallthru
          _
        // Predicated region
        $region33: #{tpu_custom_call.1} parent=19 // pred_check
          %p281 = pneg %p140
        $region34: #{tpu_custom_call.1} parent=19 // pred_check_branch
          %283 = sbr.rel (%p281) target = $region36
        $region35: #{tpu_custom_call.1} parent=19 // pred_region
          %s284 = sand.u32 %s20, 1
          %s285 = scalar_lea.sflag [#allocation9], %s284
          %s286 = sand.u32 %s130, 1
          %s287 = smul.addr %s286, 256
          %s288 = scalar_lea.vmem [#allocation10], %s287
          %s290 = ssub.s32 4096, 4096
          %291 = vsyncadd %s285, %s290
          %s292 = smul.addr %s27, 64
          %s293 = smul.addr %s292, 64
          %s294 = scalar_lea.hbm %s3, %s293
          %s295 = sshll.u32 %s288, 4
          %s296 = int_to_ptr.vmem [resolvable:$true] %s295
          %301 = dma.hbm_to_vmem [thread:$0]  %s294, 4096, %s296, %s285, 256, 256, 16
        $region36: #{tpu_custom_call.1} parent=19 // pred_fallthru
          _
      $region20: #{tpu_custom_call.1} parent=5 // pred_fallthru
        _
      %p302 = scmp.le.s32.totalorder 1, %s20
      %p303 = scmp.lt.s32.totalorder %s20, 5
      %p304 = pnand %p302, %p303
      %p305 = pneg %p304
      // Predicated region
      $region37: #{tpu_custom_call.1} parent=5 // pred_check
        _
      $region38: #{tpu_custom_call.1} parent=5 // pred_check_branch
        %307 = sbr.rel (%p304) target = $region40
      $region39: #{tpu_custom_call.1} parent=5 // pred_region
        %s308 = ssub.s32 %s20, 1
        %s309 = sand.u32 %s55, 1
        %s310 = scalar_lea.sflag [#allocation6], %s309
        %s311 = sand.u32 %s55, 1
        %s312 = smul.addr %s311, 32
        %s313 = scalar_lea.vmem [#allocation5], %s312
        // Predicated region
        $region41: #{tpu_custom_call.1} parent=39 // pred_check
          %p314 = pneg %p68
        $region42: #{tpu_custom_call.1} parent=39 // pred_check_branch
          %316 = sbr.rel (%p314) target = $region44
        $region43: #{tpu_custom_call.1} parent=39 // pred_region
          %317 = dma.done %s310, 512
        $region44: #{tpu_custom_call.1} parent=39 // pred_fallthru
          _
        %s318 = sand.u32 %s25, 1
        %s319 = scalar_lea.sflag [#allocation9], %s318
        %s320 = sand.u32 %s81, 1
        %s321 = smul.addr %s320, 256
        %s322 = scalar_lea.vmem [#allocation8], %s321
        // Predicated region
        $region45: #{tpu_custom_call.1} parent=39 // pred_check
          %p323 = pneg %p94
        $region46: #{tpu_custom_call.1} parent=39 // pred_check_branch
          %325 = sbr.rel (%p323) target = $region48
        $region47: #{tpu_custom_call.1} parent=39 // pred_region
          %326 = dma.done %s319, 4096
        $region48: #{tpu_custom_call.1} parent=39 // pred_fallthru
          _
        %s327 = sand.u32 %s25, 1
        %s328 = scalar_lea.sflag [#allocation9], %s327
        %s329 = sand.u32 %s133, 1
        %s330 = smul.addr %s329, 256
        %s331 = scalar_lea.vmem [#allocation10], %s330
        // Predicated region
        $region49: #{tpu_custom_call.1} parent=39 // pred_check
          %p332 = pneg %p146
        $region50: #{tpu_custom_call.1} parent=39 // pred_check_branch
          %334 = sbr.rel (%p332) target = $region52
        $region51: #{tpu_custom_call.1} parent=39 // pred_region
          %335 = dma.done %s328, 4096
        $region52: #{tpu_custom_call.1} parent=39 // pred_fallthru
          _
        %s336 = sand.u32 %s55, 1
        %s337 = scalar_lea.sflag [#allocation6], %s336
        %s338 = sand.u32 %s55, 1
        %s339 = smul.addr %s338, 32
        %s340 = scalar_lea.vmem [#allocation5], %s339
        %p341 = pneg %p68
        %p342 = pneg %p65
        %s343 = sand.u32 %s25, 1
        %s344 = scalar_lea.sflag [#allocation9], %s343
        %s345 = sand.u32 %s81, 1
        %s346 = smul.addr %s345, 256
        %s347 = scalar_lea.vmem [#allocation8], %s346
        %p348 = pneg %p94
        %p349 = pneg %p91
        %p350 = scmp.lt.s32.totalorder %s29, 1
        %s351 = scalar_select %p350, %s29, 1
        %s352 = smul.addr %s351, 4
        %s353 = scalar_lea.vmem %s2, %s352
        %p354 = pneg %p120
        %p355 = pneg %p117
        %s356 = sand.u32 %s25, 1
        %s357 = scalar_lea.sflag [#allocation9], %s356
        %s358 = sand.u32 %s133, 1
        %s359 = smul.addr %s358, 256
        %s360 = scalar_lea.vmem [#allocation10], %s359
        %p361 = pneg %p146
        %p362 = pneg %p143
        %p363 = pneg %p167
        %p364 = pneg %p164
        %p365 = pneg %p205
        %p366 = pneg %p202
        %s367 = sand.u32 %s192, 1
        %s368 = scalar_lea.sflag [#allocation7], %s367
        %s369 = sand.u32 %s192, 1
        %s370 = smul.addr %s369, 32
        %s371 = scalar_lea.vmem [#allocation11], %s370
        %s372 = ssub.s32 1, %s29
        %s373 = smul.u32 %s372, %s30
        %s374 = ssub.s32 1, %s30
        %s375 = smul.u32 %s29, %s374
        %s376 = sadd.s32 %s373, %s375
        %s377 = smul.u32 8, %s376
        %p378 = scmp.lt.s32.totalorder %s29, 1
        %s379 = scalar_select %p378, %s29, 1
        %s380 = smul.addr %s379, 4
        %s381 = scalar_lea.vmem %s2, %s380
        %s382 = ssub.s32 1, %s29
        %s383 = smul.u32 %s382, %s30
        %s384 = ssub.s32 1, %s30
        %s385 = smul.u32 %s29, %s384
        %s386 = sadd.s32 %s383, %s385
        %s387 = smul.u32 8, %s386
        %p389 = scmp.eq.s32.totalorder %s30, 0
        // Predicated region
        $region53: #{tpu_custom_call.1} parent=39 // pred_check
          %p390 = pneg %p389
        $region54: #{tpu_custom_call.1} parent=39 // pred_check_branch
          %392 = sbr.rel (%p390) target = $region56
        $region55: #{tpu_custom_call.1} parent=39 // pred_region
          %393 = vst [vmem:[#allocation3] sm:$0xff] 0.0
          %394 = vst [vmem:[#allocation4] sm:$0xff] 0.0
        $region56: #{tpu_custom_call.1} parent=39 // pred_fallthru
          _
        %v395 = vld [vmem:[%s313] sm:$0xf]
        %v396 = vld [vmem:[%s313 + $0x4] sm:$0xf]
        %v397 = vld [vmem:[%s313 + $0x8] sm:$0xf]
        %v398 = vld [vmem:[%s313 + $0xc] sm:$0xf]
        %v399 = vld [vmem:[%s313 + $0x10] sm:$0xf]
        %v400 = vld [vmem:[%s313 + $0x14] sm:$0xf]
        %v401 = vld [vmem:[%s313 + $0x18] sm:$0xf]
        %v402 = vld [vmem:[%s313 + $0x1c] sm:$0xf]
        %v403 = vld [vmem:[%s322] sm:$0xff]
        %v404 = vld [vmem:[%s322 + $0x8] sm:$0xff]
        %v405 = vld [vmem:[%s322 + $0x10] sm:$0xff]
        %v406 = vld [vmem:[%s322 + $0x18] sm:$0xff]
        %v407 = vld [vmem:[%s322 + $0x20] sm:$0xff]
        %v408 = vld [vmem:[%s322 + $0x28] sm:$0xff]
        %v409 = vld [vmem:[%s322 + $0x30] sm:$0xff]
        %v410 = vld [vmem:[%s322 + $0x38] sm:$0xff]
        %v411 = vld [vmem:[%s322 + $0x40] sm:$0xff]
        %v412 = vld [vmem:[%s322 + $0x48] sm:$0xff]
        %v413 = vld [vmem:[%s322 + $0x50] sm:$0xff]
        %v414 = vld [vmem:[%s322 + $0x58] sm:$0xff]
        %v415 = vld [vmem:[%s322 + $0x60] sm:$0xff]
        %v416 = vld [vmem:[%s322 + $0x68] sm:$0xff]
        %v417 = vld [vmem:[%s322 + $0x70] sm:$0xff]
        %v418 = vld [vmem:[%s322 + $0x78] sm:$0xff]
        %v419 = vld [vmem:[%s322 + $0x80] sm:$0xff]
        %v420 = vld [vmem:[%s322 + $0x88] sm:$0xff]
        %v421 = vld [vmem:[%s322 + $0x90] sm:$0xff]
        %v422 = vld [vmem:[%s322 + $0x98] sm:$0xff]
        %v423 = vld [vmem:[%s322 + $0xa0] sm:$0xff]
        %v424 = vld [vmem:[%s322 + $0xa8] sm:$0xff]
        %v425 = vld [vmem:[%s322 + $0xb0] sm:$0xff]
        %v426 = vld [vmem:[%s322 + $0xb8] sm:$0xff]
        %v427 = vld [vmem:[%s322 + $0xc0] sm:$0xff]
        %v428 = vld [vmem:[%s322 + $0xc8] sm:$0xff]
        %v429 = vld [vmem:[%s322 + $0xd0] sm:$0xff]
        %v430 = vld [vmem:[%s322 + $0xd8] sm:$0xff]
        %v431 = vld [vmem:[%s322 + $0xe0] sm:$0xff]
        %v432 = vld [vmem:[%s322 + $0xe8] sm:$0xff]
        %v433 = vld [vmem:[%s322 + $0xf0] sm:$0xff]
        %v434 = vld [vmem:[%s322 + $0xf8] sm:$0xff]
        %v435 = vld [vmem:[%s381] sm:$0xf]
        %v437 = vlaneseq
        %v438 = vshrl.u32 %v437, 7
        %v439 = vsub.s32 0, %v438
        %v440 = vrot.slane %v435, %v439
        %v441 = vlaneseq
        %v442 = vshrl.u32 %v441, 7
        %v443 = vsub.s32 1, %v442
        %v444 = vrot.slane %v435, %v443
        %v445 = vlaneseq
        %v446 = vshrl.u32 %v445, 7
        %v447 = vsub.s32 2, %v446
        %v448 = vrot.slane %v435, %v447
        %v449 = vlaneseq
        %v450 = vshrl.u32 %v449, 7
        %v451 = vsub.s32 3, %v450
        %v452 = vrot.slane %v435, %v451
        %v465 = vunpack.c.l.b16 %v395
        %v466 = vunpack.c.l.b16 %v396
        %v467 = vunpack.c.l.b16 %v397
        %v468 = vunpack.c.l.b16 %v398
        %v469 = vunpack.c.l.b16 %v399
        %v470 = vunpack.c.l.b16 %v400
        %v471 = vunpack.c.l.b16 %v401
        %v472 = vunpack.c.l.b16 %v402
        %v473 = vpack.c.b16 %v466, %v465
        %v474 = vpack.c.b16 %v468, %v467
        %v475 = vpack.c.b16 %v470, %v469
        %v476 = vpack.c.b16 %v472, %v471
        %v513 = vunpack.c.l.b16 %v403
        %v514 = vunpack.c.h.b16 %v403
        %v515 = vunpack.c.l.b16 %v404
        %v516 = vunpack.c.h.b16 %v404
        %v517 = vunpack.c.l.b16 %v405
        %v518 = vunpack.c.h.b16 %v405
        %v519 = vunpack.c.l.b16 %v406
        %v520 = vunpack.c.h.b16 %v406
        %v521 = vunpack.c.l.b16 %v407
        %v522 = vunpack.c.h.b16 %v407
        %v523 = vunpack.c.l.b16 %v408
        %v524 = vunpack.c.h.b16 %v408
        %v525 = vunpack.c.l.b16 %v409
        %v526 = vunpack.c.h.b16 %v409
        %v527 = vunpack.c.l.b16 %v410
        %v528 = vunpack.c.h.b16 %v410
        %v529 = vunpack.c.l.b16 %v411
        %v530 = vunpack.c.h.b16 %v411
        %v531 = vunpack.c.l.b16 %v412
        %v532 = vunpack.c.h.b16 %v412
        %v533 = vunpack.c.l.b16 %v413
        %v534 = vunpack.c.h.b16 %v413
        %v535 = vunpack.c.l.b16 %v414
        %v536 = vunpack.c.h.b16 %v414
        %v537 = vunpack.c.l.b16 %v415
        %v538 = vunpack.c.h.b16 %v415
        %v539 = vunpack.c.l.b16 %v416
        %v540 = vunpack.c.h.b16 %v416
        %v541 = vunpack.c.l.b16 %v417
        %v542 = vunpack.c.h.b16 %v417
        %v543 = vunpack.c.l.b16 %v418
        %v544 = vunpack.c.h.b16 %v418
        %v545 = vunpack.c.l.b16 %v419
        %v546 = vunpack.c.h.b16 %v419
        %v547 = vunpack.c.l.b16 %v420
        %v548 = vunpack.c.h.b16 %v420
        %v549 = vunpack.c.l.b16 %v421
        %v550 = vunpack.c.h.b16 %v421
        %v551 = vunpack.c.l.b16 %v422
        %v552 = vunpack.c.h.b16 %v422
        %v553 = vunpack.c.l.b16 %v423
        %v554 = vunpack.c.h.b16 %v423
        %v555 = vunpack.c.l.b16 %v424
        %v556 = vunpack.c.h.b16 %v424
        %v557 = vunpack.c.l.b16 %v425
        %v558 = vunpack.c.h.b16 %v425
        %v559 = vunpack.c.l.b16 %v426
        %v560 = vunpack.c.h.b16 %v426
        %v561 = vunpack.c.l.b16 %v427
        %v562 = vunpack.c.h.b16 %v427
        %v563 = vunpack.c.l.b16 %v428
        %v564 = vunpack.c.h.b16 %v428
        %v565 = vunpack.c.l.b16 %v429
        %v566 = vunpack.c.h.b16 %v429
        %v567 = vunpack.c.l.b16 %v430
        %v568 = vunpack.c.h.b16 %v430
        %v569 = vunpack.c.l.b16 %v431
        %v570 = vunpack.c.h.b16 %v431
        %v571 = vunpack.c.l.b16 %v432
        %v572 = vunpack.c.h.b16 %v432
        %v573 = vunpack.c.l.b16 %v433
        %v574 = vunpack.c.h.b16 %v433
        %v575 = vunpack.c.l.b16 %v434
        %v576 = vunpack.c.h.b16 %v434
        %v577 = vpack.c.b16 %v517, %v513
        %v578 = vpack.c.b16 %v518, %v514
        %v579 = vpack.c.b16 %v519, %v515
        %v580 = vpack.c.b16 %v520, %v516
        %v581 = vpack.c.b16 %v525, %v521
        %v582 = vpack.c.b16 %v526, %v522
        %v583 = vpack.c.b16 %v527, %v523
        %v584 = vpack.c.b16 %v528, %v524
        %v585 = vpack.c.b16 %v533, %v529
        %v586 = vpack.c.b16 %v534, %v530
        %v587 = vpack.c.b16 %v535, %v531
        %v588 = vpack.c.b16 %v536, %v532
        %v589 = vpack.c.b16 %v541, %v537
        %v590 = vpack.c.b16 %v542, %v538
        %v591 = vpack.c.b16 %v543, %v539
        %v592 = vpack.c.b16 %v544, %v540
        %v593 = vpack.c.b16 %v549, %v545
        %v594 = vpack.c.b16 %v550, %v546
        %v595 = vpack.c.b16 %v551, %v547
        %v596 = vpack.c.b16 %v552, %v548
        %v597 = vpack.c.b16 %v557, %v553
        %v598 = vpack.c.b16 %v558, %v554
        %v599 = vpack.c.b16 %v559, %v555
        %v600 = vpack.c.b16 %v560, %v556
        %v601 = vpack.c.b16 %v565, %v561
        %v602 = vpack.c.b16 %v566, %v562
        %v603 = vpack.c.b16 %v567, %v563
        %v604 = vpack.c.b16 %v568, %v564
        %v605 = vpack.c.b16 %v573, %v569
        %v606 = vpack.c.b16 %v574, %v570
        %v607 = vpack.c.b16 %v575, %v571
        %v608 = vpack.c.b16 %v576, %v572
        %641 = vmatprep.subr.bf16.mxu0 %v578
        %642 = vmatpush1.bf16.msra.mxu0 %v577
        %643 = vmatprep.subr.bf16.mxu0 %v582
        %644 = vmatpush1.bf16.msra.mxu0 %v581
        %645 = vmatprep.subr.bf16.mxu0 %v586
        %646 = vmatpush1.bf16.msra.mxu0 %v585
        %647 = vmatprep.subr.bf16.mxu0 %v590
        %648 = vmatpush1.bf16.msra.mxu0 %v589
        %649 = vmatprep.subr.bf16.mxu0 %v594
        %650 = vmatpush1.bf16.msra.mxu0 %v593
        %651 = vmatprep.subr.bf16.mxu0 %v598
        %652 = vmatpush1.bf16.msra.mxu0 %v597
        %653 = vmatprep.subr.bf16.mxu0 %v602
        %654 = vmatpush1.bf16.msra.mxu0 %v601
        %655 = vmatprep.subr.bf16.mxu0 %v606
        %656 = vmatpush1.bf16.msra.mxu0 %v605
        %657 = vmatprep.subr.bf16.mxu0 0
        %658 = vmatpush1.bf16.msra.mxu0 0
        %659 = vmatprep.subr.bf16.mxu0 0
        %660 = vmatpush1.bf16.msra.mxu0 0
        %661 = vmatprep.subr.bf16.mxu0 0
        %662 = vmatpush1.bf16.msra.mxu0 0
        %663 = vmatprep.subr.bf16.mxu0 0
        %664 = vmatpush1.bf16.msra.mxu0 0
        %665 = vmatprep.subr.bf16.mxu0 0
        %666 = vmatpush1.bf16.msra.mxu0 0
        %667 = vmatprep.subr.bf16.mxu0 0
        %668 = vmatpush1.bf16.msra.mxu0 0
        %669 = vmatprep.subr.bf16.mxu0 0
        %670 = vmatpush1.bf16.msra.mxu0 0
        %671 = vmatprep.subr.bf16.mxu0 0
        %672 = vmatpush1.bf16.msra.mxu0 0
        %673 = vmatprep.mubr.bf16.mxu0 0
        %674 = vmatmul.mubr.bf16.gmra.mrb[0].mxu0 %v473
        %v675 = vpop.f32.mrb[0].mxu0
        %v676 = vadd.f32 %v440, %v675
        %v677 = vpop.f32.mrb[0].mxu0
        %v678 = vadd.f32 %v444, %v677
        %v679 = vpop.f32.mrb[0].mxu0
        %v680 = vadd.f32 %v440, %v679
        %v681 = vpop.f32.mrb[0].mxu0
        %v682 = vadd.f32 %v444, %v681
        %683 = vmatprep.mubr.bf16.mxu0 0
        %684 = vmatmul.mubr.bf16.gmra.mrb[0].mxu0 %v474
        %v685 = vpop.f32.mrb[0].mxu0
        %v686 = vadd.f32 %v440, %v685
        %v687 = vpop.f32.mrb[0].mxu0
        %v688 = vadd.f32 %v444, %v687
        %v689 = vpop.f32.mrb[0].mxu0
        %v690 = vadd.f32 %v440, %v689
        %v691 = vpop.f32.mrb[0].mxu0
        %v692 = vadd.f32 %v444, %v691
        %693 = vmatprep.mubr.bf16.mxu0 0
        %694 = vmatmul.mubr.bf16.gmra.mrb[0].mxu0 %v475
        %v695 = vpop.f32.mrb[0].mxu0
        %v696 = vadd.f32 %v440, %v695
        %v697 = vpop.f32.mrb[0].mxu0
        %v698 = vadd.f32 %v444, %v697
        %v699 = vpop.f32.mrb[0].mxu0
        %v700 = vadd.f32 %v440, %v699
        %v701 = vpop.f32.mrb[0].mxu0
        %v702 = vadd.f32 %v444, %v701
        %703 = vmatprep.mubr.bf16.mxu0 0
        %704 = vmatmul.mubr.bf16.gmra.mrb[0].mxu0 %v476
        %v705 = vpop.f32.mrb[0].mxu0
        %v706 = vadd.f32 %v440, %v705
        %v707 = vpop.f32.mrb[0].mxu0
        %v708 = vadd.f32 %v444, %v707
        %v709 = vpop.f32.mrb[0].mxu0
        %v710 = vadd.f32 %v440, %v709
        %v711 = vpop.f32.mrb[0].mxu0
        %v712 = vadd.f32 %v444, %v711
        %713 = vdwg.mxu0
        %714 = vmatprep.subr.bf16.mxu0 %v580
        %715 = vmatpush1.bf16.msra.mxu0 %v579
        %716 = vmatprep.subr.bf16.mxu0 %v584
        %717 = vmatpush1.bf16.msra.mxu0 %v583
        %718 = vmatprep.subr.bf16.mxu0 %v588
        %719 = vmatpush1.bf16.msra.mxu0 %v587
        %720 = vmatprep.subr.bf16.mxu0 %v592
        %721 = vmatpush1.bf16.msra.mxu0 %v591
        %722 = vmatprep.subr.bf16.mxu0 %v596
        %723 = vmatpush1.bf16.msra.mxu0 %v595
        %724 = vmatprep.subr.bf16.mxu0 %v600
        %725 = vmatpush1.bf16.msra.mxu0 %v599
        %726 = vmatprep.subr.bf16.mxu0 %v604
        %727 = vmatpush1.bf16.msra.mxu0 %v603
        %728 = vmatprep.subr.bf16.mxu0 %v608
        %729 = vmatpush1.bf16.msra.mxu0 %v607
        %730 = vmatprep.subr.bf16.mxu0 0
        %731 = vmatpush1.bf16.msra.mxu0 0
        %732 = vmatprep.subr.bf16.mxu0 0
        %733 = vmatpush1.bf16.msra.mxu0 0
        %734 = vmatprep.subr.bf16.mxu0 0
        %735 = vmatpush1.bf16.msra.mxu0 0
        %736 = vmatprep.subr.bf16.mxu0 0
        %737 = vmatpush1.bf16.msra.mxu0 0
        %738 = vmatprep.subr.bf16.mxu0 0
        %739 = vmatpush1.bf16.msra.mxu0 0
        %740 = vmatprep.subr.bf16.mxu0 0
        %741 = vmatpush1.bf16.msra.mxu0 0
        %742 = vmatprep.subr.bf16.mxu0 0
        %743 = vmatpush1.bf16.msra.mxu0 0
        %744 = vmatprep.subr.bf16.mxu0 0
        %745 = vmatpush1.bf16.msra.mxu0 0
        %746 = vmatprep.mubr.bf16.mxu0 0
        %747 = vmatmul.mubr.bf16.gmra.mrb[0].mxu0 %v473
        %v748 = vpop.f32.mrb[0].mxu0
        %v749 = vadd.f32 %v448, %v748
        %v750 = vpop.f32.mrb[0].mxu0
        %v751 = vadd.f32 %v452, %v750
        %v752 = vpop.f32.mrb[0].mxu0
        %v753 = vadd.f32 %v448, %v752
        %v754 = vpop.f32.mrb[0].mxu0
        %v755 = vadd.f32 %v452, %v754
        %756 = vmatprep.mubr.bf16.mxu0 0
        %757 = vmatmul.mubr.bf16.gmra.mrb[0].mxu0 %v474
        %v758 = vpop.f32.mrb[0].mxu0
        %v759 = vadd.f32 %v448, %v758
        %v760 = vpop.f32.mrb[0].mxu0
        %v761 = vadd.f32 %v452, %v760
        %v762 = vpop.f32.mrb[0].mxu0
        %v763 = vadd.f32 %v448, %v762
        %v764 = vpop.f32.mrb[0].mxu0
        %v765 = vadd.f32 %v452, %v764
        %766 = vmatprep.mubr.bf16.mxu0 0
        %767 = vmatmul.mubr.bf16.gmra.mrb[0].mxu0 %v475
        %v768 = vpop.f32.mrb[0].mxu0
        %v769 = vadd.f32 %v448, %v768
        %v770 = vpop.f32.mrb[0].mxu0
        %v771 = vadd.f32 %v452, %v770
        %v772 = vpop.f32.mrb[0].mxu0
        %v773 = vadd.f32 %v448, %v772
        %v774 = vpop.f32.mrb[0].mxu0
        %v775 = vadd.f32 %v452, %v774
        %776 = vmatprep.mubr.bf16.mxu0 0
        %777 = vmatmul.mubr.bf16.gmra.mrb[0].mxu0 %v476
        %v778 = vpop.f32.mrb[0].mxu0
        %v779 = vadd.f32 %v448, %v778
        %v780 = vpop.f32.mrb[0].mxu0
        %v781 = vadd.f32 %v452, %v780
        %v782 = vpop.f32.mrb[0].mxu0
        %v783 = vadd.f32 %v448, %v782
        %v784 = vpop.f32.mrb[0].mxu0
        %v785 = vadd.f32 %v452, %v784
        %786 = vdwg.mxu0
        %787 = vst [vmem:[#allocation2] sm:$0xff] %v676
        %788 = vst [vmem:[#allocation2 + $0x8] sm:$0xff] %v678
        %789 = vst [vmem:[#allocation2 + $0x10] sm:$0xff] %v749
        %790 = vst [vmem:[#allocation2 + $0x18] sm:$0xff] %v751
        %791 = vst [vmem:[#allocation2 + $0x20] sm:$0xff] %v680
        %792 = vst [vmem:[#allocation2 + $0x28] sm:$0xff] %v682
        %793 = vst [vmem:[#allocation2 + $0x30] sm:$0xff] %v753
        %794 = vst [vmem:[#allocation2 + $0x38] sm:$0xff] %v755
        %795 = vst [vmem:[#allocation2 + $0x40] sm:$0xff] %v686
        %796 = vst [vmem:[#allocation2 + $0x48] sm:$0xff] %v688
        %797 = vst [vmem:[#allocation2 + $0x50] sm:$0xff] %v759
        %798 = vst [vmem:[#allocation2 + $0x58] sm:$0xff] %v761
        %799 = vst [vmem:[#allocation2 + $0x60] sm:$0xff] %v690
        %800 = vst [vmem:[#allocation2 + $0x68] sm:$0xff] %v692
        %801 = vst [vmem:[#allocation2 + $0x70] sm:$0xff] %v763
        %802 = vst [vmem:[#allocation2 + $0x78] sm:$0xff] %v765
        %803 = vst [vmem:[#allocation2 + $0x80] sm:$0xff] %v696
        %804 = vst [vmem:[#allocation2 + $0x88] sm:$0xff] %v698
        %805 = vst [vmem:[#allocation2 + $0x90] sm:$0xff] %v769
        %806 = vst [vmem:[#allocation2 + $0x98] sm:$0xff] %v771
        %807 = vst [vmem:[#allocation2 + $0xa0] sm:$0xff] %v700
        %808 = vst [vmem:[#allocation2 + $0xa8] sm:$0xff] %v702
        %809 = vst [vmem:[#allocation2 + $0xb0] sm:$0xff] %v773
        %810 = vst [vmem:[#allocation2 + $0xb8] sm:$0xff] %v775
        %811 = vst [vmem:[#allocation2 + $0xc0] sm:$0xff] %v706
        %812 = vst [vmem:[#allocation2 + $0xc8] sm:$0xff] %v708
        %813 = vst [vmem:[#allocation2 + $0xd0] sm:$0xff] %v779
        %814 = vst [vmem:[#allocation2 + $0xd8] sm:$0xff] %v781
        %815 = vst [vmem:[#allocation2 + $0xe0] sm:$0xff] %v710
        %816 = vst [vmem:[#allocation2 + $0xe8] sm:$0xff] %v712
        %817 = vst [vmem:[#allocation2 + $0xf0] sm:$0xff] %v783
        %818 = vst [vmem:[#allocation2 + $0xf8] sm:$0xff] %v785
        %v819 = vld [vmem:[%s331] sm:$0xff]
        %v820 = vld [vmem:[%s331 + $0x8] sm:$0xff]
        %v821 = vld [vmem:[%s331 + $0x10] sm:$0xff]
        %v822 = vld [vmem:[%s331 + $0x18] sm:$0xff]
        %v823 = vld [vmem:[%s331 + $0x20] sm:$0xff]
        %v824 = vld [vmem:[%s331 + $0x28] sm:$0xff]
        %v825 = vld [vmem:[%s331 + $0x30] sm:$0xff]
        %v826 = vld [vmem:[%s331 + $0x38] sm:$0xff]
        %v827 = vld [vmem:[%s331 + $0x40] sm:$0xff]
        %v828 = vld [vmem:[%s331 + $0x48] sm:$0xff]
        %v829 = vld [vmem:[%s331 + $0x50] sm:$0xff]
        %v830 = vld [vmem:[%s331 + $0x58] sm:$0xff]
        %v831 = vld [vmem:[%s331 + $0x60] sm:$0xff]
        %v832 = vld [vmem:[%s331 + $0x68] sm:$0xff]
        %v833 = vld [vmem:[%s331 + $0x70] sm:$0xff]
        %v834 = vld [vmem:[%s331 + $0x78] sm:$0xff]
        %v835 = vld [vmem:[%s331 + $0x80] sm:$0xff]
        %v836 = vld [vmem:[%s331 + $0x88] sm:$0xff]
        %v837 = vld [vmem:[%s331 + $0x90] sm:$0xff]
        %v838 = vld [vmem:[%s331 + $0x98] sm:$0xff]
        %v839 = vld [vmem:[%s331 + $0xa0] sm:$0xff]
        %v840 = vld [vmem:[%s331 + $0xa8] sm:$0xff]
        %v841 = vld [vmem:[%s331 + $0xb0] sm:$0xff]
        %v842 = vld [vmem:[%s331 + $0xb8] sm:$0xff]
        %v843 = vld [vmem:[%s331 + $0xc0] sm:$0xff]
        %v844 = vld [vmem:[%s331 + $0xc8] sm:$0xff]
        %v845 = vld [vmem:[%s331 + $0xd0] sm:$0xff]
        %v846 = vld [vmem:[%s331 + $0xd8] sm:$0xff]
        %v847 = vld [vmem:[%s331 + $0xe0] sm:$0xff]
        %v848 = vld [vmem:[%s331 + $0xe8] sm:$0xff]
        %v849 = vld [vmem:[%s331 + $0xf0] sm:$0xff]
        %v850 = vld [vmem:[%s331 + $0xf8] sm:$0xff]
        %v851 = vld [vmem:[%s4] sm:$0xff]
        %s852 = smul.u32 %s30, 8
        %p853 = scmp.eq.s32.totalorder %s29, 0
        // Predicated region
        $region57: #{tpu_custom_call.1} parent=39 // pred_check
          %p854 = pneg %p853
        $region58: #{tpu_custom_call.1} parent=39 // pred_check_branch
          %856 = sbr.rel (%p854) target = $region60
        $region59: #{tpu_custom_call.1} parent=39 // pred_region
          %v857 = vld [vmem:[#allocation3] sm:$0xff]
          %v858 = vld [vmem:[#allocation4] sm:$0xff]
          %v859 = vld [vmem:[#allocation2] sm:$0xff]
          %v860 = vld [vmem:[#allocation2 + $0x8] sm:$0xff]
          %v861 = vld [vmem:[#allocation2 + $0x10] sm:$0xff]
          %v862 = vld [vmem:[#allocation2 + $0x18] sm:$0xff]
          %v863 = vpack.c.bf16 %v857, %v857
          %v896 = vunpack.c.l.b16 %v819
          %v897 = vunpack.c.h.b16 %v819
          %v898 = vunpack.c.l.b16 %v820
          %v899 = vunpack.c.h.b16 %v820
          %v900 = vunpack.c.l.b16 %v821
          %v901 = vunpack.c.h.b16 %v821
          %v902 = vunpack.c.l.b16 %v822
          %v903 = vunpack.c.h.b16 %v822
          %v904 = vunpack.c.l.b16 %v823
          %v905 = vunpack.c.h.b16 %v823
          %v906 = vunpack.c.l.b16 %v824
          %v907 = vunpack.c.h.b16 %v824
          %v908 = vunpack.c.l.b16 %v825
          %v909 = vunpack.c.h.b16 %v825
          %v910 = vunpack.c.l.b16 %v826
          %v911 = vunpack.c.h.b16 %v826
          %v912 = vunpack.c.l.b16 %v827
          %v913 = vunpack.c.h.b16 %v827
          %v914 = vunpack.c.l.b16 %v828
          %v915 = vunpack.c.h.b16 %v828
          %v916 = vunpack.c.l.b16 %v829
          %v917 = vunpack.c.h.b16 %v829
          %v918 = vunpack.c.l.b16 %v830
          %v919 = vunpack.c.h.b16 %v830
          %v920 = vunpack.c.l.b16 %v831
          %v921 = vunpack.c.h.b16 %v831
          %v922 = vunpack.c.l.b16 %v832
          %v923 = vunpack.c.h.b16 %v832
          %v924 = vunpack.c.l.b16 %v833
          %v925 = vunpack.c.h.b16 %v833
          %v926 = vunpack.c.l.b16 %v834
          %v927 = vunpack.c.h.b16 %v834
          %v928 = vunpack.c.l.b16 %v835
          %v929 = vunpack.c.h.b16 %v835
          %v930 = vunpack.c.l.b16 %v836
          %v931 = vunpack.c.h.b16 %v836
          %v932 = vunpack.c.l.b16 %v837
          %v933 = vunpack.c.h.b16 %v837
          %v934 = vunpack.c.l.b16 %v838
          %v935 = vunpack.c.h.b16 %v838
          %v936 = vunpack.c.l.b16 %v839
          %v937 = vunpack.c.h.b16 %v839
          %v938 = vunpack.c.l.b16 %v840
          %v939 = vunpack.c.h.b16 %v840
          %v940 = vunpack.c.l.b16 %v841
          %v941 = vunpack.c.h.b16 %v841
          %v942 = vunpack.c.l.b16 %v842
          %v943 = vunpack.c.h.b16 %v842
          %v944 = vunpack.c.l.b16 %v843
          %v945 = vunpack.c.h.b16 %v843
          %v946 = vunpack.c.l.b16 %v844
          %v947 = vunpack.c.h.b16 %v844
          %v948 = vunpack.c.l.b16 %v845
          %v949 = vunpack.c.h.b16 %v845
          %v950 = vunpack.c.l.b16 %v846
          %v951 = vunpack.c.h.b16 %v846
          %v952 = vunpack.c.l.b16 %v847
          %v953 = vunpack.c.h.b16 %v847
          %v954 = vunpack.c.l.b16 %v848
          %v955 = vunpack.c.h.b16 %v848
          %v956 = vunpack.c.l.b16 %v849
          %v957 = vunpack.c.h.b16 %v849
          %v958 = vunpack.c.l.b16 %v850
          %v959 = vunpack.c.h.b16 %v850
          %v960 = vpack.c.b16 %v900, %v896
          %v961 = vpack.c.b16 %v901, %v897
          %v962 = vpack.c.b16 %v902, %v898
          %v963 = vpack.c.b16 %v903, %v899
          %v964 = vpack.c.b16 %v908, %v904
          %v965 = vpack.c.b16 %v909, %v905
          %v966 = vpack.c.b16 %v910, %v906
          %v967 = vpack.c.b16 %v911, %v907
          %v968 = vpack.c.b16 %v916, %v912
          %v969 = vpack.c.b16 %v917, %v913
          %v970 = vpack.c.b16 %v918, %v914
          %v971 = vpack.c.b16 %v919, %v915
          %v972 = vpack.c.b16 %v924, %v920
          %v973 = vpack.c.b16 %v925, %v921
          %v974 = vpack.c.b16 %v926, %v922
          %v975 = vpack.c.b16 %v927, %v923
          %v976 = vpack.c.b16 %v932, %v928
          %v977 = vpack.c.b16 %v933, %v929
          %v978 = vpack.c.b16 %v934, %v930
          %v979 = vpack.c.b16 %v935, %v931
          %v980 = vpack.c.b16 %v940, %v936
          %v981 = vpack.c.b16 %v941, %v937
          %v982 = vpack.c.b16 %v942, %v938
          %v983 = vpack.c.b16 %v943, %v939
          %v984 = vpack.c.b16 %v948, %v944
          %v985 = vpack.c.b16 %v949, %v945
          %v986 = vpack.c.b16 %v950, %v946
          %v987 = vpack.c.b16 %v951, %v947
          %v988 = vpack.c.b16 %v956, %v952
          %v989 = vpack.c.b16 %v957, %v953
          %v990 = vpack.c.b16 %v958, %v954
          %v991 = vpack.c.b16 %v959, %v955
          %1024 = vmatprep.subr.bf16.mxu0 %v961
          %1025 = vmatpush1.bf16.msra.mxu0 %v960
          %1026 = vmatprep.subr.bf16.mxu0 %v965
          %1027 = vmatpush1.bf16.msra.mxu0 %v964
          %1028 = vmatprep.subr.bf16.mxu0 %v969
          %1029 = vmatpush1.bf16.msra.mxu0 %v968
          %1030 = vmatprep.subr.bf16.mxu0 %v973
          %1031 = vmatpush1.bf16.msra.mxu0 %v972
          %1032 = vmatprep.subr.bf16.mxu0 %v977
          %1033 = vmatpush1.bf16.msra.mxu0 %v976
          %1034 = vmatprep.subr.bf16.mxu0 %v981
          %1035 = vmatpush1.bf16.msra.mxu0 %v980
          %1036 = vmatprep.subr.bf16.mxu0 %v985
          %1037 = vmatpush1.bf16.msra.mxu0 %v984
          %1038 = vmatprep.subr.bf16.mxu0 %v989
          %1039 = vmatpush1.bf16.msra.mxu0 %v988
          %1040 = vmatprep.subr.bf16.mxu0 0
          %1041 = vmatpush1.bf16.msra.mxu0 0
          %1042 = vmatprep.subr.bf16.mxu0 0
          %1043 = vmatpush1.bf16.msra.mxu0 0
          %1044 = vmatprep.subr.bf16.mxu0 0
          %1045 = vmatpush1.bf16.msra.mxu0 0
          %1046 = vmatprep.subr.bf16.mxu0 0
          %1047 = vmatpush1.bf16.msra.mxu0 0
          %1048 = vmatprep.subr.bf16.mxu0 0
          %1049 = vmatpush1.bf16.msra.mxu0 0
          %1050 = vmatprep.subr.bf16.mxu0 0
          %1051 = vmatpush1.bf16.msra.mxu0 0
          %1052 = vmatprep.subr.bf16.mxu0 0
          %1053 = vmatpush1.bf16.msra.mxu0 0
          %1054 = vmatprep.subr.bf16.mxu0 0
          %1055 = vmatpush1.bf16.msra.mxu0 0
          %1056 = vmatprep.mubr.bf16.mxu0 0
          %1057 = vmatmul.mubr.bf16.gmra.mrb[0].mxu0 %v863
          %v1058 = vpop.f32.mrb[0].mxu0
          %v1059 = vadd.f32 0.0, %v1058
          %v1060 = vpop.f32.mrb[0].mxu0
          %v1061 = vadd.f32 0.0, %v1060
          %v1062 = vpop.f32.mrb[0].mxu0
          %v1063 = vpop.f32.mrb[0].mxu0
          %1064 = vdwg.mxu0
          %1065 = vmatprep.subr.bf16.mxu0 %v963
          %1066 = vmatpush1.bf16.msra.mxu0 %v962
          %1067 = vmatprep.subr.bf16.mxu0 %v967
          %1068 = vmatpush1.bf16.msra.mxu0 %v966
          %1069 = vmatprep.subr.bf16.mxu0 %v971
          %1070 = vmatpush1.bf16.msra.mxu0 %v970
          %1071 = vmatprep.subr.bf16.mxu0 %v975
          %1072 = vmatpush1.bf16.msra.mxu0 %v974
          %1073 = vmatprep.subr.bf16.mxu0 %v979
          %1074 = vmatpush1.bf16.msra.mxu0 %v978
          %1075 = vmatprep.subr.bf16.mxu0 %v983
          %1076 = vmatpush1.bf16.msra.mxu0 %v982
          %1077 = vmatprep.subr.bf16.mxu0 %v987
          %1078 = vmatpush1.bf16.msra.mxu0 %v986
          %1079 = vmatprep.subr.bf16.mxu0 %v991
          %1080 = vmatpush1.bf16.msra.mxu0 %v990
          %1081 = vmatprep.subr.bf16.mxu0 0
          %1082 = vmatpush1.bf16.msra.mxu0 0
          %1083 = vmatprep.subr.bf16.mxu0 0
          %1084 = vmatpush1.bf16.msra.mxu0 0
          %1085 = vmatprep.subr.bf16.mxu0 0
          %1086 = vmatpush1.bf16.msra.mxu0 0
          %1087 = vmatprep.subr.bf16.mxu0 0
          %1088 = vmatpush1.bf16.msra.mxu0 0
          %1089 = vmatprep.subr.bf16.mxu0 0
          %1090 = vmatpush1.bf16.msra.mxu0 0
          %1091 = vmatprep.subr.bf16.mxu0 0
          %1092 = vmatpush1.bf16.msra.mxu0 0
          %1093 = vmatprep.subr.bf16.mxu0 0
          %1094 = vmatpush1.bf16.msra.mxu0 0
          %1095 = vmatprep.subr.bf16.mxu0 0
          %1096 = vmatpush1.bf16.msra.mxu0 0
          %1097 = vmatprep.mubr.bf16.mxu0 0
          %1098 = vmatmul.mubr.bf16.gmra.mrb[0].mxu0 %v863
          %v1099 = vpop.f32.mrb[0].mxu0
          %v1100 = vadd.f32 0.0, %v1099
          %v1101 = vpop.f32.mrb[0].mxu0
          %v1102 = vadd.f32 0.0, %v1101
          %v1103 = vpop.f32.mrb[0].mxu0
          %v1104 = vpop.f32.mrb[0].mxu0
          %1105 = vdwg.mxu0
          %v1106 = vadd.f32 %v859, %v1059
          %v1107 = vadd.f32 %v860, %v1061
          %v1108 = vadd.f32 %v861, %v1100
          %v1109 = vadd.f32 %v862, %v1102
          %v1110 = vxor.u32 %v1106, 2147483648
          %v1111 = vmul.f32 %v1110, 1.442695
          %v1112 = vpow.pop %v1111
          %v1113 = vadd.f32 %v1112, 1.0
          %v1114 = vrcp.pop %v1113
          %v1115 = vmul.f32 1.0, %v1114
          %v1116 = vxor.u32 %v1107, 2147483648
          %v1117 = vmul.f32 %v1116, 1.442695
          %v1118 = vpow.pop %v1117
          %v1119 = vadd.f32 %v1118, 1.0
          %v1120 = vrcp.pop %v1119
          %v1121 = vmul.f32 1.0, %v1120
          %v1122 = vtanh.pop %v1108
          %v1123 = vxor.u32 %v1109, 2147483648
          %v1124 = vmul.f32 %v1123, 1.442695
          %v1125 = vpow.pop %v1124
          %v1126 = vadd.f32 %v1125, 1.0
          %v1127 = vrcp.pop %v1126
          %v1128 = vmul.f32 1.0, %v1127
          %v1129 = vmul.f32 %v1121, %v858
          %v1130 = vmul.f32 %v1115, %v1122
          %v1131 = vadd.f32 %v1129, %v1130
          %v1132 = vtanh.pop %v1131
          %v1133 = vmul.f32 %v1128, %v1132
          %v1134 = vstv %s852
          %vm1135 = vcmp.gt.s32.totalorder %v851, %v1134
          %v1136 = vsel %vm1135, 1, 0
          %1137 = vset.pattern.permute.xlu0 0
          %1138 = vperm.xlu0 %1137, %v1136
          %v1139 = vpop.permute.xlu0 %1138
          %vm1140 = vcmp.eq.s32.totalorder %v1139, 1
          %v1141 = vsel %vm1140, %v1133, 0.0
          %v1142 = vpack.c.bf16 %v1141, %v1141
          %1143 = vst [vmem:[%s371] sm:$0xf] %v1142
          %v1144 = vsel %vm1140, %v1133, %v857
          %v1145 = vsel %vm1140, %v1131, %v858
          %s1146 = sadd.s32 %s852, 1
          %v1147 = vld [vmem:[#allocation2 + $0x20] sm:$0xff]
          %v1148 = vld [vmem:[#allocation2 + $0x28] sm:$0xff]
          %v1149 = vld [vmem:[#allocation2 + $0x30] sm:$0xff]
          %v1150 = vld [vmem:[#allocation2 + $0x38] sm:$0xff]
          %v1151 = vpack.c.bf16 %v1144, %v1144
          %1152 = vmatprep.subr.bf16.mxu0 %v961
          %1153 = vmatpush1.bf16.msra.mxu0 %v960
          %1154 = vmatprep.subr.bf16.mxu0 %v965
          %1155 = vmatpush1.bf16.msra.mxu0 %v964
          %1156 = vmatprep.subr.bf16.mxu0 %v969
          %1157 = vmatpush1.bf16.msra.mxu0 %v968
          %1158 = vmatprep.subr.bf16.mxu0 %v973
          %1159 = vmatpush1.bf16.msra.mxu0 %v972
          %1160 = vmatprep.subr.bf16.mxu0 %v977
          %1161 = vmatpush1.bf16.msra.mxu0 %v976
          %1162 = vmatprep.subr.bf16.mxu0 %v981
          %1163 = vmatpush1.bf16.msra.mxu0 %v980
          %1164 = vmatprep.subr.bf16.mxu0 %v985
          %1165 = vmatpush1.bf16.msra.mxu0 %v984
          %1166 = vmatprep.subr.bf16.mxu0 %v989
          %1167 = vmatpush1.bf16.msra.mxu0 %v988
          %1168 = vmatprep.subr.bf16.mxu0 0
          %1169 = vmatpush1.bf16.msra.mxu0 0
          %1170 = vmatprep.subr.bf16.mxu0 0
          %1171 = vmatpush1.bf16.msra.mxu0 0
          %1172 = vmatprep.subr.bf16.mxu0 0
          %1173 = vmatpush1.bf16.msra.mxu0 0
          %1174 = vmatprep.subr.bf16.mxu0 0
          %1175 = vmatpush1.bf16.msra.mxu0 0
          %1176 = vmatprep.subr.bf16.mxu0 0
          %1177 = vmatpush1.bf16.msra.mxu0 0
          %1178 = vmatprep.subr.bf16.mxu0 0
          %1179 = vmatpush1.bf16.msra.mxu0 0
          %1180 = vmatprep.subr.bf16.mxu0 0
          %1181 = vmatpush1.bf16.msra.mxu0 0
          %1182 = vmatprep.subr.bf16.mxu0 0
          %1183 = vmatpush1.bf16.msra.mxu0 0
          %1184 = vmatprep.mubr.bf16.mxu0 0
          %1185 = vmatmul.mubr.bf16.gmra.mrb[0].mxu0 %v1151
          %v1186 = vpop.f32.mrb[0].mxu0
          %v1187 = vadd.f32 0.0, %v1186
          %v1188 = vpop.f32.mrb[0].mxu0
          %v1189 = vadd.f32 0.0, %v1188
          %v1190 = vpop.f32.mrb[0].mxu0
          %v1191 = vpop.f32.mrb[0].mxu0
          %1192 = vdwg.mxu0
          %1193 = vmatprep.subr.bf16.mxu0 %v963
          %1194 = vmatpush1.bf16.msra.mxu0 %v962
          %1195 = vmatprep.subr.bf16.mxu0 %v967
          %1196 = vmatpush1.bf16.msra.mxu0 %v966
          %1197 = vmatprep.subr.bf16.mxu0 %v971
          %1198 = vmatpush1.bf16.msra.mxu0 %v970
          %1199 = vmatprep.subr.bf16.mxu0 %v975
          %1200 = vmatpush1.bf16.msra.mxu0 %v974
          %1201 = vmatprep.subr.bf16.mxu0 %v979
          %1202 = vmatpush1.bf16.msra.mxu0 %v978
          %1203 = vmatprep.subr.bf16.mxu0 %v983
          %1204 = vmatpush1.bf16.msra.mxu0 %v982
          %1205 = vmatprep.subr.bf16.mxu0 %v987
          %1206 = vmatpush1.bf16.msra.mxu0 %v986
          %1207 = vmatprep.subr.bf16.mxu0 %v991
          %1208 = vmatpush1.bf16.msra.mxu0 %v990
          %1209 = vmatprep.subr.bf16.mxu0 0
          %1210 = vmatpush1.bf16.msra.mxu0 0
          %1211 = vmatprep.subr.bf16.mxu0 0
          %1212 = vmatpush1.bf16.msra.mxu0 0
          %1213 = vmatprep.subr.bf16.mxu0 0
          %1214 = vmatpush1.bf16.msra.mxu0 0
          %1215 = vmatprep.subr.bf16.mxu0 0
          %1216 = vmatpush1.bf16.msra.mxu0 0
          %1217 = vmatprep.subr.bf16.mxu0 0
          %1218 = vmatpush1.bf16.msra.mxu0 0
          %1219 = vmatprep.subr.bf16.mxu0 0
          %1220 = vmatpush1.bf16.msra.mxu0 0
          %1221 = vmatprep.subr.bf16.mxu0 0
          %1222 = vmatpush1.bf16.msra.mxu0 0
          %1223 = vmatprep.subr.bf16.mxu0 0
          %1224 = vmatpush1.bf16.msra.mxu0 0
          %1225 = vmatprep.mubr.bf16.mxu0 0
          %1226 = vmatmul.mubr.bf16.gmra.mrb[0].mxu0 %v1151
          %v1227 = vpop.f32.mrb[0].mxu0
          %v1228 = vadd.f32 0.0, %v1227
          %v1229 = vpop.f32.mrb[0].mxu0
          %v1230 = vadd.f32 0.0, %v1229
          %v1231 = vpop.f32.mrb[0].mxu0
          %v1232 = vpop.f32.mrb[0].mxu0
          %1233 = vdwg.mxu0
          %v1234 = vadd.f32 %v1147, %v1187
          %v1235 = vadd.f32 %v1148, %v1189
          %v1236 = vadd.f32 %v1149, %v1228
          %v1237 = vadd.f32 %v1150, %v1230
          %v1238 = vxor.u32 %v1234, 2147483648
          %v1239 = vmul.f32 %v1238, 1.442695
          %v1240 = vpow.pop %v1239
          %v1241 = vadd.f32 %v1240, 1.0
          %v1242 = vrcp.pop %v1241
          %v1243 = vmul.f32 1.0, %v1242
          %v1244 = vxor.u32 %v1235, 2147483648
          %v1245 = vmul.f32 %v1244, 1.442695
          %v1246 = vpow.pop %v1245
          %v1247 = vadd.f32 %v1246, 1.0
          %v1248 = vrcp.pop %v1247
          %v1249 = vmul.f32 1.0, %v1248
          %v1250 = vtanh.pop %v1236
          %v1251 = vxor.u32 %v1237, 2147483648
          %v1252 = vmul.f32 %v1251, 1.442695
          %v1253 = vpow.pop %v1252
          %v1254 = vadd.f32 %v1253, 1.0
          %v1255 = vrcp.pop %v1254
          %v1256 = vmul.f32 1.0, %v1255
          %v1257 = vmul.f32 %v1249, %v1145
          %v1258 = vmul.f32 %v1243, %v1250
          %v1259 = vadd.f32 %v1257, %v1258
          %v1260 = vtanh.pop %v1259
          %v1261 = vmul.f32 %v1256, %v1260
          %v1262 = vstv %s1146
          %vm1263 = vcmp.gt.s32.totalorder %v851, %v1262
          %v1264 = vsel %vm1263, 1, 0
          %1265 = vset.pattern.permute.xlu0 0
          %1266 = vperm.xlu0 %1265, %v1264
          %v1267 = vpop.permute.xlu0 %1266
          %vm1268 = vcmp.eq.s32.totalorder %v1267, 1
          %v1269 = vsel %vm1268, %v1261, 0.0
          %v1270 = vpack.c.bf16 %v1269, %v1269
          %1271 = vst [vmem:[%s371 + $0x4] sm:$0xf] %v1270
          %v1272 = vsel %vm1268, %v1261, %v1144
          %v1273 = vsel %vm1268, %v1259, %v1145
          %s1274 = sadd.s32 %s852, 2
          %v1275 = vld [vmem:[#allocation2 + $0x40] sm:$0xff]
          %v1276 = vld [vmem:[#allocation2 + $0x48] sm:$0xff]
          %v1277 = vld [vmem:[#allocation2 + $0x50] sm:$0xff]
          %v1278 = vld [vmem:[#allocation2 + $0x58] sm:$0xff]
          %v1279 = vpack.c.bf16 %v1272, %v1272
          %1280 = vmatprep.subr.bf16.mxu0 %v961
          %1281 = vmatpush1.bf16.msra.mxu0 %v960
          %1282 = vmatprep.subr.bf16.mxu0 %v965
          %1283 = vmatpush1.bf16.msra.mxu0 %v964
          %1284 = vmatprep.subr.bf16.mxu0 %v969
          %1285 = vmatpush1.bf16.msra.mxu0 %v968
          %1286 = vmatprep.subr.bf16.mxu0 %v973
          %1287 = vmatpush1.bf16.msra.mxu0 %v972
          %1288 = vmatprep.subr.bf16.mxu0 %v977
          %1289 = vmatpush1.bf16.msra.mxu0 %v976
          %1290 = vmatprep.subr.bf16.mxu0 %v981
          %1291 = vmatpush1.bf16.msra.mxu0 %v980
          %1292 = vmatprep.subr.bf16.mxu0 %v985
          %1293 = vmatpush1.bf16.msra.mxu0 %v984
          %1294 = vmatprep.subr.bf16.mxu0 %v989
          %1295 = vmatpush1.bf16.msra.mxu0 %v988
          %1296 = vmatprep.subr.bf16.mxu0 0
          %1297 = vmatpush1.bf16.msra.mxu0 0
          %1298 = vmatprep.subr.bf16.mxu0 0
          %1299 = vmatpush1.bf16.msra.mxu0 0
          %1300 = vmatprep.subr.bf16.mxu0 0
          %1301 = vmatpush1.bf16.msra.mxu0 0
          %1302 = vmatprep.subr.bf16.mxu0 0
          %1303 = vmatpush1.bf16.msra.mxu0 0
          %1304 = vmatprep.subr.bf16.mxu0 0
          %1305 = vmatpush1.bf16.msra.mxu0 0
          %1306 = vmatprep.subr.bf16.mxu0 0
          %1307 = vmatpush1.bf16.msra.mxu0 0
          %1308 = vmatprep.subr.bf16.mxu0 0
          %1309 = vmatpush1.bf16.msra.mxu0 0
          %1310 = vmatprep.subr.bf16.mxu0 0
          %1311 = vmatpush1.bf16.msra.mxu0 0
          %1312 = vmatprep.mubr.bf16.mxu0 0
          %1313 = vmatmul.mubr.bf16.gmra.mrb[0].mxu0 %v1279
          %v1314 = vpop.f32.mrb[0].mxu0
          %v1315 = vadd.f32 0.0, %v1314
          %v1316 = vpop.f32.mrb[0].mxu0
          %v1317 = vadd.f32 0.0, %v1316
          %v1318 = vpop.f32.mrb[0].mxu0
          %v1319 = vpop.f32.mrb[0].mxu0
          %1320 = vdwg.mxu0
          %1321 = vmatprep.subr.bf16.mxu0 %v963
          %1322 = vmatpush1.bf16.msra.mxu0 %v962
          %1323 = vmatprep.subr.bf16.mxu0 %v967
          %1324 = vmatpush1.bf16.msra.mxu0 %v966
          %1325 = vmatprep.subr.bf16.mxu0 %v971
          %1326 = vmatpush1.bf16.msra.mxu0 %v970
          %1327 = vmatprep.subr.bf16.mxu0 %v975
          %1328 = vmatpush1.bf16.msra.mxu0 %v974
          %1329 = vmatprep.subr.bf16.mxu0 %v979
          %1330 = vmatpush1.bf16.msra.mxu0 %v978
          %1331 = vmatprep.subr.bf16.mxu0 %v983
          %1332 = vmatpush1.bf16.msra.mxu0 %v982
          %1333 = vmatprep.subr.bf16.mxu0 %v987
          %1334 = vmatpush1.bf16.msra.mxu0 %v986
          %1335 = vmatprep.subr.bf16.mxu0 %v991
          %1336 = vmatpush1.bf16.msra.mxu0 %v990
          %1337 = vmatprep.subr.bf16.mxu0 0
          %1338 = vmatpush1.bf16.msra.mxu0 0
          %1339 = vmatprep.subr.bf16.mxu0 0
          %1340 = vmatpush1.bf16.msra.mxu0 0
          %1341 = vmatprep.subr.bf16.mxu0 0
          %1342 = vmatpush1.bf16.msra.mxu0 0
          %1343 = vmatprep.subr.bf16.mxu0 0
          %1344 = vmatpush1.bf16.msra.mxu0 0
          %1345 = vmatprep.subr.bf16.mxu0 0
          %1346 = vmatpush1.bf16.msra.mxu0 0
          %1347 = vmatprep.subr.bf16.mxu0 0
          %1348 = vmatpush1.bf16.msra.mxu0 0
          %1349 = vmatprep.subr.bf16.mxu0 0
          %1350 = vmatpush1.bf16.msra.mxu0 0
          %1351 = vmatprep.subr.bf16.mxu0 0
          %1352 = vmatpush1.bf16.msra.mxu0 0
          %1353 = vmatprep.mubr.bf16.mxu0 0
          %1354 = vmatmul.mubr.bf16.gmra.mrb[0].mxu0 %v1279
          %v1355 = vpop.f32.mrb[0].mxu0
          %v1356 = vadd.f32 0.0, %v1355
          %v1357 = vpop.f32.mrb[0].mxu0
          %v1358 = vadd.f32 0.0, %v1357
          %v1359 = vpop.f32.mrb[0].mxu0
          %v1360 = vpop.f32.mrb[0].mxu0
          %1361 = vdwg.mxu0
          %v1362 = vadd.f32 %v1275, %v1315
          %v1363 = vadd.f32 %v1276, %v1317
          %v1364 = vadd.f32 %v1277, %v1356
          %v1365 = vadd.f32 %v1278, %v1358
          %v1366 = vxor.u32 %v1362, 2147483648
          %v1367 = vmul.f32 %v1366, 1.442695
          %v1368 = vpow.pop %v1367
          %v1369 = vadd.f32 %v1368, 1.0
          %v1370 = vrcp.pop %v1369
          %v1371 = vmul.f32 1.0, %v1370
          %v1372 = vxor.u32 %v1363, 2147483648
          %v1373 = vmul.f32 %v1372, 1.442695
          %v1374 = vpow.pop %v1373
          %v1375 = vadd.f32 %v1374, 1.0
          %v1376 = vrcp.pop %v1375
          %v1377 = vmul.f32 1.0, %v1376
          %v1378 = vtanh.pop %v1364
          %v1379 = vxor.u32 %v1365, 2147483648
          %v1380 = vmul.f32 %v1379, 1.442695
          %v1381 = vpow.pop %v1380
          %v1382 = vadd.f32 %v1381, 1.0
          %v1383 = vrcp.pop %v1382
          %v1384 = vmul.f32 1.0, %v1383
          %v1385 = vmul.f32 %v1377, %v1273
          %v1386 = vmul.f32 %v1371, %v1378
          %v1387 = vadd.f32 %v1385, %v1386
          %v1388 = vtanh.pop %v1387
          %v1389 = vmul.f32 %v1384, %v1388
          %v1390 = vstv %s1274
          %vm1391 = vcmp.gt.s32.totalorder %v851, %v1390
          %v1392 = vsel %vm1391, 1, 0
          %1393 = vset.pattern.permute.xlu0 0
          %1394 = vperm.xlu0 %1393, %v1392
          %v1395 = vpop.permute.xlu0 %1394
          %vm1396 = vcmp.eq.s32.totalorder %v1395, 1
          %v1397 = vsel %vm1396, %v1389, 0.0
          %v1398 = vpack.c.bf16 %v1397, %v1397
          %1399 = vst [vmem:[%s371 + $0x8] sm:$0xf] %v1398
          %v1400 = vsel %vm1396, %v1389, %v1272
          %v1401 = vsel %vm1396, %v1387, %v1273
          %s1402 = sadd.s32 %s852, 3
          %v1403 = vld [vmem:[#allocation2 + $0x60] sm:$0xff]
          %v1404 = vld [vmem:[#allocation2 + $0x68] sm:$0xff]
          %v1405 = vld [vmem:[#allocation2 + $0x70] sm:$0xff]
          %v1406 = vld [vmem:[#allocation2 + $0x78] sm:$0xff]
          %v1407 = vpack.c.bf16 %v1400, %v1400
          %1408 = vmatprep.subr.bf16.mxu0 %v961
          %1409 = vmatpush1.bf16.msra.mxu0 %v960
          %1410 = vmatprep.subr.bf16.mxu0 %v965
          %1411 = vmatpush1.bf16.msra.mxu0 %v964
          %1412 = vmatprep.subr.bf16.mxu0 %v969
          %1413 = vmatpush1.bf16.msra.mxu0 %v968
          %1414 = vmatprep.subr.bf16.mxu0 %v973
          %1415 = vmatpush1.bf16.msra.mxu0 %v972
          %1416 = vmatprep.subr.bf16.mxu0 %v977
          %1417 = vmatpush1.bf16.msra.mxu0 %v976
          %1418 = vmatprep.subr.bf16.mxu0 %v981
          %1419 = vmatpush1.bf16.msra.mxu0 %v980
          %1420 = vmatprep.subr.bf16.mxu0 %v985
          %1421 = vmatpush1.bf16.msra.mxu0 %v984
          %1422 = vmatprep.subr.bf16.mxu0 %v989
          %1423 = vmatpush1.bf16.msra.mxu0 %v988
          %1424 = vmatprep.subr.bf16.mxu0 0
          %1425 = vmatpush1.bf16.msra.mxu0 0
          %1426 = vmatprep.subr.bf16.mxu0 0
          %1427 = vmatpush1.bf16.msra.mxu0 0
          %1428 = vmatprep.subr.bf16.mxu0 0
          %1429 = vmatpush1.bf16.msra.mxu0 0
          %1430 = vmatprep.subr.bf16.mxu0 0
          %1431 = vmatpush1.bf16.msra.mxu0 0
          %1432 = vmatprep.subr.bf16.mxu0 0
          %1433 = vmatpush1.bf16.msra.mxu0 0
          %1434 = vmatprep.subr.bf16.mxu0 0
          %1435 = vmatpush1.bf16.msra.mxu0 0
          %1436 = vmatprep.subr.bf16.mxu0 0
          %1437 = vmatpush1.bf16.msra.mxu0 0
          %1438 = vmatprep.subr.bf16.mxu0 0
          %1439 = vmatpush1.bf16.msra.mxu0 0
          %1440 = vmatprep.mubr.bf16.mxu0 0
          %1441 = vmatmul.mubr.bf16.gmra.mrb[0].mxu0 %v1407
          %v1442 = vpop.f32.mrb[0].mxu0
          %v1443 = vadd.f32 0.0, %v1442
          %v1444 = vpop.f32.mrb[0].mxu0
          %v1445 = vadd.f32 0.0, %v1444
          %v1446 = vpop.f32.mrb[0].mxu0
          %v1447 = vpop.f32.mrb[0].mxu0
          %1448 = vdwg.mxu0
          %1449 = vmatprep.subr.bf16.mxu0 %v963
          %1450 = vmatpush1.bf16.msra.mxu0 %v962
          %1451 = vmatprep.subr.bf16.mxu0 %v967
          %1452 = vmatpush1.bf16.msra.mxu0 %v966
          %1453 = vmatprep.subr.bf16.mxu0 %v971
          %1454 = vmatpush1.bf16.msra.mxu0 %v970
          %1455 = vmatprep.subr.bf16.mxu0 %v975
          %1456 = vmatpush1.bf16.msra.mxu0 %v974
          %1457 = vmatprep.subr.bf16.mxu0 %v979
          %1458 = vmatpush1.bf16.msra.mxu0 %v978
          %1459 = vmatprep.subr.bf16.mxu0 %v983
          %1460 = vmatpush1.bf16.msra.mxu0 %v982
          %1461 = vmatprep.subr.bf16.mxu0 %v987
          %1462 = vmatpush1.bf16.msra.mxu0 %v986
          %1463 = vmatprep.subr.bf16.mxu0 %v991
          %1464 = vmatpush1.bf16.msra.mxu0 %v990
          %1465 = vmatprep.subr.bf16.mxu0 0
          %1466 = vmatpush1.bf16.msra.mxu0 0
          %1467 = vmatprep.subr.bf16.mxu0 0
          %1468 = vmatpush1.bf16.msra.mxu0 0
          %1469 = vmatprep.subr.bf16.mxu0 0
          %1470 = vmatpush1.bf16.msra.mxu0 0
          %1471 = vmatprep.subr.bf16.mxu0 0
          %1472 = vmatpush1.bf16.msra.mxu0 0
          %1473 = vmatprep.subr.bf16.mxu0 0
          %1474 = vmatpush1.bf16.msra.mxu0 0
          %1475 = vmatprep.subr.bf16.mxu0 0
          %1476 = vmatpush1.bf16.msra.mxu0 0
          %1477 = vmatprep.subr.bf16.mxu0 0
          %1478 = vmatpush1.bf16.msra.mxu0 0
          %1479 = vmatprep.subr.bf16.mxu0 0
          %1480 = vmatpush1.bf16.msra.mxu0 0
          %1481 = vmatprep.mubr.bf16.mxu0 0
          %1482 = vmatmul.mubr.bf16.gmra.mrb[0].mxu0 %v1407
          %v1483 = vpop.f32.mrb[0].mxu0
          %v1484 = vadd.f32 0.0, %v1483
          %v1485 = vpop.f32.mrb[0].mxu0
          %v1486 = vadd.f32 0.0, %v1485
          %v1487 = vpop.f32.mrb[0].mxu0
          %v1488 = vpop.f32.mrb[0].mxu0
          %1489 = vdwg.mxu0
          %v1490 = vadd.f32 %v1403, %v1443
          %v1491 = vadd.f32 %v1404, %v1445
          %v1492 = vadd.f32 %v1405, %v1484
          %v1493 = vadd.f32 %v1406, %v1486
          %v1494 = vxor.u32 %v1490, 2147483648
          %v1495 = vmul.f32 %v1494, 1.442695
          %v1496 = vpow.pop %v1495
          %v1497 = vadd.f32 %v1496, 1.0
          %v1498 = vrcp.pop %v1497
          %v1499 = vmul.f32 1.0, %v1498
          %v1500 = vxor.u32 %v1491, 2147483648
          %v1501 = vmul.f32 %v1500, 1.442695
          %v1502 = vpow.pop %v1501
          %v1503 = vadd.f32 %v1502, 1.0
          %v1504 = vrcp.pop %v1503
          %v1505 = vmul.f32 1.0, %v1504
          %v1506 = vtanh.pop %v1492
          %v1507 = vxor.u32 %v1493, 2147483648
          %v1508 = vmul.f32 %v1507, 1.442695
          %v1509 = vpow.pop %v1508
          %v1510 = vadd.f32 %v1509, 1.0
          %v1511 = vrcp.pop %v1510
          %v1512 = vmul.f32 1.0, %v1511
          %v1513 = vmul.f32 %v1505, %v1401
          %v1514 = vmul.f32 %v1499, %v1506
          %v1515 = vadd.f32 %v1513, %v1514
          %v1516 = vtanh.pop %v1515
          %v1517 = vmul.f32 %v1512, %v1516
          %v1518 = vstv %s1402
          %vm1519 = vcmp.gt.s32.totalorder %v851, %v1518
          %v1520 = vsel %vm1519, 1, 0
          %1521 = vset.pattern.permute.xlu0 0
          %1522 = vperm.xlu0 %1521, %v1520
          %v1523 = vpop.permute.xlu0 %1522
          %vm1524 = vcmp.eq.s32.totalorder %v1523, 1
          %v1525 = vsel %vm1524, %v1517, 0.0
          %v1526 = vpack.c.bf16 %v1525, %v1525
          %1527 = vst [vmem:[%s371 + $0xc] sm:$0xf] %v1526
          %v1528 = vsel %vm1524, %v1517, %v1400
          %v1529 = vsel %vm1524, %v1515, %v1401
          %s1530 = sadd.s32 %s852, 4
          %v1531 = vld [vmem:[#allocation2 + $0x80] sm:$0xff]
          %v1532 = vld [vmem:[#allocation2 + $0x88] sm:$0xff]
          %v1533 = vld [vmem:[#allocation2 + $0x90] sm:$0xff]
          %v1534 = vld [vmem:[#allocation2 + $0x98] sm:$0xff]
          %v1535 = vpack.c.bf16 %v1528, %v1528
          %1536 = vmatprep.subr.bf16.mxu0 %v961
          %1537 = vmatpush1.bf16.msra.mxu0 %v960
          %1538 = vmatprep.subr.bf16.mxu0 %v965
          %1539 = vmatpush1.bf16.msra.mxu0 %v964
          %1540 = vmatprep.subr.bf16.mxu0 %v969
          %1541 = vmatpush1.bf16.msra.mxu0 %v968
          %1542 = vmatprep.subr.bf16.mxu0 %v973
          %1543 = vmatpush1.bf16.msra.mxu0 %v972
          %1544 = vmatprep.subr.bf16.mxu0 %v977
          %1545 = vmatpush1.bf16.msra.mxu0 %v976
          %1546 = vmatprep.subr.bf16.mxu0 %v981
          %1547 = vmatpush1.bf16.msra.mxu0 %v980
          %1548 = vmatprep.subr.bf16.mxu0 %v985
          %1549 = vmatpush1.bf16.msra.mxu0 %v984
          %1550 = vmatprep.subr.bf16.mxu0 %v989
          %1551 = vmatpush1.bf16.msra.mxu0 %v988
          %1552 = vmatprep.subr.bf16.mxu0 0
          %1553 = vmatpush1.bf16.msra.mxu0 0
          %1554 = vmatprep.subr.bf16.mxu0 0
          %1555 = vmatpush1.bf16.msra.mxu0 0
          %1556 = vmatprep.subr.bf16.mxu0 0
          %1557 = vmatpush1.bf16.msra.mxu0 0
          %1558 = vmatprep.subr.bf16.mxu0 0
          %1559 = vmatpush1.bf16.msra.mxu0 0
          %1560 = vmatprep.subr.bf16.mxu0 0
          %1561 = vmatpush1.bf16.msra.mxu0 0
          %1562 = vmatprep.subr.bf16.mxu0 0
          %1563 = vmatpush1.bf16.msra.mxu0 0
          %1564 = vmatprep.subr.bf16.mxu0 0
          %1565 = vmatpush1.bf16.msra.mxu0 0
          %1566 = vmatprep.subr.bf16.mxu0 0
          %1567 = vmatpush1.bf16.msra.mxu0 0
          %1568 = vmatprep.mubr.bf16.mxu0 0
          %1569 = vmatmul.mubr.bf16.gmra.mrb[0].mxu0 %v1535
          %v1570 = vpop.f32.mrb[0].mxu0
          %v1571 = vadd.f32 0.0, %v1570
          %v1572 = vpop.f32.mrb[0].mxu0
          %v1573 = vadd.f32 0.0, %v1572
          %v1574 = vpop.f32.mrb[0].mxu0
          %v1575 = vpop.f32.mrb[0].mxu0
          %1576 = vdwg.mxu0
          %1577 = vmatprep.subr.bf16.mxu0 %v963
          %1578 = vmatpush1.bf16.msra.mxu0 %v962
          %1579 = vmatprep.subr.bf16.mxu0 %v967
          %1580 = vmatpush1.bf16.msra.mxu0 %v966
          %1581 = vmatprep.subr.bf16.mxu0 %v971
          %1582 = vmatpush1.bf16.msra.mxu0 %v970
          %1583 = vmatprep.subr.bf16.mxu0 %v975
          %1584 = vmatpush1.bf16.msra.mxu0 %v974
          %1585 = vmatprep.subr.bf16.mxu0 %v979
          %1586 = vmatpush1.bf16.msra.mxu0 %v978
          %1587 = vmatprep.subr.bf16.mxu0 %v983
          %1588 = vmatpush1.bf16.msra.mxu0 %v982
          %1589 = vmatprep.subr.bf16.mxu0 %v987
          %1590 = vmatpush1.bf16.msra.mxu0 %v986
          %1591 = vmatprep.subr.bf16.mxu0 %v991
          %1592 = vmatpush1.bf16.msra.mxu0 %v990
          %1593 = vmatprep.subr.bf16.mxu0 0
          %1594 = vmatpush1.bf16.msra.mxu0 0
          %1595 = vmatprep.subr.bf16.mxu0 0
          %1596 = vmatpush1.bf16.msra.mxu0 0
          %1597 = vmatprep.subr.bf16.mxu0 0
          %1598 = vmatpush1.bf16.msra.mxu0 0
          %1599 = vmatprep.subr.bf16.mxu0 0
          %1600 = vmatpush1.bf16.msra.mxu0 0
          %1601 = vmatprep.subr.bf16.mxu0 0
          %1602 = vmatpush1.bf16.msra.mxu0 0
          %1603 = vmatprep.subr.bf16.mxu0 0
          %1604 = vmatpush1.bf16.msra.mxu0 0
          %1605 = vmatprep.subr.bf16.mxu0 0
          %1606 = vmatpush1.bf16.msra.mxu0 0
          %1607 = vmatprep.subr.bf16.mxu0 0
          %1608 = vmatpush1.bf16.msra.mxu0 0
          %1609 = vmatprep.mubr.bf16.mxu0 0
          %1610 = vmatmul.mubr.bf16.gmra.mrb[0].mxu0 %v1535
          %v1611 = vpop.f32.mrb[0].mxu0
          %v1612 = vadd.f32 0.0, %v1611
          %v1613 = vpop.f32.mrb[0].mxu0
          %v1614 = vadd.f32 0.0, %v1613
          %v1615 = vpop.f32.mrb[0].mxu0
          %v1616 = vpop.f32.mrb[0].mxu0
          %1617 = vdwg.mxu0
          %v1618 = vadd.f32 %v1531, %v1571
          %v1619 = vadd.f32 %v1532, %v1573
          %v1620 = vadd.f32 %v1533, %v1612
          %v1621 = vadd.f32 %v1534, %v1614
          %v1622 = vxor.u32 %v1618, 2147483648
          %v1623 = vmul.f32 %v1622, 1.442695
          %v1624 = vpow.pop %v1623
          %v1625 = vadd.f32 %v1624, 1.0
          %v1626 = vrcp.pop %v1625
          %v1627 = vmul.f32 1.0, %v1626
          %v1628 = vxor.u32 %v1619, 2147483648
          %v1629 = vmul.f32 %v1628, 1.442695
          %v1630 = vpow.pop %v1629
          %v1631 = vadd.f32 %v1630, 1.0
          %v1632 = vrcp.pop %v1631
          %v1633 = vmul.f32 1.0, %v1632
          %v1634 = vtanh.pop %v1620
          %v1635 = vxor.u32 %v1621, 2147483648
          %v1636 = vmul.f32 %v1635, 1.442695
          %v1637 = vpow.pop %v1636
          %v1638 = vadd.f32 %v1637, 1.0
          %v1639 = vrcp.pop %v1638
          %v1640 = vmul.f32 1.0, %v1639
          %v1641 = vmul.f32 %v1633, %v1529
          %v1642 = vmul.f32 %v1627, %v1634
          %v1643 = vadd.f32 %v1641, %v1642
          %v1644 = vtanh.pop %v1643
          %v1645 = vmul.f32 %v1640, %v1644
          %v1646 = vstv %s1530
          %vm1647 = vcmp.gt.s32.totalorder %v851, %v1646
          %v1648 = vsel %vm1647, 1, 0
          %1649 = vset.pattern.permute.xlu0 0
          %1650 = vperm.xlu0 %1649, %v1648
          %v1651 = vpop.permute.xlu0 %1650
          %vm1652 = vcmp.eq.s32.totalorder %v1651, 1
          %v1653 = vsel %vm1652, %v1645, 0.0
          %v1654 = vpack.c.bf16 %v1653, %v1653
          %1655 = vst [vmem:[%s371 + $0x10] sm:$0xf] %v1654
          %v1656 = vsel %vm1652, %v1645, %v1528
          %v1657 = vsel %vm1652, %v1643, %v1529
          %s1658 = sadd.s32 %s852, 5
          %v1659 = vld [vmem:[#allocation2 + $0xa0] sm:$0xff]
          %v1660 = vld [vmem:[#allocation2 + $0xa8] sm:$0xff]
          %v1661 = vld [vmem:[#allocation2 + $0xb0] sm:$0xff]
          %v1662 = vld [vmem:[#allocation2 + $0xb8] sm:$0xff]
          %v1663 = vpack.c.bf16 %v1656, %v1656
          %1664 = vmatprep.subr.bf16.mxu0 %v961
          %1665 = vmatpush1.bf16.msra.mxu0 %v960
          %1666 = vmatprep.subr.bf16.mxu0 %v965
          %1667 = vmatpush1.bf16.msra.mxu0 %v964
          %1668 = vmatprep.subr.bf16.mxu0 %v969
          %1669 = vmatpush1.bf16.msra.mxu0 %v968
          %1670 = vmatprep.subr.bf16.mxu0 %v973
          %1671 = vmatpush1.bf16.msra.mxu0 %v972
          %1672 = vmatprep.subr.bf16.mxu0 %v977
          %1673 = vmatpush1.bf16.msra.mxu0 %v976
          %1674 = vmatprep.subr.bf16.mxu0 %v981
          %1675 = vmatpush1.bf16.msra.mxu0 %v980
          %1676 = vmatprep.subr.bf16.mxu0 %v985
          %1677 = vmatpush1.bf16.msra.mxu0 %v984
          %1678 = vmatprep.subr.bf16.mxu0 %v989
          %1679 = vmatpush1.bf16.msra.mxu0 %v988
          %1680 = vmatprep.subr.bf16.mxu0 0
          %1681 = vmatpush1.bf16.msra.mxu0 0
          %1682 = vmatprep.subr.bf16.mxu0 0
          %1683 = vmatpush1.bf16.msra.mxu0 0
          %1684 = vmatprep.subr.bf16.mxu0 0
          %1685 = vmatpush1.bf16.msra.mxu0 0
          %1686 = vmatprep.subr.bf16.mxu0 0
          %1687 = vmatpush1.bf16.msra.mxu0 0
          %1688 = vmatprep.subr.bf16.mxu0 0
          %1689 = vmatpush1.bf16.msra.mxu0 0
          %1690 = vmatprep.subr.bf16.mxu0 0
          %1691 = vmatpush1.bf16.msra.mxu0 0
          %1692 = vmatprep.subr.bf16.mxu0 0
          %1693 = vmatpush1.bf16.msra.mxu0 0
          %1694 = vmatprep.subr.bf16.mxu0 0
          %1695 = vmatpush1.bf16.msra.mxu0 0
          %1696 = vmatprep.mubr.bf16.mxu0 0
          %1697 = vmatmul.mubr.bf16.gmra.mrb[0].mxu0 %v1663
          %v1698 = vpop.f32.mrb[0].mxu0
          %v1699 = vadd.f32 0.0, %v1698
          %v1700 = vpop.f32.mrb[0].mxu0
          %v1701 = vadd.f32 0.0, %v1700
          %v1702 = vpop.f32.mrb[0].mxu0
          %v1703 = vpop.f32.mrb[0].mxu0
          %1704 = vdwg.mxu0
          %1705 = vmatprep.subr.bf16.mxu0 %v963
          %1706 = vmatpush1.bf16.msra.mxu0 %v962
          %1707 = vmatprep.subr.bf16.mxu0 %v967
          %1708 = vmatpush1.bf16.msra.mxu0 %v966
          %1709 = vmatprep.subr.bf16.mxu0 %v971
          %1710 = vmatpush1.bf16.msra.mxu0 %v970
          %1711 = vmatprep.subr.bf16.mxu0 %v975
          %1712 = vmatpush1.bf16.msra.mxu0 %v974
          %1713 = vmatprep.subr.bf16.mxu0 %v979
          %1714 = vmatpush1.bf16.msra.mxu0 %v978
          %1715 = vmatprep.subr.bf16.mxu0 %v983
          %1716 = vmatpush1.bf16.msra.mxu0 %v982
          %1717 = vmatprep.subr.bf16.mxu0 %v987
          %1718 = vmatpush1.bf16.msra.mxu0 %v986
          %1719 = vmatprep.subr.bf16.mxu0 %v991
          %1720 = vmatpush1.bf16.msra.mxu0 %v990
          %1721 = vmatprep.subr.bf16.mxu0 0
          %1722 = vmatpush1.bf16.msra.mxu0 0
          %1723 = vmatprep.subr.bf16.mxu0 0
          %1724 = vmatpush1.bf16.msra.mxu0 0
          %1725 = vmatprep.subr.bf16.mxu0 0
          %1726 = vmatpush1.bf16.msra.mxu0 0
          %1727 = vmatprep.subr.bf16.mxu0 0
          %1728 = vmatpush1.bf16.msra.mxu0 0
          %1729 = vmatprep.subr.bf16.mxu0 0
          %1730 = vmatpush1.bf16.msra.mxu0 0
          %1731 = vmatprep.subr.bf16.mxu0 0
          %1732 = vmatpush1.bf16.msra.mxu0 0
          %1733 = vmatprep.subr.bf16.mxu0 0
          %1734 = vmatpush1.bf16.msra.mxu0 0
          %1735 = vmatprep.subr.bf16.mxu0 0
          %1736 = vmatpush1.bf16.msra.mxu0 0
          %1737 = vmatprep.mubr.bf16.mxu0 0
          %1738 = vmatmul.mubr.bf16.gmra.mrb[0].mxu0 %v1663
          %v1739 = vpop.f32.mrb[0].mxu0
          %v1740 = vadd.f32 0.0, %v1739
          %v1741 = vpop.f32.mrb[0].mxu0
          %v1742 = vadd.f32 0.0, %v1741
          %v1743 = vpop.f32.mrb[0].mxu0
          %v1744 = vpop.f32.mrb[0].mxu0
          %1745 = vdwg.mxu0
          %v1746 = vadd.f32 %v1659, %v1699
          %v1747 = vadd.f32 %v1660, %v1701
          %v1748 = vadd.f32 %v1661, %v1740
          %v1749 = vadd.f32 %v1662, %v1742
          %v1750 = vxor.u32 %v1746, 2147483648
          %v1751 = vmul.f32 %v1750, 1.442695
          %v1752 = vpow.pop %v1751
          %v1753 = vadd.f32 %v1752, 1.0
          %v1754 = vrcp.pop %v1753
          %v1755 = vmul.f32 1.0, %v1754
          %v1756 = vxor.u32 %v1747, 2147483648
          %v1757 = vmul.f32 %v1756, 1.442695
          %v1758 = vpow.pop %v1757
          %v1759 = vadd.f32 %v1758, 1.0
          %v1760 = vrcp.pop %v1759
          %v1761 = vmul.f32 1.0, %v1760
          %v1762 = vtanh.pop %v1748
          %v1763 = vxor.u32 %v1749, 2147483648
          %v1764 = vmul.f32 %v1763, 1.442695
          %v1765 = vpow.pop %v1764
          %v1766 = vadd.f32 %v1765, 1.0
          %v1767 = vrcp.pop %v1766
          %v1768 = vmul.f32 1.0, %v1767
          %v1769 = vmul.f32 %v1761, %v1657
          %v1770 = vmul.f32 %v1755, %v1762
          %v1771 = vadd.f32 %v1769, %v1770
          %v1772 = vtanh.pop %v1771
          %v1773 = vmul.f32 %v1768, %v1772
          %v1774 = vstv %s1658
          %vm1775 = vcmp.gt.s32.totalorder %v851, %v1774
          %v1776 = vsel %vm1775, 1, 0
          %1777 = vset.pattern.permute.xlu0 0
          %1778 = vperm.xlu0 %1777, %v1776
          %v1779 = vpop.permute.xlu0 %1778
          %vm1780 = vcmp.eq.s32.totalorder %v1779, 1
          %v1781 = vsel %vm1780, %v1773, 0.0
          %v1782 = vpack.c.bf16 %v1781, %v1781
          %1783 = vst [vmem:[%s371 + $0x14] sm:$0xf] %v1782
          %v1784 = vsel %vm1780, %v1773, %v1656
          %v1785 = vsel %vm1780, %v1771, %v1657
          %s1786 = sadd.s32 %s852, 6
          %v1787 = vld [vmem:[#allocation2 + $0xc0] sm:$0xff]
          %v1788 = vld [vmem:[#allocation2 + $0xc8] sm:$0xff]
          %v1789 = vld [vmem:[#allocation2 + $0xd0] sm:$0xff]
          %v1790 = vld [vmem:[#allocation2 + $0xd8] sm:$0xff]
          %v1791 = vpack.c.bf16 %v1784, %v1784
          %1792 = vmatprep.subr.bf16.mxu0 %v961
          %1793 = vmatpush1.bf16.msra.mxu0 %v960
          %1794 = vmatprep.subr.bf16.mxu0 %v965
          %1795 = vmatpush1.bf16.msra.mxu0 %v964
          %1796 = vmatprep.subr.bf16.mxu0 %v969
          %1797 = vmatpush1.bf16.msra.mxu0 %v968
          %1798 = vmatprep.subr.bf16.mxu0 %v973
          %1799 = vmatpush1.bf16.msra.mxu0 %v972
          %1800 = vmatprep.subr.bf16.mxu0 %v977
          %1801 = vmatpush1.bf16.msra.mxu0 %v976
          %1802 = vmatprep.subr.bf16.mxu0 %v981
          %1803 = vmatpush1.bf16.msra.mxu0 %v980
          %1804 = vmatprep.subr.bf16.mxu0 %v985
          %1805 = vmatpush1.bf16.msra.mxu0 %v984
          %1806 = vmatprep.subr.bf16.mxu0 %v989
          %1807 = vmatpush1.bf16.msra.mxu0 %v988
          %1808 = vmatprep.subr.bf16.mxu0 0
          %1809 = vmatpush1.bf16.msra.mxu0 0
          %1810 = vmatprep.subr.bf16.mxu0 0
          %1811 = vmatpush1.bf16.msra.mxu0 0
          %1812 = vmatprep.subr.bf16.mxu0 0
          %1813 = vmatpush1.bf16.msra.mxu0 0
          %1814 = vmatprep.subr.bf16.mxu0 0
          %1815 = vmatpush1.bf16.msra.mxu0 0
          %1816 = vmatprep.subr.bf16.mxu0 0
          %1817 = vmatpush1.bf16.msra.mxu0 0
          %1818 = vmatprep.subr.bf16.mxu0 0
          %1819 = vmatpush1.bf16.msra.mxu0 0
          %1820 = vmatprep.subr.bf16.mxu0 0
          %1821 = vmatpush1.bf16.msra.mxu0 0
          %1822 = vmatprep.subr.bf16.mxu0 0
          %1823 = vmatpush1.bf16.msra.mxu0 0
          %1824 = vmatprep.mubr.bf16.mxu0 0
          %1825 = vmatmul.mubr.bf16.gmra.mrb[0].mxu0 %v1791
          %v1826 = vpop.f32.mrb[0].mxu0
          %v1827 = vadd.f32 0.0, %v1826
          %v1828 = vpop.f32.mrb[0].mxu0
          %v1829 = vadd.f32 0.0, %v1828
          %v1830 = vpop.f32.mrb[0].mxu0
          %v1831 = vpop.f32.mrb[0].mxu0
          %1832 = vdwg.mxu0
          %1833 = vmatprep.subr.bf16.mxu0 %v963
          %1834 = vmatpush1.bf16.msra.mxu0 %v962
          %1835 = vmatprep.subr.bf16.mxu0 %v967
          %1836 = vmatpush1.bf16.msra.mxu0 %v966
          %1837 = vmatprep.subr.bf16.mxu0 %v971
          %1838 = vmatpush1.bf16.msra.mxu0 %v970
          %1839 = vmatprep.subr.bf16.mxu0 %v975
          %1840 = vmatpush1.bf16.msra.mxu0 %v974
          %1841 = vmatprep.subr.bf16.mxu0 %v979
          %1842 = vmatpush1.bf16.msra.mxu0 %v978
          %1843 = vmatprep.subr.bf16.mxu0 %v983
          %1844 = vmatpush1.bf16.msra.mxu0 %v982
          %1845 = vmatprep.subr.bf16.mxu0 %v987
          %1846 = vmatpush1.bf16.msra.mxu0 %v986
          %1847 = vmatprep.subr.bf16.mxu0 %v991
          %1848 = vmatpush1.bf16.msra.mxu0 %v990
          %1849 = vmatprep.subr.bf16.mxu0 0
          %1850 = vmatpush1.bf16.msra.mxu0 0
          %1851 = vmatprep.subr.bf16.mxu0 0
          %1852 = vmatpush1.bf16.msra.mxu0 0
          %1853 = vmatprep.subr.bf16.mxu0 0
          %1854 = vmatpush1.bf16.msra.mxu0 0
          %1855 = vmatprep.subr.bf16.mxu0 0
          %1856 = vmatpush1.bf16.msra.mxu0 0
          %1857 = vmatprep.subr.bf16.mxu0 0
          %1858 = vmatpush1.bf16.msra.mxu0 0
          %1859 = vmatprep.subr.bf16.mxu0 0
          %1860 = vmatpush1.bf16.msra.mxu0 0
          %1861 = vmatprep.subr.bf16.mxu0 0
          %1862 = vmatpush1.bf16.msra.mxu0 0
          %1863 = vmatprep.subr.bf16.mxu0 0
          %1864 = vmatpush1.bf16.msra.mxu0 0
          %1865 = vmatprep.mubr.bf16.mxu0 0
          %1866 = vmatmul.mubr.bf16.gmra.mrb[0].mxu0 %v1791
          %v1867 = vpop.f32.mrb[0].mxu0
          %v1868 = vadd.f32 0.0, %v1867
          %v1869 = vpop.f32.mrb[0].mxu0
          %v1870 = vadd.f32 0.0, %v1869
          %v1871 = vpop.f32.mrb[0].mxu0
          %v1872 = vpop.f32.mrb[0].mxu0
          %1873 = vdwg.mxu0
          %v1874 = vadd.f32 %v1787, %v1827
          %v1875 = vadd.f32 %v1788, %v1829
          %v1876 = vadd.f32 %v1789, %v1868
          %v1877 = vadd.f32 %v1790, %v1870
          %v1878 = vxor.u32 %v1874, 2147483648
          %v1879 = vmul.f32 %v1878, 1.442695
          %v1880 = vpow.pop %v1879
          %v1881 = vadd.f32 %v1880, 1.0
          %v1882 = vrcp.pop %v1881
          %v1883 = vmul.f32 1.0, %v1882
          %v1884 = vxor.u32 %v1875, 2147483648
          %v1885 = vmul.f32 %v1884, 1.442695
          %v1886 = vpow.pop %v1885
          %v1887 = vadd.f32 %v1886, 1.0
          %v1888 = vrcp.pop %v1887
          %v1889 = vmul.f32 1.0, %v1888
          %v1890 = vtanh.pop %v1876
          %v1891 = vxor.u32 %v1877, 2147483648
          %v1892 = vmul.f32 %v1891, 1.442695
          %v1893 = vpow.pop %v1892
          %v1894 = vadd.f32 %v1893, 1.0
          %v1895 = vrcp.pop %v1894
          %v1896 = vmul.f32 1.0, %v1895
          %v1897 = vmul.f32 %v1889, %v1785
          %v1898 = vmul.f32 %v1883, %v1890
          %v1899 = vadd.f32 %v1897, %v1898
          %v1900 = vtanh.pop %v1899
          %v1901 = vmul.f32 %v1896, %v1900
          %v1902 = vstv %s1786
          %vm1903 = vcmp.gt.s32.totalorder %v851, %v1902
          %v1904 = vsel %vm1903, 1, 0
          %1905 = vset.pattern.permute.xlu0 0
          %1906 = vperm.xlu0 %1905, %v1904
          %v1907 = vpop.permute.xlu0 %1906
          %vm1908 = vcmp.eq.s32.totalorder %v1907, 1
          %v1909 = vsel %vm1908, %v1901, 0.0
          %v1910 = vpack.c.bf16 %v1909, %v1909
          %1911 = vst [vmem:[%s371 + $0x18] sm:$0xf] %v1910
          %v1912 = vsel %vm1908, %v1901, %v1784
          %v1913 = vsel %vm1908, %v1899, %v1785
          %s1914 = sadd.s32 %s852, 7
          %v1915 = vld [vmem:[#allocation2 + $0xe0] sm:$0xff]
          %v1916 = vld [vmem:[#allocation2 + $0xe8] sm:$0xff]
          %v1917 = vld [vmem:[#allocation2 + $0xf0] sm:$0xff]
          %v1918 = vld [vmem:[#allocation2 + $0xf8] sm:$0xff]
          %v1919 = vpack.c.bf16 %v1912, %v1912
          %1920 = vmatprep.subr.bf16.mxu0 %v961
          %1921 = vmatpush1.bf16.msra.mxu0 %v960
          %1922 = vmatprep.subr.bf16.mxu0 %v965
          %1923 = vmatpush1.bf16.msra.mxu0 %v964
          %1924 = vmatprep.subr.bf16.mxu0 %v969
          %1925 = vmatpush1.bf16.msra.mxu0 %v968
          %1926 = vmatprep.subr.bf16.mxu0 %v973
          %1927 = vmatpush1.bf16.msra.mxu0 %v972
          %1928 = vmatprep.subr.bf16.mxu0 %v977
          %1929 = vmatpush1.bf16.msra.mxu0 %v976
          %1930 = vmatprep.subr.bf16.mxu0 %v981
          %1931 = vmatpush1.bf16.msra.mxu0 %v980
          %1932 = vmatprep.subr.bf16.mxu0 %v985
          %1933 = vmatpush1.bf16.msra.mxu0 %v984
          %1934 = vmatprep.subr.bf16.mxu0 %v989
          %1935 = vmatpush1.bf16.msra.mxu0 %v988
          %1936 = vmatprep.subr.bf16.mxu0 0
          %1937 = vmatpush1.bf16.msra.mxu0 0
          %1938 = vmatprep.subr.bf16.mxu0 0
          %1939 = vmatpush1.bf16.msra.mxu0 0
          %1940 = vmatprep.subr.bf16.mxu0 0
          %1941 = vmatpush1.bf16.msra.mxu0 0
          %1942 = vmatprep.subr.bf16.mxu0 0
          %1943 = vmatpush1.bf16.msra.mxu0 0
          %1944 = vmatprep.subr.bf16.mxu0 0
          %1945 = vmatpush1.bf16.msra.mxu0 0
          %1946 = vmatprep.subr.bf16.mxu0 0
          %1947 = vmatpush1.bf16.msra.mxu0 0
          %1948 = vmatprep.subr.bf16.mxu0 0
          %1949 = vmatpush1.bf16.msra.mxu0 0
          %1950 = vmatprep.subr.bf16.mxu0 0
          %1951 = vmatpush1.bf16.msra.mxu0 0
          %1952 = vmatprep.mubr.bf16.mxu0 0
          %1953 = vmatmul.mubr.bf16.gmra.mrb[0].mxu0 %v1919
          %v1954 = vpop.f32.mrb[0].mxu0
          %v1955 = vadd.f32 0.0, %v1954
          %v1956 = vpop.f32.mrb[0].mxu0
          %v1957 = vadd.f32 0.0, %v1956
          %v1958 = vpop.f32.mrb[0].mxu0
          %v1959 = vpop.f32.mrb[0].mxu0
          %1960 = vdwg.mxu0
          %1961 = vmatprep.subr.bf16.mxu0 %v963
          %1962 = vmatpush1.bf16.msra.mxu0 %v962
          %1963 = vmatprep.subr.bf16.mxu0 %v967
          %1964 = vmatpush1.bf16.msra.mxu0 %v966
          %1965 = vmatprep.subr.bf16.mxu0 %v971
          %1966 = vmatpush1.bf16.msra.mxu0 %v970
          %1967 = vmatprep.subr.bf16.mxu0 %v975
          %1968 = vmatpush1.bf16.msra.mxu0 %v974
          %1969 = vmatprep.subr.bf16.mxu0 %v979
          %1970 = vmatpush1.bf16.msra.mxu0 %v978
          %1971 = vmatprep.subr.bf16.mxu0 %v983
          %1972 = vmatpush1.bf16.msra.mxu0 %v982
          %1973 = vmatprep.subr.bf16.mxu0 %v987
          %1974 = vmatpush1.bf16.msra.mxu0 %v986
          %1975 = vmatprep.subr.bf16.mxu0 %v991
          %1976 = vmatpush1.bf16.msra.mxu0 %v990
          %1977 = vmatprep.subr.bf16.mxu0 0
          %1978 = vmatpush1.bf16.msra.mxu0 0
          %1979 = vmatprep.subr.bf16.mxu0 0
          %1980 = vmatpush1.bf16.msra.mxu0 0
          %1981 = vmatprep.subr.bf16.mxu0 0
          %1982 = vmatpush1.bf16.msra.mxu0 0
          %1983 = vmatprep.subr.bf16.mxu0 0
          %1984 = vmatpush1.bf16.msra.mxu0 0
          %1985 = vmatprep.subr.bf16.mxu0 0
          %1986 = vmatpush1.bf16.msra.mxu0 0
          %1987 = vmatprep.subr.bf16.mxu0 0
          %1988 = vmatpush1.bf16.msra.mxu0 0
          %1989 = vmatprep.subr.bf16.mxu0 0
          %1990 = vmatpush1.bf16.msra.mxu0 0
          %1991 = vmatprep.subr.bf16.mxu0 0
          %1992 = vmatpush1.bf16.msra.mxu0 0
          %1993 = vmatprep.mubr.bf16.mxu0 0
          %1994 = vmatmul.mubr.bf16.gmra.mrb[0].mxu0 %v1919
          %v1995 = vpop.f32.mrb[0].mxu0
          %v1996 = vadd.f32 0.0, %v1995
          %v1997 = vpop.f32.mrb[0].mxu0
          %v1998 = vadd.f32 0.0, %v1997
          %v1999 = vpop.f32.mrb[0].mxu0
          %v2000 = vpop.f32.mrb[0].mxu0
          %2001 = vdwg.mxu0
          %v2002 = vadd.f32 %v1915, %v1955
          %v2003 = vadd.f32 %v1916, %v1957
          %v2004 = vadd.f32 %v1917, %v1996
          %v2005 = vadd.f32 %v1918, %v1998
          %v2006 = vxor.u32 %v2002, 2147483648
          %v2007 = vmul.f32 %v2006, 1.442695
          %v2008 = vpow.pop %v2007
          %v2009 = vadd.f32 %v2008, 1.0
          %v2010 = vrcp.pop %v2009
          %v2011 = vmul.f32 1.0, %v2010
          %v2012 = vxor.u32 %v2003, 2147483648
          %v2013 = vmul.f32 %v2012, 1.442695
          %v2014 = vpow.pop %v2013
          %v2015 = vadd.f32 %v2014, 1.0
          %v2016 = vrcp.pop %v2015
          %v2017 = vmul.f32 1.0, %v2016
          %v2018 = vtanh.pop %v2004
          %v2019 = vxor.u32 %v2005, 2147483648
          %v2020 = vmul.f32 %v2019, 1.442695
          %v2021 = vpow.pop %v2020
          %v2022 = vadd.f32 %v2021, 1.0
          %v2023 = vrcp.pop %v2022
          %v2024 = vmul.f32 1.0, %v2023
          %v2025 = vmul.f32 %v2017, %v1913
          %v2026 = vmul.f32 %v2011, %v2018
          %v2027 = vadd.f32 %v2025, %v2026
          %v2028 = vtanh.pop %v2027
          %v2029 = vmul.f32 %v2024, %v2028
          %v2030 = vstv %s1914
          %vm2031 = vcmp.gt.s32.totalorder %v851, %v2030
          %v2032 = vsel %vm2031, 1, 0
          %2033 = vset.pattern.permute.xlu0 0
          %2034 = vperm.xlu0 %2033, %v2032
          %v2035 = vpop.permute.xlu0 %2034
          %vm2036 = vcmp.eq.s32.totalorder %v2035, 1
          %v2037 = vsel %vm2036, %v2029, 0.0
          %v2038 = vpack.c.bf16 %v2037, %v2037
          %2039 = vst [vmem:[%s371 + $0x1c] sm:$0xf] %v2038
          %v2040 = vsel %vm2036, %v2029, %v1912
          %v2041 = vsel %vm2036, %v2027, %v1913
          %2042 = vst [vmem:[#allocation3] sm:$0xff] %v2040
          %2043 = vst [vmem:[#allocation4] sm:$0xff] %v2041
        $region60: #{tpu_custom_call.1} parent=39 // pred_fallthru
          _
        %p2044 = scmp.eq.s32.totalorder %s29, 1
        // Predicated region
        $region61: #{tpu_custom_call.1} parent=39 // pred_check
          %p2045 = pneg %p2044
        $region62: #{tpu_custom_call.1} parent=39 // pred_check_branch
          %2047 = sbr.rel (%p2045) target = $region64
        $region63: #{tpu_custom_call.1} parent=39 // pred_region
          %v2048 = vld [vmem:[#allocation3] sm:$0xff]
          %v2049 = vld [vmem:[#allocation4] sm:$0xff]
          %s2050 = ssub.s32 15, %s852
          %v2051 = vld [vmem:[#allocation2 + $0xe0] sm:$0xff]
          %v2052 = vld [vmem:[#allocation2 + $0xe8] sm:$0xff]
          %v2053 = vld [vmem:[#allocation2 + $0xf0] sm:$0xff]
          %v2054 = vld [vmem:[#allocation2 + $0xf8] sm:$0xff]
          %v2055 = vpack.c.bf16 %v2048, %v2048
          %v2088 = vunpack.c.l.b16 %v819
          %v2089 = vunpack.c.h.b16 %v819
          %v2090 = vunpack.c.l.b16 %v820
          %v2091 = vunpack.c.h.b16 %v820
          %v2092 = vunpack.c.l.b16 %v821
          %v2093 = vunpack.c.h.b16 %v821
          %v2094 = vunpack.c.l.b16 %v822
          %v2095 = vunpack.c.h.b16 %v822
          %v2096 = vunpack.c.l.b16 %v823
          %v2097 = vunpack.c.h.b16 %v823
          %v2098 = vunpack.c.l.b16 %v824
          %v2099 = vunpack.c.h.b16 %v824
          %v2100 = vunpack.c.l.b16 %v825
          %v2101 = vunpack.c.h.b16 %v825
          %v2102 = vunpack.c.l.b16 %v826
          %v2103 = vunpack.c.h.b16 %v826
          %v2104 = vunpack.c.l.b16 %v827
          %v2105 = vunpack.c.h.b16 %v827
          %v2106 = vunpack.c.l.b16 %v828
          %v2107 = vunpack.c.h.b16 %v828
          %v2108 = vunpack.c.l.b16 %v829
          %v2109 = vunpack.c.h.b16 %v829
          %v2110 = vunpack.c.l.b16 %v830
          %v2111 = vunpack.c.h.b16 %v830
          %v2112 = vunpack.c.l.b16 %v831
          %v2113 = vunpack.c.h.b16 %v831
          %v2114 = vunpack.c.l.b16 %v832
          %v2115 = vunpack.c.h.b16 %v832
          %v2116 = vunpack.c.l.b16 %v833
          %v2117 = vunpack.c.h.b16 %v833
          %v2118 = vunpack.c.l.b16 %v834
          %v2119 = vunpack.c.h.b16 %v834
          %v2120 = vunpack.c.l.b16 %v835
          %v2121 = vunpack.c.h.b16 %v835
          %v2122 = vunpack.c.l.b16 %v836
          %v2123 = vunpack.c.h.b16 %v836
          %v2124 = vunpack.c.l.b16 %v837
          %v2125 = vunpack.c.h.b16 %v837
          %v2126 = vunpack.c.l.b16 %v838
          %v2127 = vunpack.c.h.b16 %v838
          %v2128 = vunpack.c.l.b16 %v839
          %v2129 = vunpack.c.h.b16 %v839
          %v2130 = vunpack.c.l.b16 %v840
          %v2131 = vunpack.c.h.b16 %v840
          %v2132 = vunpack.c.l.b16 %v841
          %v2133 = vunpack.c.h.b16 %v841
          %v2134 = vunpack.c.l.b16 %v842
          %v2135 = vunpack.c.h.b16 %v842
          %v2136 = vunpack.c.l.b16 %v843
          %v2137 = vunpack.c.h.b16 %v843
          %v2138 = vunpack.c.l.b16 %v844
          %v2139 = vunpack.c.h.b16 %v844
          %v2140 = vunpack.c.l.b16 %v845
          %v2141 = vunpack.c.h.b16 %v845
          %v2142 = vunpack.c.l.b16 %v846
          %v2143 = vunpack.c.h.b16 %v846
          %v2144 = vunpack.c.l.b16 %v847
          %v2145 = vunpack.c.h.b16 %v847
          %v2146 = vunpack.c.l.b16 %v848
          %v2147 = vunpack.c.h.b16 %v848
          %v2148 = vunpack.c.l.b16 %v849
          %v2149 = vunpack.c.h.b16 %v849
          %v2150 = vunpack.c.l.b16 %v850
          %v2151 = vunpack.c.h.b16 %v850
          %v2152 = vpack.c.b16 %v2092, %v2088
          %v2153 = vpack.c.b16 %v2093, %v2089
          %v2154 = vpack.c.b16 %v2094, %v2090
          %v2155 = vpack.c.b16 %v2095, %v2091
          %v2156 = vpack.c.b16 %v2100, %v2096
          %v2157 = vpack.c.b16 %v2101, %v2097
          %v2158 = vpack.c.b16 %v2102, %v2098
          %v2159 = vpack.c.b16 %v2103, %v2099
          %v2160 = vpack.c.b16 %v2108, %v2104
          %v2161 = vpack.c.b16 %v2109, %v2105
          %v2162 = vpack.c.b16 %v2110, %v2106
          %v2163 = vpack.c.b16 %v2111, %v2107
          %v2164 = vpack.c.b16 %v2116, %v2112
          %v2165 = vpack.c.b16 %v2117, %v2113
          %v2166 = vpack.c.b16 %v2118, %v2114
          %v2167 = vpack.c.b16 %v2119, %v2115
          %v2168 = vpack.c.b16 %v2124, %v2120
          %v2169 = vpack.c.b16 %v2125, %v2121
          %v2170 = vpack.c.b16 %v2126, %v2122
          %v2171 = vpack.c.b16 %v2127, %v2123
          %v2172 = vpack.c.b16 %v2132, %v2128
          %v2173 = vpack.c.b16 %v2133, %v2129
          %v2174 = vpack.c.b16 %v2134, %v2130
          %v2175 = vpack.c.b16 %v2135, %v2131
          %v2176 = vpack.c.b16 %v2140, %v2136
          %v2177 = vpack.c.b16 %v2141, %v2137
          %v2178 = vpack.c.b16 %v2142, %v2138
          %v2179 = vpack.c.b16 %v2143, %v2139
          %v2180 = vpack.c.b16 %v2148, %v2144
          %v2181 = vpack.c.b16 %v2149, %v2145
          %v2182 = vpack.c.b16 %v2150, %v2146
          %v2183 = vpack.c.b16 %v2151, %v2147
          %2216 = vmatprep.subr.bf16.mxu0 %v2153
          %2217 = vmatpush1.bf16.msra.mxu0 %v2152
          %2218 = vmatprep.subr.bf16.mxu0 %v2157
          %2219 = vmatpush1.bf16.msra.mxu0 %v2156
          %2220 = vmatprep.subr.bf16.mxu0 %v2161
          %2221 = vmatpush1.bf16.msra.mxu0 %v2160
          %2222 = vmatprep.subr.bf16.mxu0 %v2165
          %2223 = vmatpush1.bf16.msra.mxu0 %v2164
          %2224 = vmatprep.subr.bf16.mxu0 %v2169
          %2225 = vmatpush1.bf16.msra.mxu0 %v2168
          %2226 = vmatprep.subr.bf16.mxu0 %v2173
          %2227 = vmatpush1.bf16.msra.mxu0 %v2172
          %2228 = vmatprep.subr.bf16.mxu0 %v2177
          %2229 = vmatpush1.bf16.msra.mxu0 %v2176
          %2230 = vmatprep.subr.bf16.mxu0 %v2181
          %2231 = vmatpush1.bf16.msra.mxu0 %v2180
          %2232 = vmatprep.subr.bf16.mxu0 0
          %2233 = vmatpush1.bf16.msra.mxu0 0
          %2234 = vmatprep.subr.bf16.mxu0 0
          %2235 = vmatpush1.bf16.msra.mxu0 0
          %2236 = vmatprep.subr.bf16.mxu0 0
          %2237 = vmatpush1.bf16.msra.mxu0 0
          %2238 = vmatprep.subr.bf16.mxu0 0
          %2239 = vmatpush1.bf16.msra.mxu0 0
          %2240 = vmatprep.subr.bf16.mxu0 0
          %2241 = vmatpush1.bf16.msra.mxu0 0
          %2242 = vmatprep.subr.bf16.mxu0 0
          %2243 = vmatpush1.bf16.msra.mxu0 0
          %2244 = vmatprep.subr.bf16.mxu0 0
          %2245 = vmatpush1.bf16.msra.mxu0 0
          %2246 = vmatprep.subr.bf16.mxu0 0
          %2247 = vmatpush1.bf16.msra.mxu0 0
          %2248 = vmatprep.mubr.bf16.mxu0 0
          %2249 = vmatmul.mubr.bf16.gmra.mrb[0].mxu0 %v2055
          %v2250 = vpop.f32.mrb[0].mxu0
          %v2251 = vadd.f32 0.0, %v2250
          %v2252 = vpop.f32.mrb[0].mxu0
          %v2253 = vadd.f32 0.0, %v2252
          %v2254 = vpop.f32.mrb[0].mxu0
          %v2255 = vpop.f32.mrb[0].mxu0
          %2256 = vdwg.mxu0
          %2257 = vmatprep.subr.bf16.mxu0 %v2155
          %2258 = vmatpush1.bf16.msra.mxu0 %v2154
          %2259 = vmatprep.subr.bf16.mxu0 %v2159
          %2260 = vmatpush1.bf16.msra.mxu0 %v2158
          %2261 = vmatprep.subr.bf16.mxu0 %v2163
          %2262 = vmatpush1.bf16.msra.mxu0 %v2162
          %2263 = vmatprep.subr.bf16.mxu0 %v2167
          %2264 = vmatpush1.bf16.msra.mxu0 %v2166
          %2265 = vmatprep.subr.bf16.mxu0 %v2171
          %2266 = vmatpush1.bf16.msra.mxu0 %v2170
          %2267 = vmatprep.subr.bf16.mxu0 %v2175
          %2268 = vmatpush1.bf16.msra.mxu0 %v2174
          %2269 = vmatprep.subr.bf16.mxu0 %v2179
          %2270 = vmatpush1.bf16.msra.mxu0 %v2178
          %2271 = vmatprep.subr.bf16.mxu0 %v2183
          %2272 = vmatpush1.bf16.msra.mxu0 %v2182
          %2273 = vmatprep.subr.bf16.mxu0 0
          %2274 = vmatpush1.bf16.msra.mxu0 0
          %2275 = vmatprep.subr.bf16.mxu0 0
          %2276 = vmatpush1.bf16.msra.mxu0 0
          %2277 = vmatprep.subr.bf16.mxu0 0
          %2278 = vmatpush1.bf16.msra.mxu0 0
          %2279 = vmatprep.subr.bf16.mxu0 0
          %2280 = vmatpush1.bf16.msra.mxu0 0
          %2281 = vmatprep.subr.bf16.mxu0 0
          %2282 = vmatpush1.bf16.msra.mxu0 0
          %2283 = vmatprep.subr.bf16.mxu0 0
          %2284 = vmatpush1.bf16.msra.mxu0 0
          %2285 = vmatprep.subr.bf16.mxu0 0
          %2286 = vmatpush1.bf16.msra.mxu0 0
          %2287 = vmatprep.subr.bf16.mxu0 0
          %2288 = vmatpush1.bf16.msra.mxu0 0
          %2289 = vmatprep.mubr.bf16.mxu0 0
          %2290 = vmatmul.mubr.bf16.gmra.mrb[0].mxu0 %v2055
          %v2291 = vpop.f32.mrb[0].mxu0
          %v2292 = vadd.f32 0.0, %v2291
          %v2293 = vpop.f32.mrb[0].mxu0
          %v2294 = vadd.f32 0.0, %v2293
          %v2295 = vpop.f32.mrb[0].mxu0
          %v2296 = vpop.f32.mrb[0].mxu0
          %2297 = vdwg.mxu0
          %v2298 = vadd.f32 %v2051, %v2251
          %v2299 = vadd.f32 %v2052, %v2253
          %v2300 = vadd.f32 %v2053, %v2292
          %v2301 = vadd.f32 %v2054, %v2294
          %v2302 = vxor.u32 %v2298, 2147483648
          %v2303 = vmul.f32 %v2302, 1.442695
          %v2304 = vpow.pop %v2303
          %v2305 = vadd.f32 %v2304, 1.0
          %v2306 = vrcp.pop %v2305
          %v2307 = vmul.f32 1.0, %v2306
          %v2308 = vxor.u32 %v2299, 2147483648
          %v2309 = vmul.f32 %v2308, 1.442695
          %v2310 = vpow.pop %v2309
          %v2311 = vadd.f32 %v2310, 1.0
          %v2312 = vrcp.pop %v2311
          %v2313 = vmul.f32 1.0, %v2312
          %v2314 = vtanh.pop %v2300
          %v2315 = vxor.u32 %v2301, 2147483648
          %v2316 = vmul.f32 %v2315, 1.442695
          %v2317 = vpow.pop %v2316
          %v2318 = vadd.f32 %v2317, 1.0
          %v2319 = vrcp.pop %v2318
          %v2320 = vmul.f32 1.0, %v2319
          %v2321 = vmul.f32 %v2313, %v2049
          %v2322 = vmul.f32 %v2307, %v2314
          %v2323 = vadd.f32 %v2321, %v2322
          %v2324 = vtanh.pop %v2323
          %v2325 = vmul.f32 %v2320, %v2324
          %v2326 = vstv %s2050
          %vm2327 = vcmp.gt.s32.totalorder %v851, %v2326
          %v2328 = vsel %vm2327, 1, 0
          %2329 = vset.pattern.permute.xlu0 0
          %2330 = vperm.xlu0 %2329, %v2328
          %v2331 = vpop.permute.xlu0 %2330
          %vm2332 = vcmp.eq.s32.totalorder %v2331, 1
          %v2333 = vsel %vm2332, %v2325, 0.0
          %v2334 = vpack.c.bf16 %v2333, %v2333
          %2335 = vst [vmem:[%s371 + $0x1c] sm:$0xf] %v2334
          %v2336 = vsel %vm2332, %v2325, %v2048
          %v2337 = vsel %vm2332, %v2323, %v2049
          %s2338 = ssub.s32 14, %s852
          %v2339 = vld [vmem:[#allocation2 + $0xc0] sm:$0xff]
          %v2340 = vld [vmem:[#allocation2 + $0xc8] sm:$0xff]
          %v2341 = vld [vmem:[#allocation2 + $0xd0] sm:$0xff]
          %v2342 = vld [vmem:[#allocation2 + $0xd8] sm:$0xff]
          %v2343 = vpack.c.bf16 %v2336, %v2336
          %2344 = vmatprep.subr.bf16.mxu0 %v2153
          %2345 = vmatpush1.bf16.msra.mxu0 %v2152
          %2346 = vmatprep.subr.bf16.mxu0 %v2157
          %2347 = vmatpush1.bf16.msra.mxu0 %v2156
          %2348 = vmatprep.subr.bf16.mxu0 %v2161
          %2349 = vmatpush1.bf16.msra.mxu0 %v2160
          %2350 = vmatprep.subr.bf16.mxu0 %v2165
          %2351 = vmatpush1.bf16.msra.mxu0 %v2164
          %2352 = vmatprep.subr.bf16.mxu0 %v2169
          %2353 = vmatpush1.bf16.msra.mxu0 %v2168
          %2354 = vmatprep.subr.bf16.mxu0 %v2173
          %2355 = vmatpush1.bf16.msra.mxu0 %v2172
          %2356 = vmatprep.subr.bf16.mxu0 %v2177
          %2357 = vmatpush1.bf16.msra.mxu0 %v2176
          %2358 = vmatprep.subr.bf16.mxu0 %v2181
          %2359 = vmatpush1.bf16.msra.mxu0 %v2180
          %2360 = vmatprep.subr.bf16.mxu0 0
          %2361 = vmatpush1.bf16.msra.mxu0 0
          %2362 = vmatprep.subr.bf16.mxu0 0
          %2363 = vmatpush1.bf16.msra.mxu0 0
          %2364 = vmatprep.subr.bf16.mxu0 0
          %2365 = vmatpush1.bf16.msra.mxu0 0
          %2366 = vmatprep.subr.bf16.mxu0 0
          %2367 = vmatpush1.bf16.msra.mxu0 0
          %2368 = vmatprep.subr.bf16.mxu0 0
          %2369 = vmatpush1.bf16.msra.mxu0 0
          %2370 = vmatprep.subr.bf16.mxu0 0
          %2371 = vmatpush1.bf16.msra.mxu0 0
          %2372 = vmatprep.subr.bf16.mxu0 0
          %2373 = vmatpush1.bf16.msra.mxu0 0
          %2374 = vmatprep.subr.bf16.mxu0 0
          %2375 = vmatpush1.bf16.msra.mxu0 0
          %2376 = vmatprep.mubr.bf16.mxu0 0
          %2377 = vmatmul.mubr.bf16.gmra.mrb[0].mxu0 %v2343
          %v2378 = vpop.f32.mrb[0].mxu0
          %v2379 = vadd.f32 0.0, %v2378
          %v2380 = vpop.f32.mrb[0].mxu0
          %v2381 = vadd.f32 0.0, %v2380
          %v2382 = vpop.f32.mrb[0].mxu0
          %v2383 = vpop.f32.mrb[0].mxu0
          %2384 = vdwg.mxu0
          %2385 = vmatprep.subr.bf16.mxu0 %v2155
          %2386 = vmatpush1.bf16.msra.mxu0 %v2154
          %2387 = vmatprep.subr.bf16.mxu0 %v2159
          %2388 = vmatpush1.bf16.msra.mxu0 %v2158
          %2389 = vmatprep.subr.bf16.mxu0 %v2163
          %2390 = vmatpush1.bf16.msra.mxu0 %v2162
          %2391 = vmatprep.subr.bf16.mxu0 %v2167
          %2392 = vmatpush1.bf16.msra.mxu0 %v2166
          %2393 = vmatprep.subr.bf16.mxu0 %v2171
          %2394 = vmatpush1.bf16.msra.mxu0 %v2170
          %2395 = vmatprep.subr.bf16.mxu0 %v2175
          %2396 = vmatpush1.bf16.msra.mxu0 %v2174
          %2397 = vmatprep.subr.bf16.mxu0 %v2179
          %2398 = vmatpush1.bf16.msra.mxu0 %v2178
          %2399 = vmatprep.subr.bf16.mxu0 %v2183
          %2400 = vmatpush1.bf16.msra.mxu0 %v2182
          %2401 = vmatprep.subr.bf16.mxu0 0
          %2402 = vmatpush1.bf16.msra.mxu0 0
          %2403 = vmatprep.subr.bf16.mxu0 0
          %2404 = vmatpush1.bf16.msra.mxu0 0
          %2405 = vmatprep.subr.bf16.mxu0 0
          %2406 = vmatpush1.bf16.msra.mxu0 0
          %2407 = vmatprep.subr.bf16.mxu0 0
          %2408 = vmatpush1.bf16.msra.mxu0 0
          %2409 = vmatprep.subr.bf16.mxu0 0
          %2410 = vmatpush1.bf16.msra.mxu0 0
          %2411 = vmatprep.subr.bf16.mxu0 0
          %2412 = vmatpush1.bf16.msra.mxu0 0
          %2413 = vmatprep.subr.bf16.mxu0 0
          %2414 = vmatpush1.bf16.msra.mxu0 0
          %2415 = vmatprep.subr.bf16.mxu0 0
          %2416 = vmatpush1.bf16.msra.mxu0 0
          %2417 = vmatprep.mubr.bf16.mxu0 0
          %2418 = vmatmul.mubr.bf16.gmra.mrb[0].mxu0 %v2343
          %v2419 = vpop.f32.mrb[0].mxu0
          %v2420 = vadd.f32 0.0, %v2419
          %v2421 = vpop.f32.mrb[0].mxu0
          %v2422 = vadd.f32 0.0, %v2421
          %v2423 = vpop.f32.mrb[0].mxu0
          %v2424 = vpop.f32.mrb[0].mxu0
          %2425 = vdwg.mxu0
          %v2426 = vadd.f32 %v2339, %v2379
          %v2427 = vadd.f32 %v2340, %v2381
          %v2428 = vadd.f32 %v2341, %v2420
          %v2429 = vadd.f32 %v2342, %v2422
          %v2430 = vxor.u32 %v2426, 2147483648
          %v2431 = vmul.f32 %v2430, 1.442695
          %v2432 = vpow.pop %v2431
          %v2433 = vadd.f32 %v2432, 1.0
          %v2434 = vrcp.pop %v2433
          %v2435 = vmul.f32 1.0, %v2434
          %v2436 = vxor.u32 %v2427, 2147483648
          %v2437 = vmul.f32 %v2436, 1.442695
          %v2438 = vpow.pop %v2437
          %v2439 = vadd.f32 %v2438, 1.0
          %v2440 = vrcp.pop %v2439
          %v2441 = vmul.f32 1.0, %v2440
          %v2442 = vtanh.pop %v2428
          %v2443 = vxor.u32 %v2429, 2147483648
          %v2444 = vmul.f32 %v2443, 1.442695
          %v2445 = vpow.pop %v2444
          %v2446 = vadd.f32 %v2445, 1.0
          %v2447 = vrcp.pop %v2446
          %v2448 = vmul.f32 1.0, %v2447
          %v2449 = vmul.f32 %v2441, %v2337
          %v2450 = vmul.f32 %v2435, %v2442
          %v2451 = vadd.f32 %v2449, %v2450
          %v2452 = vtanh.pop %v2451
          %v2453 = vmul.f32 %v2448, %v2452
          %v2454 = vstv %s2338
          %vm2455 = vcmp.gt.s32.totalorder %v851, %v2454
          %v2456 = vsel %vm2455, 1, 0
          %2457 = vset.pattern.permute.xlu0 0
          %2458 = vperm.xlu0 %2457, %v2456
          %v2459 = vpop.permute.xlu0 %2458
          %vm2460 = vcmp.eq.s32.totalorder %v2459, 1
          %v2461 = vsel %vm2460, %v2453, 0.0
          %v2462 = vpack.c.bf16 %v2461, %v2461
          %2463 = vst [vmem:[%s371 + $0x18] sm:$0xf] %v2462
          %v2464 = vsel %vm2460, %v2453, %v2336
          %v2465 = vsel %vm2460, %v2451, %v2337
          %s2466 = ssub.s32 13, %s852
          %v2467 = vld [vmem:[#allocation2 + $0xa0] sm:$0xff]
          %v2468 = vld [vmem:[#allocation2 + $0xa8] sm:$0xff]
          %v2469 = vld [vmem:[#allocation2 + $0xb0] sm:$0xff]
          %v2470 = vld [vmem:[#allocation2 + $0xb8] sm:$0xff]
          %v2471 = vpack.c.bf16 %v2464, %v2464
          %2472 = vmatprep.subr.bf16.mxu0 %v2153
          %2473 = vmatpush1.bf16.msra.mxu0 %v2152
          %2474 = vmatprep.subr.bf16.mxu0 %v2157
          %2475 = vmatpush1.bf16.msra.mxu0 %v2156
          %2476 = vmatprep.subr.bf16.mxu0 %v2161
          %2477 = vmatpush1.bf16.msra.mxu0 %v2160
          %2478 = vmatprep.subr.bf16.mxu0 %v2165
          %2479 = vmatpush1.bf16.msra.mxu0 %v2164
          %2480 = vmatprep.subr.bf16.mxu0 %v2169
          %2481 = vmatpush1.bf16.msra.mxu0 %v2168
          %2482 = vmatprep.subr.bf16.mxu0 %v2173
          %2483 = vmatpush1.bf16.msra.mxu0 %v2172
          %2484 = vmatprep.subr.bf16.mxu0 %v2177
          %2485 = vmatpush1.bf16.msra.mxu0 %v2176
          %2486 = vmatprep.subr.bf16.mxu0 %v2181
          %2487 = vmatpush1.bf16.msra.mxu0 %v2180
          %2488 = vmatprep.subr.bf16.mxu0 0
          %2489 = vmatpush1.bf16.msra.mxu0 0
          %2490 = vmatprep.subr.bf16.mxu0 0
          %2491 = vmatpush1.bf16.msra.mxu0 0
          %2492 = vmatprep.subr.bf16.mxu0 0
          %2493 = vmatpush1.bf16.msra.mxu0 0
          %2494 = vmatprep.subr.bf16.mxu0 0
          %2495 = vmatpush1.bf16.msra.mxu0 0
          %2496 = vmatprep.subr.bf16.mxu0 0
          %2497 = vmatpush1.bf16.msra.mxu0 0
          %2498 = vmatprep.subr.bf16.mxu0 0
          %2499 = vmatpush1.bf16.msra.mxu0 0
          %2500 = vmatprep.subr.bf16.mxu0 0
          %2501 = vmatpush1.bf16.msra.mxu0 0
          %2502 = vmatprep.subr.bf16.mxu0 0
          %2503 = vmatpush1.bf16.msra.mxu0 0
          %2504 = vmatprep.mubr.bf16.mxu0 0
          %2505 = vmatmul.mubr.bf16.gmra.mrb[0].mxu0 %v2471
          %v2506 = vpop.f32.mrb[0].mxu0
          %v2507 = vadd.f32 0.0, %v2506
          %v2508 = vpop.f32.mrb[0].mxu0
          %v2509 = vadd.f32 0.0, %v2508
          %v2510 = vpop.f32.mrb[0].mxu0
          %v2511 = vpop.f32.mrb[0].mxu0
          %2512 = vdwg.mxu0
          %2513 = vmatprep.subr.bf16.mxu0 %v2155
          %2514 = vmatpush1.bf16.msra.mxu0 %v2154
          %2515 = vmatprep.subr.bf16.mxu0 %v2159
          %2516 = vmatpush1.bf16.msra.mxu0 %v2158
          %2517 = vmatprep.subr.bf16.mxu0 %v2163
          %2518 = vmatpush1.bf16.msra.mxu0 %v2162
          %2519 = vmatprep.subr.bf16.mxu0 %v2167
          %2520 = vmatpush1.bf16.msra.mxu0 %v2166
          %2521 = vmatprep.subr.bf16.mxu0 %v2171
          %2522 = vmatpush1.bf16.msra.mxu0 %v2170
          %2523 = vmatprep.subr.bf16.mxu0 %v2175
          %2524 = vmatpush1.bf16.msra.mxu0 %v2174
          %2525 = vmatprep.subr.bf16.mxu0 %v2179
          %2526 = vmatpush1.bf16.msra.mxu0 %v2178
          %2527 = vmatprep.subr.bf16.mxu0 %v2183
          %2528 = vmatpush1.bf16.msra.mxu0 %v2182
          %2529 = vmatprep.subr.bf16.mxu0 0
          %2530 = vmatpush1.bf16.msra.mxu0 0
          %2531 = vmatprep.subr.bf16.mxu0 0
          %2532 = vmatpush1.bf16.msra.mxu0 0
          %2533 = vmatprep.subr.bf16.mxu0 0
          %2534 = vmatpush1.bf16.msra.mxu0 0
          %2535 = vmatprep.subr.bf16.mxu0 0
          %2536 = vmatpush1.bf16.msra.mxu0 0
          %2537 = vmatprep.subr.bf16.mxu0 0
          %2538 = vmatpush1.bf16.msra.mxu0 0
          %2539 = vmatprep.subr.bf16.mxu0 0
          %2540 = vmatpush1.bf16.msra.mxu0 0
          %2541 = vmatprep.subr.bf16.mxu0 0
          %2542 = vmatpush1.bf16.msra.mxu0 0
          %2543 = vmatprep.subr.bf16.mxu0 0
          %2544 = vmatpush1.bf16.msra.mxu0 0
          %2545 = vmatprep.mubr.bf16.mxu0 0
          %2546 = vmatmul.mubr.bf16.gmra.mrb[0].mxu0 %v2471
          %v2547 = vpop.f32.mrb[0].mxu0
          %v2548 = vadd.f32 0.0, %v2547
          %v2549 = vpop.f32.mrb[0].mxu0
          %v2550 = vadd.f32 0.0, %v2549
          %v2551 = vpop.f32.mrb[0].mxu0
          %v2552 = vpop.f32.mrb[0].mxu0
          %2553 = vdwg.mxu0
          %v2554 = vadd.f32 %v2467, %v2507
          %v2555 = vadd.f32 %v2468, %v2509
          %v2556 = vadd.f32 %v2469, %v2548
          %v2557 = vadd.f32 %v2470, %v2550
          %v2558 = vxor.u32 %v2554, 2147483648
          %v2559 = vmul.f32 %v2558, 1.442695
          %v2560 = vpow.pop %v2559
          %v2561 = vadd.f32 %v2560, 1.0
          %v2562 = vrcp.pop %v2561
          %v2563 = vmul.f32 1.0, %v2562
          %v2564 = vxor.u32 %v2555, 2147483648
          %v2565 = vmul.f32 %v2564, 1.442695
          %v2566 = vpow.pop %v2565
          %v2567 = vadd.f32 %v2566, 1.0
          %v2568 = vrcp.pop %v2567
          %v2569 = vmul.f32 1.0, %v2568
          %v2570 = vtanh.pop %v2556
          %v2571 = vxor.u32 %v2557, 2147483648
          %v2572 = vmul.f32 %v2571, 1.442695
          %v2573 = vpow.pop %v2572
          %v2574 = vadd.f32 %v2573, 1.0
          %v2575 = vrcp.pop %v2574
          %v2576 = vmul.f32 1.0, %v2575
          %v2577 = vmul.f32 %v2569, %v2465
          %v2578 = vmul.f32 %v2563, %v2570
          %v2579 = vadd.f32 %v2577, %v2578
          %v2580 = vtanh.pop %v2579
          %v2581 = vmul.f32 %v2576, %v2580
          %v2582 = vstv %s2466
          %vm2583 = vcmp.gt.s32.totalorder %v851, %v2582
          %v2584 = vsel %vm2583, 1, 0
          %2585 = vset.pattern.permute.xlu0 0
          %2586 = vperm.xlu0 %2585, %v2584
          %v2587 = vpop.permute.xlu0 %2586
          %vm2588 = vcmp.eq.s32.totalorder %v2587, 1
          %v2589 = vsel %vm2588, %v2581, 0.0
          %v2590 = vpack.c.bf16 %v2589, %v2589
          %2591 = vst [vmem:[%s371 + $0x14] sm:$0xf] %v2590
          %v2592 = vsel %vm2588, %v2581, %v2464
          %v2593 = vsel %vm2588, %v2579, %v2465
          %s2594 = ssub.s32 12, %s852
          %v2595 = vld [vmem:[#allocation2 + $0x80] sm:$0xff]
          %v2596 = vld [vmem:[#allocation2 + $0x88] sm:$0xff]
          %v2597 = vld [vmem:[#allocation2 + $0x90] sm:$0xff]
          %v2598 = vld [vmem:[#allocation2 + $0x98] sm:$0xff]
          %v2599 = vpack.c.bf16 %v2592, %v2592
          %2600 = vmatprep.subr.bf16.mxu0 %v2153
          %2601 = vmatpush1.bf16.msra.mxu0 %v2152
          %2602 = vmatprep.subr.bf16.mxu0 %v2157
          %2603 = vmatpush1.bf16.msra.mxu0 %v2156
          %2604 = vmatprep.subr.bf16.mxu0 %v2161
          %2605 = vmatpush1.bf16.msra.mxu0 %v2160
          %2606 = vmatprep.subr.bf16.mxu0 %v2165
          %2607 = vmatpush1.bf16.msra.mxu0 %v2164
          %2608 = vmatprep.subr.bf16.mxu0 %v2169
          %2609 = vmatpush1.bf16.msra.mxu0 %v2168
          %2610 = vmatprep.subr.bf16.mxu0 %v2173
          %2611 = vmatpush1.bf16.msra.mxu0 %v2172
          %2612 = vmatprep.subr.bf16.mxu0 %v2177
          %2613 = vmatpush1.bf16.msra.mxu0 %v2176
          %2614 = vmatprep.subr.bf16.mxu0 %v2181
          %2615 = vmatpush1.bf16.msra.mxu0 %v2180
          %2616 = vmatprep.subr.bf16.mxu0 0
          %2617 = vmatpush1.bf16.msra.mxu0 0
          %2618 = vmatprep.subr.bf16.mxu0 0
          %2619 = vmatpush1.bf16.msra.mxu0 0
          %2620 = vmatprep.subr.bf16.mxu0 0
          %2621 = vmatpush1.bf16.msra.mxu0 0
          %2622 = vmatprep.subr.bf16.mxu0 0
          %2623 = vmatpush1.bf16.msra.mxu0 0
          %2624 = vmatprep.subr.bf16.mxu0 0
          %2625 = vmatpush1.bf16.msra.mxu0 0
          %2626 = vmatprep.subr.bf16.mxu0 0
          %2627 = vmatpush1.bf16.msra.mxu0 0
          %2628 = vmatprep.subr.bf16.mxu0 0
          %2629 = vmatpush1.bf16.msra.mxu0 0
          %2630 = vmatprep.subr.bf16.mxu0 0
          %2631 = vmatpush1.bf16.msra.mxu0 0
          %2632 = vmatprep.mubr.bf16.mxu0 0
          %2633 = vmatmul.mubr.bf16.gmra.mrb[0].mxu0 %v2599
          %v2634 = vpop.f32.mrb[0].mxu0
          %v2635 = vadd.f32 0.0, %v2634
          %v2636 = vpop.f32.mrb[0].mxu0
          %v2637 = vadd.f32 0.0, %v2636
          %v2638 = vpop.f32.mrb[0].mxu0
          %v2639 = vpop.f32.mrb[0].mxu0
          %2640 = vdwg.mxu0
          %2641 = vmatprep.subr.bf16.mxu0 %v2155
          %2642 = vmatpush1.bf16.msra.mxu0 %v2154
          %2643 = vmatprep.subr.bf16.mxu0 %v2159
          %2644 = vmatpush1.bf16.msra.mxu0 %v2158
          %2645 = vmatprep.subr.bf16.mxu0 %v2163
          %2646 = vmatpush1.bf16.msra.mxu0 %v2162
          %2647 = vmatprep.subr.bf16.mxu0 %v2167
          %2648 = vmatpush1.bf16.msra.mxu0 %v2166
          %2649 = vmatprep.subr.bf16.mxu0 %v2171
          %2650 = vmatpush1.bf16.msra.mxu0 %v2170
          %2651 = vmatprep.subr.bf16.mxu0 %v2175
          %2652 = vmatpush1.bf16.msra.mxu0 %v2174
          %2653 = vmatprep.subr.bf16.mxu0 %v2179
          %2654 = vmatpush1.bf16.msra.mxu0 %v2178
          %2655 = vmatprep.subr.bf16.mxu0 %v2183
          %2656 = vmatpush1.bf16.msra.mxu0 %v2182
          %2657 = vmatprep.subr.bf16.mxu0 0
          %2658 = vmatpush1.bf16.msra.mxu0 0
          %2659 = vmatprep.subr.bf16.mxu0 0
          %2660 = vmatpush1.bf16.msra.mxu0 0
          %2661 = vmatprep.subr.bf16.mxu0 0
          %2662 = vmatpush1.bf16.msra.mxu0 0
          %2663 = vmatprep.subr.bf16.mxu0 0
          %2664 = vmatpush1.bf16.msra.mxu0 0
          %2665 = vmatprep.subr.bf16.mxu0 0
          %2666 = vmatpush1.bf16.msra.mxu0 0
          %2667 = vmatprep.subr.bf16.mxu0 0
          %2668 = vmatpush1.bf16.msra.mxu0 0
          %2669 = vmatprep.subr.bf16.mxu0 0
          %2670 = vmatpush1.bf16.msra.mxu0 0
          %2671 = vmatprep.subr.bf16.mxu0 0
          %2672 = vmatpush1.bf16.msra.mxu0 0
          %2673 = vmatprep.mubr.bf16.mxu0 0
          %2674 = vmatmul.mubr.bf16.gmra.mrb[0].mxu0 %v2599
          %v2675 = vpop.f32.mrb[0].mxu0
          %v2676 = vadd.f32 0.0, %v2675
          %v2677 = vpop.f32.mrb[0].mxu0
          %v2678 = vadd.f32 0.0, %v2677
          %v2679 = vpop.f32.mrb[0].mxu0
          %v2680 = vpop.f32.mrb[0].mxu0
          %2681 = vdwg.mxu0
          %v2682 = vadd.f32 %v2595, %v2635
          %v2683 = vadd.f32 %v2596, %v2637
          %v2684 = vadd.f32 %v2597, %v2676
          %v2685 = vadd.f32 %v2598, %v2678
          %v2686 = vxor.u32 %v2682, 2147483648
          %v2687 = vmul.f32 %v2686, 1.442695
          %v2688 = vpow.pop %v2687
          %v2689 = vadd.f32 %v2688, 1.0
          %v2690 = vrcp.pop %v2689
          %v2691 = vmul.f32 1.0, %v2690
          %v2692 = vxor.u32 %v2683, 2147483648
          %v2693 = vmul.f32 %v2692, 1.442695
          %v2694 = vpow.pop %v2693
          %v2695 = vadd.f32 %v2694, 1.0
          %v2696 = vrcp.pop %v2695
          %v2697 = vmul.f32 1.0, %v2696
          %v2698 = vtanh.pop %v2684
          %v2699 = vxor.u32 %v2685, 2147483648
          %v2700 = vmul.f32 %v2699, 1.442695
          %v2701 = vpow.pop %v2700
          %v2702 = vadd.f32 %v2701, 1.0
          %v2703 = vrcp.pop %v2702
          %v2704 = vmul.f32 1.0, %v2703
          %v2705 = vmul.f32 %v2697, %v2593
          %v2706 = vmul.f32 %v2691, %v2698
          %v2707 = vadd.f32 %v2705, %v2706
          %v2708 = vtanh.pop %v2707
          %v2709 = vmul.f32 %v2704, %v2708
          %v2710 = vstv %s2594
          %vm2711 = vcmp.gt.s32.totalorder %v851, %v2710
          %v2712 = vsel %vm2711, 1, 0
          %2713 = vset.pattern.permute.xlu0 0
          %2714 = vperm.xlu0 %2713, %v2712
          %v2715 = vpop.permute.xlu0 %2714
          %vm2716 = vcmp.eq.s32.totalorder %v2715, 1
          %v2717 = vsel %vm2716, %v2709, 0.0
          %v2718 = vpack.c.bf16 %v2717, %v2717
          %2719 = vst [vmem:[%s371 + $0x10] sm:$0xf] %v2718
          %v2720 = vsel %vm2716, %v2709, %v2592
          %v2721 = vsel %vm2716, %v2707, %v2593
          %s2722 = ssub.s32 11, %s852
          %v2723 = vld [vmem:[#allocation2 + $0x60] sm:$0xff]
          %v2724 = vld [vmem:[#allocation2 + $0x68] sm:$0xff]
          %v2725 = vld [vmem:[#allocation2 + $0x70] sm:$0xff]
          %v2726 = vld [vmem:[#allocation2 + $0x78] sm:$0xff]
          %v2727 = vpack.c.bf16 %v2720, %v2720
          %2728 = vmatprep.subr.bf16.mxu0 %v2153
          %2729 = vmatpush1.bf16.msra.mxu0 %v2152
          %2730 = vmatprep.subr.bf16.mxu0 %v2157
          %2731 = vmatpush1.bf16.msra.mxu0 %v2156
          %2732 = vmatprep.subr.bf16.mxu0 %v2161
          %2733 = vmatpush1.bf16.msra.mxu0 %v2160
          %2734 = vmatprep.subr.bf16.mxu0 %v2165
          %2735 = vmatpush1.bf16.msra.mxu0 %v2164
          %2736 = vmatprep.subr.bf16.mxu0 %v2169
          %2737 = vmatpush1.bf16.msra.mxu0 %v2168
          %2738 = vmatprep.subr.bf16.mxu0 %v2173
          %2739 = vmatpush1.bf16.msra.mxu0 %v2172
          %2740 = vmatprep.subr.bf16.mxu0 %v2177
          %2741 = vmatpush1.bf16.msra.mxu0 %v2176
          %2742 = vmatprep.subr.bf16.mxu0 %v2181
          %2743 = vmatpush1.bf16.msra.mxu0 %v2180
          %2744 = vmatprep.subr.bf16.mxu0 0
          %2745 = vmatpush1.bf16.msra.mxu0 0
          %2746 = vmatprep.subr.bf16.mxu0 0
          %2747 = vmatpush1.bf16.msra.mxu0 0
          %2748 = vmatprep.subr.bf16.mxu0 0
          %2749 = vmatpush1.bf16.msra.mxu0 0
          %2750 = vmatprep.subr.bf16.mxu0 0
          %2751 = vmatpush1.bf16.msra.mxu0 0
          %2752 = vmatprep.subr.bf16.mxu0 0
          %2753 = vmatpush1.bf16.msra.mxu0 0
          %2754 = vmatprep.subr.bf16.mxu0 0
          %2755 = vmatpush1.bf16.msra.mxu0 0
          %2756 = vmatprep.subr.bf16.mxu0 0
          %2757 = vmatpush1.bf16.msra.mxu0 0
          %2758 = vmatprep.subr.bf16.mxu0 0
          %2759 = vmatpush1.bf16.msra.mxu0 0
          %2760 = vmatprep.mubr.bf16.mxu0 0
          %2761 = vmatmul.mubr.bf16.gmra.mrb[0].mxu0 %v2727
          %v2762 = vpop.f32.mrb[0].mxu0
          %v2763 = vadd.f32 0.0, %v2762
          %v2764 = vpop.f32.mrb[0].mxu0
          %v2765 = vadd.f32 0.0, %v2764
          %v2766 = vpop.f32.mrb[0].mxu0
          %v2767 = vpop.f32.mrb[0].mxu0
          %2768 = vdwg.mxu0
          %2769 = vmatprep.subr.bf16.mxu0 %v2155
          %2770 = vmatpush1.bf16.msra.mxu0 %v2154
          %2771 = vmatprep.subr.bf16.mxu0 %v2159
          %2772 = vmatpush1.bf16.msra.mxu0 %v2158
          %2773 = vmatprep.subr.bf16.mxu0 %v2163
          %2774 = vmatpush1.bf16.msra.mxu0 %v2162
          %2775 = vmatprep.subr.bf16.mxu0 %v2167
          %2776 = vmatpush1.bf16.msra.mxu0 %v2166
          %2777 = vmatprep.subr.bf16.mxu0 %v2171
          %2778 = vmatpush1.bf16.msra.mxu0 %v2170
          %2779 = vmatprep.subr.bf16.mxu0 %v2175
          %2780 = vmatpush1.bf16.msra.mxu0 %v2174
          %2781 = vmatprep.subr.bf16.mxu0 %v2179
          %2782 = vmatpush1.bf16.msra.mxu0 %v2178
          %2783 = vmatprep.subr.bf16.mxu0 %v2183
          %2784 = vmatpush1.bf16.msra.mxu0 %v2182
          %2785 = vmatprep.subr.bf16.mxu0 0
          %2786 = vmatpush1.bf16.msra.mxu0 0
          %2787 = vmatprep.subr.bf16.mxu0 0
          %2788 = vmatpush1.bf16.msra.mxu0 0
          %2789 = vmatprep.subr.bf16.mxu0 0
          %2790 = vmatpush1.bf16.msra.mxu0 0
          %2791 = vmatprep.subr.bf16.mxu0 0
          %2792 = vmatpush1.bf16.msra.mxu0 0
          %2793 = vmatprep.subr.bf16.mxu0 0
          %2794 = vmatpush1.bf16.msra.mxu0 0
          %2795 = vmatprep.subr.bf16.mxu0 0
          %2796 = vmatpush1.bf16.msra.mxu0 0
          %2797 = vmatprep.subr.bf16.mxu0 0
          %2798 = vmatpush1.bf16.msra.mxu0 0
          %2799 = vmatprep.subr.bf16.mxu0 0
          %2800 = vmatpush1.bf16.msra.mxu0 0
          %2801 = vmatprep.mubr.bf16.mxu0 0
          %2802 = vmatmul.mubr.bf16.gmra.mrb[0].mxu0 %v2727
          %v2803 = vpop.f32.mrb[0].mxu0
          %v2804 = vadd.f32 0.0, %v2803
          %v2805 = vpop.f32.mrb[0].mxu0
          %v2806 = vadd.f32 0.0, %v2805
          %v2807 = vpop.f32.mrb[0].mxu0
          %v2808 = vpop.f32.mrb[0].mxu0
          %2809 = vdwg.mxu0
          %v2810 = vadd.f32 %v2723, %v2763
          %v2811 = vadd.f32 %v2724, %v2765
          %v2812 = vadd.f32 %v2725, %v2804
          %v2813 = vadd.f32 %v2726, %v2806
          %v2814 = vxor.u32 %v2810, 2147483648
          %v2815 = vmul.f32 %v2814, 1.442695
          %v2816 = vpow.pop %v2815
          %v2817 = vadd.f32 %v2816, 1.0
          %v2818 = vrcp.pop %v2817
          %v2819 = vmul.f32 1.0, %v2818
          %v2820 = vxor.u32 %v2811, 2147483648
          %v2821 = vmul.f32 %v2820, 1.442695
          %v2822 = vpow.pop %v2821
          %v2823 = vadd.f32 %v2822, 1.0
          %v2824 = vrcp.pop %v2823
          %v2825 = vmul.f32 1.0, %v2824
          %v2826 = vtanh.pop %v2812
          %v2827 = vxor.u32 %v2813, 2147483648
          %v2828 = vmul.f32 %v2827, 1.442695
          %v2829 = vpow.pop %v2828
          %v2830 = vadd.f32 %v2829, 1.0
          %v2831 = vrcp.pop %v2830
          %v2832 = vmul.f32 1.0, %v2831
          %v2833 = vmul.f32 %v2825, %v2721
          %v2834 = vmul.f32 %v2819, %v2826
          %v2835 = vadd.f32 %v2833, %v2834
          %v2836 = vtanh.pop %v2835
          %v2837 = vmul.f32 %v2832, %v2836
          %v2838 = vstv %s2722
          %vm2839 = vcmp.gt.s32.totalorder %v851, %v2838
          %v2840 = vsel %vm2839, 1, 0
          %2841 = vset.pattern.permute.xlu0 0
          %2842 = vperm.xlu0 %2841, %v2840
          %v2843 = vpop.permute.xlu0 %2842
          %vm2844 = vcmp.eq.s32.totalorder %v2843, 1
          %v2845 = vsel %vm2844, %v2837, 0.0
          %v2846 = vpack.c.bf16 %v2845, %v2845
          %2847 = vst [vmem:[%s371 + $0xc] sm:$0xf] %v2846
          %v2848 = vsel %vm2844, %v2837, %v2720
          %v2849 = vsel %vm2844, %v2835, %v2721
          %s2850 = ssub.s32 10, %s852
          %v2851 = vld [vmem:[#allocation2 + $0x40] sm:$0xff]
          %v2852 = vld [vmem:[#allocation2 + $0x48] sm:$0xff]
          %v2853 = vld [vmem:[#allocation2 + $0x50] sm:$0xff]
          %v2854 = vld [vmem:[#allocation2 + $0x58] sm:$0xff]
          %v2855 = vpack.c.bf16 %v2848, %v2848
          %2856 = vmatprep.subr.bf16.mxu0 %v2153
          %2857 = vmatpush1.bf16.msra.mxu0 %v2152
          %2858 = vmatprep.subr.bf16.mxu0 %v2157
          %2859 = vmatpush1.bf16.msra.mxu0 %v2156
          %2860 = vmatprep.subr.bf16.mxu0 %v2161
          %2861 = vmatpush1.bf16.msra.mxu0 %v2160
          %2862 = vmatprep.subr.bf16.mxu0 %v2165
          %2863 = vmatpush1.bf16.msra.mxu0 %v2164
          %2864 = vmatprep.subr.bf16.mxu0 %v2169
          %2865 = vmatpush1.bf16.msra.mxu0 %v2168
          %2866 = vmatprep.subr.bf16.mxu0 %v2173
          %2867 = vmatpush1.bf16.msra.mxu0 %v2172
          %2868 = vmatprep.subr.bf16.mxu0 %v2177
          %2869 = vmatpush1.bf16.msra.mxu0 %v2176
          %2870 = vmatprep.subr.bf16.mxu0 %v2181
          %2871 = vmatpush1.bf16.msra.mxu0 %v2180
          %2872 = vmatprep.subr.bf16.mxu0 0
          %2873 = vmatpush1.bf16.msra.mxu0 0
          %2874 = vmatprep.subr.bf16.mxu0 0
          %2875 = vmatpush1.bf16.msra.mxu0 0
          %2876 = vmatprep.subr.bf16.mxu0 0
          %2877 = vmatpush1.bf16.msra.mxu0 0
          %2878 = vmatprep.subr.bf16.mxu0 0
          %2879 = vmatpush1.bf16.msra.mxu0 0
          %2880 = vmatprep.subr.bf16.mxu0 0
          %2881 = vmatpush1.bf16.msra.mxu0 0
          %2882 = vmatprep.subr.bf16.mxu0 0
          %2883 = vmatpush1.bf16.msra.mxu0 0
          %2884 = vmatprep.subr.bf16.mxu0 0
          %2885 = vmatpush1.bf16.msra.mxu0 0
          %2886 = vmatprep.subr.bf16.mxu0 0
          %2887 = vmatpush1.bf16.msra.mxu0 0
          %2888 = vmatprep.mubr.bf16.mxu0 0
          %2889 = vmatmul.mubr.bf16.gmra.mrb[0].mxu0 %v2855
          %v2890 = vpop.f32.mrb[0].mxu0
          %v2891 = vadd.f32 0.0, %v2890
          %v2892 = vpop.f32.mrb[0].mxu0
          %v2893 = vadd.f32 0.0, %v2892
          %v2894 = vpop.f32.mrb[0].mxu0
          %v2895 = vpop.f32.mrb[0].mxu0
          %2896 = vdwg.mxu0
          %2897 = vmatprep.subr.bf16.mxu0 %v2155
          %2898 = vmatpush1.bf16.msra.mxu0 %v2154
          %2899 = vmatprep.subr.bf16.mxu0 %v2159
          %2900 = vmatpush1.bf16.msra.mxu0 %v2158
          %2901 = vmatprep.subr.bf16.mxu0 %v2163
          %2902 = vmatpush1.bf16.msra.mxu0 %v2162
          %2903 = vmatprep.subr.bf16.mxu0 %v2167
          %2904 = vmatpush1.bf16.msra.mxu0 %v2166
          %2905 = vmatprep.subr.bf16.mxu0 %v2171
          %2906 = vmatpush1.bf16.msra.mxu0 %v2170
          %2907 = vmatprep.subr.bf16.mxu0 %v2175
          %2908 = vmatpush1.bf16.msra.mxu0 %v2174
          %2909 = vmatprep.subr.bf16.mxu0 %v2179
          %2910 = vmatpush1.bf16.msra.mxu0 %v2178
          %2911 = vmatprep.subr.bf16.mxu0 %v2183
          %2912 = vmatpush1.bf16.msra.mxu0 %v2182
          %2913 = vmatprep.subr.bf16.mxu0 0
          %2914 = vmatpush1.bf16.msra.mxu0 0
          %2915 = vmatprep.subr.bf16.mxu0 0
          %2916 = vmatpush1.bf16.msra.mxu0 0
          %2917 = vmatprep.subr.bf16.mxu0 0
          %2918 = vmatpush1.bf16.msra.mxu0 0
          %2919 = vmatprep.subr.bf16.mxu0 0
          %2920 = vmatpush1.bf16.msra.mxu0 0
          %2921 = vmatprep.subr.bf16.mxu0 0
          %2922 = vmatpush1.bf16.msra.mxu0 0
          %2923 = vmatprep.subr.bf16.mxu0 0
          %2924 = vmatpush1.bf16.msra.mxu0 0
          %2925 = vmatprep.subr.bf16.mxu0 0
          %2926 = vmatpush1.bf16.msra.mxu0 0
          %2927 = vmatprep.subr.bf16.mxu0 0
          %2928 = vmatpush1.bf16.msra.mxu0 0
          %2929 = vmatprep.mubr.bf16.mxu0 0
          %2930 = vmatmul.mubr.bf16.gmra.mrb[0].mxu0 %v2855
          %v2931 = vpop.f32.mrb[0].mxu0
          %v2932 = vadd.f32 0.0, %v2931
          %v2933 = vpop.f32.mrb[0].mxu0
          %v2934 = vadd.f32 0.0, %v2933
          %v2935 = vpop.f32.mrb[0].mxu0
          %v2936 = vpop.f32.mrb[0].mxu0
          %2937 = vdwg.mxu0
          %v2938 = vadd.f32 %v2851, %v2891
          %v2939 = vadd.f32 %v2852, %v2893
          %v2940 = vadd.f32 %v2853, %v2932
          %v2941 = vadd.f32 %v2854, %v2934
          %v2942 = vxor.u32 %v2938, 2147483648
          %v2943 = vmul.f32 %v2942, 1.442695
          %v2944 = vpow.pop %v2943
          %v2945 = vadd.f32 %v2944, 1.0
          %v2946 = vrcp.pop %v2945
          %v2947 = vmul.f32 1.0, %v2946
          %v2948 = vxor.u32 %v2939, 2147483648
          %v2949 = vmul.f32 %v2948, 1.442695
          %v2950 = vpow.pop %v2949
          %v2951 = vadd.f32 %v2950, 1.0
          %v2952 = vrcp.pop %v2951
          %v2953 = vmul.f32 1.0, %v2952
          %v2954 = vtanh.pop %v2940
          %v2955 = vxor.u32 %v2941, 2147483648
          %v2956 = vmul.f32 %v2955, 1.442695
          %v2957 = vpow.pop %v2956
          %v2958 = vadd.f32 %v2957, 1.0
          %v2959 = vrcp.pop %v2958
          %v2960 = vmul.f32 1.0, %v2959
          %v2961 = vmul.f32 %v2953, %v2849
          %v2962 = vmul.f32 %v2947, %v2954
          %v2963 = vadd.f32 %v2961, %v2962
          %v2964 = vtanh.pop %v2963
          %v2965 = vmul.f32 %v2960, %v2964
          %v2966 = vstv %s2850
          %vm2967 = vcmp.gt.s32.totalorder %v851, %v2966
          %v2968 = vsel %vm2967, 1, 0
          %2969 = vset.pattern.permute.xlu0 0
          %2970 = vperm.xlu0 %2969, %v2968
          %v2971 = vpop.permute.xlu0 %2970
          %vm2972 = vcmp.eq.s32.totalorder %v2971, 1
          %v2973 = vsel %vm2972, %v2965, 0.0
          %v2974 = vpack.c.bf16 %v2973, %v2973
          %2975 = vst [vmem:[%s371 + $0x8] sm:$0xf] %v2974
          %v2976 = vsel %vm2972, %v2965, %v2848
          %v2977 = vsel %vm2972, %v2963, %v2849
          %s2978 = ssub.s32 9, %s852
          %v2979 = vld [vmem:[#allocation2 + $0x20] sm:$0xff]
          %v2980 = vld [vmem:[#allocation2 + $0x28] sm:$0xff]
          %v2981 = vld [vmem:[#allocation2 + $0x30] sm:$0xff]
          %v2982 = vld [vmem:[#allocation2 + $0x38] sm:$0xff]
          %v2983 = vpack.c.bf16 %v2976, %v2976
          %2984 = vmatprep.subr.bf16.mxu0 %v2153
          %2985 = vmatpush1.bf16.msra.mxu0 %v2152
          %2986 = vmatprep.subr.bf16.mxu0 %v2157
          %2987 = vmatpush1.bf16.msra.mxu0 %v2156
          %2988 = vmatprep.subr.bf16.mxu0 %v2161
          %2989 = vmatpush1.bf16.msra.mxu0 %v2160
          %2990 = vmatprep.subr.bf16.mxu0 %v2165
          %2991 = vmatpush1.bf16.msra.mxu0 %v2164
          %2992 = vmatprep.subr.bf16.mxu0 %v2169
          %2993 = vmatpush1.bf16.msra.mxu0 %v2168
          %2994 = vmatprep.subr.bf16.mxu0 %v2173
          %2995 = vmatpush1.bf16.msra.mxu0 %v2172
          %2996 = vmatprep.subr.bf16.mxu0 %v2177
          %2997 = vmatpush1.bf16.msra.mxu0 %v2176
          %2998 = vmatprep.subr.bf16.mxu0 %v2181
          %2999 = vmatpush1.bf16.msra.mxu0 %v2180
          %3000 = vmatprep.subr.bf16.mxu0 0
          %3001 = vmatpush1.bf16.msra.mxu0 0
          %3002 = vmatprep.subr.bf16.mxu0 0
          %3003 = vmatpush1.bf16.msra.mxu0 0
          %3004 = vmatprep.subr.bf16.mxu0 0
          %3005 = vmatpush1.bf16.msra.mxu0 0
          %3006 = vmatprep.subr.bf16.mxu0 0
          %3007 = vmatpush1.bf16.msra.mxu0 0
          %3008 = vmatprep.subr.bf16.mxu0 0
          %3009 = vmatpush1.bf16.msra.mxu0 0
          %3010 = vmatprep.subr.bf16.mxu0 0
          %3011 = vmatpush1.bf16.msra.mxu0 0
          %3012 = vmatprep.subr.bf16.mxu0 0
          %3013 = vmatpush1.bf16.msra.mxu0 0
          %3014 = vmatprep.subr.bf16.mxu0 0
          %3015 = vmatpush1.bf16.msra.mxu0 0
          %3016 = vmatprep.mubr.bf16.mxu0 0
          %3017 = vmatmul.mubr.bf16.gmra.mrb[0].mxu0 %v2983
          %v3018 = vpop.f32.mrb[0].mxu0
          %v3019 = vadd.f32 0.0, %v3018
          %v3020 = vpop.f32.mrb[0].mxu0
          %v3021 = vadd.f32 0.0, %v3020
          %v3022 = vpop.f32.mrb[0].mxu0
          %v3023 = vpop.f32.mrb[0].mxu0
          %3024 = vdwg.mxu0
          %3025 = vmatprep.subr.bf16.mxu0 %v2155
          %3026 = vmatpush1.bf16.msra.mxu0 %v2154
          %3027 = vmatprep.subr.bf16.mxu0 %v2159
          %3028 = vmatpush1.bf16.msra.mxu0 %v2158
          %3029 = vmatprep.subr.bf16.mxu0 %v2163
          %3030 = vmatpush1.bf16.msra.mxu0 %v2162
          %3031 = vmatprep.subr.bf16.mxu0 %v2167
          %3032 = vmatpush1.bf16.msra.mxu0 %v2166
          %3033 = vmatprep.subr.bf16.mxu0 %v2171
          %3034 = vmatpush1.bf16.msra.mxu0 %v2170
          %3035 = vmatprep.subr.bf16.mxu0 %v2175
          %3036 = vmatpush1.bf16.msra.mxu0 %v2174
          %3037 = vmatprep.subr.bf16.mxu0 %v2179
          %3038 = vmatpush1.bf16.msra.mxu0 %v2178
          %3039 = vmatprep.subr.bf16.mxu0 %v2183
          %3040 = vmatpush1.bf16.msra.mxu0 %v2182
          %3041 = vmatprep.subr.bf16.mxu0 0
          %3042 = vmatpush1.bf16.msra.mxu0 0
          %3043 = vmatprep.subr.bf16.mxu0 0
          %3044 = vmatpush1.bf16.msra.mxu0 0
          %3045 = vmatprep.subr.bf16.mxu0 0
          %3046 = vmatpush1.bf16.msra.mxu0 0
          %3047 = vmatprep.subr.bf16.mxu0 0
          %3048 = vmatpush1.bf16.msra.mxu0 0
          %3049 = vmatprep.subr.bf16.mxu0 0
          %3050 = vmatpush1.bf16.msra.mxu0 0
          %3051 = vmatprep.subr.bf16.mxu0 0
          %3052 = vmatpush1.bf16.msra.mxu0 0
          %3053 = vmatprep.subr.bf16.mxu0 0
          %3054 = vmatpush1.bf16.msra.mxu0 0
          %3055 = vmatprep.subr.bf16.mxu0 0
          %3056 = vmatpush1.bf16.msra.mxu0 0
          %3057 = vmatprep.mubr.bf16.mxu0 0
          %3058 = vmatmul.mubr.bf16.gmra.mrb[0].mxu0 %v2983
          %v3059 = vpop.f32.mrb[0].mxu0
          %v3060 = vadd.f32 0.0, %v3059
          %v3061 = vpop.f32.mrb[0].mxu0
          %v3062 = vadd.f32 0.0, %v3061
          %v3063 = vpop.f32.mrb[0].mxu0
          %v3064 = vpop.f32.mrb[0].mxu0
          %3065 = vdwg.mxu0
          %v3066 = vadd.f32 %v2979, %v3019
          %v3067 = vadd.f32 %v2980, %v3021
          %v3068 = vadd.f32 %v2981, %v3060
          %v3069 = vadd.f32 %v2982, %v3062
          %v3070 = vxor.u32 %v3066, 2147483648
          %v3071 = vmul.f32 %v3070, 1.442695
          %v3072 = vpow.pop %v3071
          %v3073 = vadd.f32 %v3072, 1.0
          %v3074 = vrcp.pop %v3073
          %v3075 = vmul.f32 1.0, %v3074
          %v3076 = vxor.u32 %v3067, 2147483648
          %v3077 = vmul.f32 %v3076, 1.442695
          %v3078 = vpow.pop %v3077
          %v3079 = vadd.f32 %v3078, 1.0
          %v3080 = vrcp.pop %v3079
          %v3081 = vmul.f32 1.0, %v3080
          %v3082 = vtanh.pop %v3068
          %v3083 = vxor.u32 %v3069, 2147483648
          %v3084 = vmul.f32 %v3083, 1.442695
          %v3085 = vpow.pop %v3084
          %v3086 = vadd.f32 %v3085, 1.0
          %v3087 = vrcp.pop %v3086
          %v3088 = vmul.f32 1.0, %v3087
          %v3089 = vmul.f32 %v3081, %v2977
          %v3090 = vmul.f32 %v3075, %v3082
          %v3091 = vadd.f32 %v3089, %v3090
          %v3092 = vtanh.pop %v3091
          %v3093 = vmul.f32 %v3088, %v3092
          %v3094 = vstv %s2978
          %vm3095 = vcmp.gt.s32.totalorder %v851, %v3094
          %v3096 = vsel %vm3095, 1, 0
          %3097 = vset.pattern.permute.xlu0 0
          %3098 = vperm.xlu0 %3097, %v3096
          %v3099 = vpop.permute.xlu0 %3098
          %vm3100 = vcmp.eq.s32.totalorder %v3099, 1
          %v3101 = vsel %vm3100, %v3093, 0.0
          %v3102 = vpack.c.bf16 %v3101, %v3101
          %3103 = vst [vmem:[%s371 + $0x4] sm:$0xf] %v3102
          %v3104 = vsel %vm3100, %v3093, %v2976
          %v3105 = vsel %vm3100, %v3091, %v2977
          %s3106 = ssub.s32 8, %s852
          %v3107 = vld [vmem:[#allocation2] sm:$0xff]
          %v3108 = vld [vmem:[#allocation2 + $0x8] sm:$0xff]
          %v3109 = vld [vmem:[#allocation2 + $0x10] sm:$0xff]
          %v3110 = vld [vmem:[#allocation2 + $0x18] sm:$0xff]
          %v3111 = vpack.c.bf16 %v3104, %v3104
          %3112 = vmatprep.subr.bf16.mxu0 %v2153
          %3113 = vmatpush1.bf16.msra.mxu0 %v2152
          %3114 = vmatprep.subr.bf16.mxu0 %v2157
          %3115 = vmatpush1.bf16.msra.mxu0 %v2156
          %3116 = vmatprep.subr.bf16.mxu0 %v2161
          %3117 = vmatpush1.bf16.msra.mxu0 %v2160
          %3118 = vmatprep.subr.bf16.mxu0 %v2165
          %3119 = vmatpush1.bf16.msra.mxu0 %v2164
          %3120 = vmatprep.subr.bf16.mxu0 %v2169
          %3121 = vmatpush1.bf16.msra.mxu0 %v2168
          %3122 = vmatprep.subr.bf16.mxu0 %v2173
          %3123 = vmatpush1.bf16.msra.mxu0 %v2172
          %3124 = vmatprep.subr.bf16.mxu0 %v2177
          %3125 = vmatpush1.bf16.msra.mxu0 %v2176
          %3126 = vmatprep.subr.bf16.mxu0 %v2181
          %3127 = vmatpush1.bf16.msra.mxu0 %v2180
          %3128 = vmatprep.subr.bf16.mxu0 0
          %3129 = vmatpush1.bf16.msra.mxu0 0
          %3130 = vmatprep.subr.bf16.mxu0 0
          %3131 = vmatpush1.bf16.msra.mxu0 0
          %3132 = vmatprep.subr.bf16.mxu0 0
          %3133 = vmatpush1.bf16.msra.mxu0 0
          %3134 = vmatprep.subr.bf16.mxu0 0
          %3135 = vmatpush1.bf16.msra.mxu0 0
          %3136 = vmatprep.subr.bf16.mxu0 0
          %3137 = vmatpush1.bf16.msra.mxu0 0
          %3138 = vmatprep.subr.bf16.mxu0 0
          %3139 = vmatpush1.bf16.msra.mxu0 0
          %3140 = vmatprep.subr.bf16.mxu0 0
          %3141 = vmatpush1.bf16.msra.mxu0 0
          %3142 = vmatprep.subr.bf16.mxu0 0
          %3143 = vmatpush1.bf16.msra.mxu0 0
          %3144 = vmatprep.mubr.bf16.mxu0 0
          %3145 = vmatmul.mubr.bf16.gmra.mrb[0].mxu0 %v3111
          %v3146 = vpop.f32.mrb[0].mxu0
          %v3147 = vadd.f32 0.0, %v3146
          %v3148 = vpop.f32.mrb[0].mxu0
          %v3149 = vadd.f32 0.0, %v3148
          %v3150 = vpop.f32.mrb[0].mxu0
          %v3151 = vpop.f32.mrb[0].mxu0
          %3152 = vdwg.mxu0
          %3153 = vmatprep.subr.bf16.mxu0 %v2155
          %3154 = vmatpush1.bf16.msra.mxu0 %v2154
          %3155 = vmatprep.subr.bf16.mxu0 %v2159
          %3156 = vmatpush1.bf16.msra.mxu0 %v2158
          %3157 = vmatprep.subr.bf16.mxu0 %v2163
          %3158 = vmatpush1.bf16.msra.mxu0 %v2162
          %3159 = vmatprep.subr.bf16.mxu0 %v2167
          %3160 = vmatpush1.bf16.msra.mxu0 %v2166
          %3161 = vmatprep.subr.bf16.mxu0 %v2171
          %3162 = vmatpush1.bf16.msra.mxu0 %v2170
          %3163 = vmatprep.subr.bf16.mxu0 %v2175
          %3164 = vmatpush1.bf16.msra.mxu0 %v2174
          %3165 = vmatprep.subr.bf16.mxu0 %v2179
          %3166 = vmatpush1.bf16.msra.mxu0 %v2178
          %3167 = vmatprep.subr.bf16.mxu0 %v2183
          %3168 = vmatpush1.bf16.msra.mxu0 %v2182
          %3169 = vmatprep.subr.bf16.mxu0 0
          %3170 = vmatpush1.bf16.msra.mxu0 0
          %3171 = vmatprep.subr.bf16.mxu0 0
          %3172 = vmatpush1.bf16.msra.mxu0 0
          %3173 = vmatprep.subr.bf16.mxu0 0
          %3174 = vmatpush1.bf16.msra.mxu0 0
          %3175 = vmatprep.subr.bf16.mxu0 0
          %3176 = vmatpush1.bf16.msra.mxu0 0
          %3177 = vmatprep.subr.bf16.mxu0 0
          %3178 = vmatpush1.bf16.msra.mxu0 0
          %3179 = vmatprep.subr.bf16.mxu0 0
          %3180 = vmatpush1.bf16.msra.mxu0 0
          %3181 = vmatprep.subr.bf16.mxu0 0
          %3182 = vmatpush1.bf16.msra.mxu0 0
          %3183 = vmatprep.subr.bf16.mxu0 0
          %3184 = vmatpush1.bf16.msra.mxu0 0
          %3185 = vmatprep.mubr.bf16.mxu0 0
          %3186 = vmatmul.mubr.bf16.gmra.mrb[0].mxu0 %v3111
          %v3187 = vpop.f32.mrb[0].mxu0
          %v3188 = vadd.f32 0.0, %v3187
          %v3189 = vpop.f32.mrb[0].mxu0
          %v3190 = vadd.f32 0.0, %v3189
          %v3191 = vpop.f32.mrb[0].mxu0
          %v3192 = vpop.f32.mrb[0].mxu0
          %3193 = vdwg.mxu0
          %v3194 = vadd.f32 %v3107, %v3147
          %v3195 = vadd.f32 %v3108, %v3149
          %v3196 = vadd.f32 %v3109, %v3188
          %v3197 = vadd.f32 %v3110, %v3190
          %v3198 = vxor.u32 %v3194, 2147483648
          %v3199 = vmul.f32 %v3198, 1.442695
          %v3200 = vpow.pop %v3199
          %v3201 = vadd.f32 %v3200, 1.0
          %v3202 = vrcp.pop %v3201
          %v3203 = vmul.f32 1.0, %v3202
          %v3204 = vxor.u32 %v3195, 2147483648
          %v3205 = vmul.f32 %v3204, 1.442695
          %v3206 = vpow.pop %v3205
          %v3207 = vadd.f32 %v3206, 1.0
          %v3208 = vrcp.pop %v3207
          %v3209 = vmul.f32 1.0, %v3208
          %v3210 = vtanh.pop %v3196
          %v3211 = vxor.u32 %v3197, 2147483648
          %v3212 = vmul.f32 %v3211, 1.442695
          %v3213 = vpow.pop %v3212
          %v3214 = vadd.f32 %v3213, 1.0
          %v3215 = vrcp.pop %v3214
          %v3216 = vmul.f32 1.0, %v3215
          %v3217 = vmul.f32 %v3209, %v3105
          %v3218 = vmul.f32 %v3203, %v3210
          %v3219 = vadd.f32 %v3217, %v3218
          %v3220 = vtanh.pop %v3219
          %v3221 = vmul.f32 %v3216, %v3220
          %v3222 = vstv %s3106
          %vm3223 = vcmp.gt.s32.totalorder %v851, %v3222
          %v3224 = vsel %vm3223, 1, 0
          %3225 = vset.pattern.permute.xlu0 0
          %3226 = vperm.xlu0 %3225, %v3224
          %v3227 = vpop.permute.xlu0 %3226
          %vm3228 = vcmp.eq.s32.totalorder %v3227, 1
          %v3229 = vsel %vm3228, %v3221, 0.0
          %v3230 = vpack.c.bf16 %v3229, %v3229
          %3231 = vst [vmem:[%s371] sm:$0xf] %v3230
          %v3232 = vsel %vm3228, %v3221, %v3104
          %v3233 = vsel %vm3228, %v3219, %v3105
          %3234 = vst [vmem:[#allocation3] sm:$0xff] %v3232
          %3235 = vst [vmem:[#allocation4] sm:$0xff] %v3233
        $region64: #{tpu_custom_call.1} parent=39 // pred_fallthru
          _
        %s3236 = sand.u32 %s192, 1
        %s3237 = scalar_lea.sflag [#allocation7], %s3236
        %s3238 = sand.u32 %s192, 1
        %s3239 = smul.addr %s3238, 32
        %s3240 = scalar_lea.vmem [#allocation11], %s3239
        // Predicated region
        $region65: #{tpu_custom_call.1} parent=39 // pred_check
          %p3241 = pneg %p202
        $region66: #{tpu_custom_call.1} parent=39 // pred_check_branch
          %3243 = sbr.rel (%p3241) target = $region68
        $region67: #{tpu_custom_call.1} parent=39 // pred_region
          %s3244 = ssub.s32 1, %s29
          %s3245 = smul.u32 %s3244, %s30
          %s3246 = ssub.s32 1, %s30
          %s3247 = smul.u32 %s29, %s3246
          %s3248 = sadd.s32 %s3245, %s3247
          %s3249 = smul.u32 8, %s3248
          %s3251 = ssub.s32 512, 512
          %3252 = vsyncadd %s3237, %s3251
          %s3253 = smul.addr %s29, 16
          %s3254 = sadd.s32 %s3249, %s3253
          %s3255 = smul.addr %s3254, 64
          %s3256 = scalar_lea.hbm %s5, %s3255
          %s3257 = sshll.u32 %s3240, 4
          %s3258 = int_to_ptr.vmem [resolvable:$true] %s3257
          %3263 = dma.vmem_to_hbm [thread:$0]  %s3258, 512, %s3256, %s3237, 64, 64, 4
        $region68: #{tpu_custom_call.1} parent=39 // pred_fallthru
          _
      $region40: #{tpu_custom_call.1} parent=5 // pred_fallthru
        _
      %p3264 = scmp.le.s32.totalorder 2, %s20
      // Predicated region
      $region69: #{tpu_custom_call.1} parent=5 // pred_check
        %p3265 = pneg %p3264
      $region70: #{tpu_custom_call.1} parent=5 // pred_check_branch
        %3267 = sbr.rel (%p3265) target = $region72
      $region71: #{tpu_custom_call.1} parent=5 // pred_region
        %s3268 = ssub.s32 %s20, 2
        // Predicated region
        $region73: #{tpu_custom_call.1} parent=71 // pred_check
          %p3269 = pneg %p208
        $region74: #{tpu_custom_call.1} parent=71 // pred_check_branch
          %3271 = sbr.rel (%p3269) target = $region76
        $region75: #{tpu_custom_call.1} parent=71 // pred_region
          %s3272 = sand.u32 %s193, 1
          %s3273 = scalar_lea.sflag [#allocation7], %s3272
          %s3274 = sand.u32 %s193, 1
          %s3275 = smul.addr %s3274, 32
          %s3276 = scalar_lea.vmem [#allocation11], %s3275
          %3277 = dma.done %s3273, 512
        $region76: #{tpu_custom_call.1} parent=71 // pred_fallthru
          _
      $region72: #{tpu_custom_call.1} parent=5 // pred_fallthru
        _
    $region6: #{tpu_custom_call.1} parent=1 // loop_footer
      %s24 = sadd.s32 1, %s20
    $region7: #{tpu_custom_call.1} parent=1 // loop_footer_branch
      %19 = sbr.rel target = $region3
    $region8: #{tpu_custom_call.1} parent=1 // loop_exit
      _
    %3278 = vsyncpa [#allocation6], 1
    %s3279 = scalar_lea.sflag [#allocation6], 1
    %3280 = vsyncpa %s3279, 1
    %3281 = vsyncpa [#allocation9], 1
    %s3282 = scalar_lea.sflag [#allocation9], 1
    %3283 = vsyncpa %s3282, 1
    %3284 = vsyncpa [#allocation7], 1
    %s3285 = scalar_lea.sflag [#allocation7], 1
    %3286 = vsyncpa %s3285, 1

</llo_original>
